<compile_context>
chip_gen: v7x
topology: tpu7x:2x2x1
jax: 0.10.0
libtpu: 0.0.40
codegen_flags: <defaults>
</compile_context>

<pallas_src>
import jax
import jax.numpy as jnp
from jax.experimental import pallas as pl
from jax.experimental.pallas import tpu as pltpu

# ---------------- config (mirrors model_cfg handled in __init__) ----------------
VOXEL_SIZE = 0.4                                   # scalar -> voxel_size = [1, .4, .4, .4]
STRIDE = (2, 2, 2)                                 # STRIDE
Z_PADDING = 1                                      # Z_PADDING
DOWNSAMPLE_TIMES = (2, 2, 2)                       # DOWNSAMPLE_TIMES
VS = (VOXEL_SIZE, VOXEL_SIZE, VOXEL_SIZE)          # voxel_size[1:4]
VSD = tuple(VS[i] / DOWNSAMPLE_TIMES[i] for i in range(3))   # aggregation voxel size
RMIN = (0.0, 0.0, 0.0)                             # assumed point-cloud-range min

LANE_TILE = 4096   # preferred lane tile (big multiple of 128; fits VMEM on v5e/v6e/v7x)


def _build_shifts():
    s0, s1, s2 = STRIDE
    shifts = []
    # PyTorch loop order: dx outer, dy middle, dz inner; all ranges use stride[2].
    for dx in range(-s2 + 1, s2):
        for dy in range(-s2 + 1, s2):
            for dz in range(-s2 + 1, s2):
                shifts.append((dx / s0 * VS[0], dy / s1 * VS[1], dz / s2 * VS[2]))
    return tuple(shifts)


SHIFTS = _build_shifts()
K_OFF = len(SHIFTS)                                # 27 for stride (2,2,2)


def _round_up(x, m):
    return (x + m - 1) // m * m


def _pick_tile(n):
    """Largest lane tile <= LANE_TILE that is a multiple of 128 and covers n cheaply."""
    return min(LANE_TILE, _round_up(max(n, 1), 128))


# ------------------------- Pallas kernel 1 -------------------------
def _expand_voxelize_kernel(params_ref, pts_ref, shifted_ref, key_ref):
    """For one lane tile of points: emit all K shifted copies and packed voxel keys.

    params (SMEM int32, scalar-prefetched): [ox, oy, oz, mx, my, mb, 0, 0]
      key = b*mb + (cx-ox)*mx + (cy-oy)*my + (cz-oz)   (always >= 0 for real points)

    Outputs (per tile): shifted_ref [K*4, TN] f32 (rows k*4 .. k*4+3 = b,x,y,z of
    offset k), key_ref [K, TN] i32.
    """
    ox = params_ref[0]
    oy = params_ref[1]
    oz = params_ref[2]
    mx = params_ref[3]
    my = params_ref[4]
    mb = params_ref[5]

    pts = pts_ref[...]                                     # [4, TN] f32, read once
    b_row = pts[0:1, :]
    x_row = pts[1:2, :]
    y_row = pts[2:3, :]
    z_row = pts[3:4, :]
    base = b_row.astype(jnp.int32) * mb                    # b * mb, hoisted out of loop

    inv0, inv1, inv2 = 1.0 / VSD[0], 1.0 / VSD[1], 1.0 / VSD[2]
    r0, r1, r2 = RMIN

    # Offset axis folded into the kernel body (statically unrolled): 27x compute
    # reuse per input fetch, offsets are compile-time SCALAR constants (no array
    # constants captured by the kernel body).
    for k, (sx, sy, sz) in enumerate(SHIFTS):
        xs = x_row + sx                                    # [1, TN]
        ys = y_row + sy
        zs = z_row + sz
        shifted_ref[k * 4:(k + 1) * 4, :] = jnp.concatenate(
            [b_row, xs, ys, zs], axis=0)                   # single 4-row store
        cx = jnp.floor((xs - r0) * inv0).astype(jnp.int32)
        cy = jnp.floor((ys - r1) * inv1).astype(jnp.int32)
        cz = jnp.floor((zs - r2) * inv2).astype(jnp.int32)
        key_ref[k:k + 1, :] = base + (cx - ox) * mx + (cy - oy) * my + (cz - oz)


def expand_and_voxelize(params, pts_cf, tn):
    """params [8] i32, pts_cf [4, N_pad] f32 -> ([K*4, N_pad] f32, [K, N_pad] i32)."""
    _, n_pad = pts_cf.shape
    grid = (n_pad // tn,)
    return pl.pallas_call(
        _expand_voxelize_kernel,
        out_shape=(jax.ShapeDtypeStruct((K_OFF * 4, n_pad), jnp.float32),
                   jax.ShapeDtypeStruct((K_OFF, n_pad), jnp.int32)),
        grid_spec=pltpu.PrefetchScalarGridSpec(
            num_scalar_prefetch=1,
            grid=grid,
            in_specs=[pl.BlockSpec((4, tn), lambda nt, params: (0, nt))],
            out_specs=[pl.BlockSpec((K_OFF * 4, tn), lambda nt, params: (0, nt)),
                       pl.BlockSpec((K_OFF, tn), lambda nt, params: (0, nt))],
        ),
        compiler_params=pltpu.CompilerParams(
            dimension_semantics=("parallel",)),
    )(params, pts_cf)


# ------------------------- Pallas kernel 2 -------------------------
def _voxel_center_mask_kernel(coords_ref, out_ref):
    """Per-voxel geometric center (rows 0..3) + downsample-modulo mask (row 4)."""
    c = coords_ref[...].astype(jnp.float32)                # [4, TV]
    b_row = c[0:1, :]
    cx = c[1:2, :]
    cy = c[2:3, :]
    cz = c[3:4, :]

    # Geometric center (scalar constants only; row 0 stays the batch index).
    ctr_x = (cx + 0.5) * VSD[0] + RMIN[0]
    ctr_y = (cy + 0.5) * VSD[1] + RMIN[1]
    ctr_z = (cz + 0.5) * VSD[2] + RMIN[2]

    d0, d1, d2 = (float(d) for d in DOWNSAMPLE_TIMES)

    def fmod(v, d):    # floor-mod, exact for small integer-valued floats
        return v - jnp.floor(v * (1.0 / d)) * d

    z_target = 0.0 if Z_PADDING == -1 else float(Z_PADDING)
    m = (fmod(cz, d2) == z_target) & (fmod(cx, d0) == 0.0) & (fmod(cy, d1) == 0.0)

    out_ref[...] = jnp.concatenate(
        [b_row, ctr_x, ctr_y, ctr_z, m.astype(jnp.float32)], axis=0)   # [5, TV]


def voxel_center_and_mask(coords_cf, tv):
    """coords_cf [4, V_pad] i32 -> [5, V_pad] f32 (rows 0..3 bcenter, row 4 mask)."""
    _, v_pad = coords_cf.shape
    grid = (v_pad // tv,)
    return pl.pallas_call(
        _voxel_center_mask_kernel,
        out_shape=jax.ShapeDtypeStruct((5, v_pad), jnp.float32),
        grid=grid,
        in_specs=[pl.BlockSpec((4, tv), lambda v: (0, v))],
        out_specs=pl.BlockSpec((5, tv), lambda v: (0, v)),
        compiler_params=pltpu.CompilerParams(dimension_semantics=("parallel",)),
    )(coords_cf)


# ------------------------- wrapper (glue) -------------------------
def voxel_center_sampler(point_bxyz):
    """point_bxyz: [N, 4] float32 rows (b, x, y, z)."""
    n = point_bxyz.shape[0]
    tn = _pick_tile(n)
    n_pad = _round_up(n, tn)

    point_bxyz = point_bxyz.astype(jnp.float32)
    pts_cf = jnp.transpose(point_bxyz)                      # [4, N] channel-first
    pts_cf = jnp.pad(pts_cf, ((0, 0), (0, n_pad - n)))      # [4, n_pad]

    # Data-dependent key-packing parameters: per-axis coordinate offset/extent
    # derived from the actual point range (+1 cell margin each side), so the
    # int32 key never aliases for negative or large voxel coordinates.
    s0, s1, s2 = STRIDE
    max_shift = jnp.array([(s2 - 1) / s0 * VS[0],
                           (s2 - 1) / s1 * VS[1],
                           (s2 - 1) / s2 * VS[2]], jnp.float32)
    rmin = jnp.array(RMIN, jnp.float32)
    inv_vsd = jnp.array([1.0 / VSD[0], 1.0 / VSD[1], 1.0 / VSD[2]], jnp.float32)
    xyz = point_bxyz[:, 1:4]
    cmin = jnp.floor((jnp.min(xyz, axis=0) - max_shift - rmin) * inv_vsd).astype(jnp.int32) - 1
    cmax = jnp.floor((jnp.max(xyz, axis=0) + max_shift - rmin) * inv_vsd).astype(jnp.int32) + 1
    ext = cmax - cmin + 1                                   # cells per axis
    my = ext[2]
    mx = ext[1] * ext[2]
    mb = ext[0] * mx
    # TODO(synk): num_batches * mb must stay < 2**31; huge scenes need a two-word key.
    zero = jnp.zeros((), jnp.int32)
    params = jnp.stack([cmin[0], cmin[1], cmin[2], mx, my, mb, zero, zero]).astype(jnp.int32)

    shifted2d, keys2d = expand_and_voxelize(params, pts_cf, tn)  # [K*4,n_pad], [K,n_pad]

    shifted_flat = jnp.transpose(
        shifted2d.reshape(K_OFF, 4, n_pad), (0, 2, 1)).reshape(-1, 4)   # [K*n_pad, 4]
    key_flat = keys2d.reshape(-1)                                       # [K*n_pad]
    valid = jnp.broadcast_to(jnp.arange(n_pad) < n, (K_OFF, n_pad)).reshape(-1)
    key_flat = jnp.where(valid, key_flat, -1)   # pad points -> sentinel (real keys >= 0)

    # ---- dedup + per-voxel mean of shifted point bxyz (VoxelAggregation) ----
    tv = _pick_tile(K_OFF * n + 1)
    v_cap = _round_up(K_OFF * n + 1, tv)        # uniques <= K*n + 1 (the -1 bucket)
    ukeys, vox_index = jnp.unique(key_flat, size=v_cap, fill_value=-1,
                                  return_inverse=True)
    vox_index = vox_index.reshape(-1)

    ones = jnp.ones((shifted_flat.shape[0], 1), jnp.float32)
    sums = jax.ops.segment_sum(jnp.concatenate([shifted_flat, ones], axis=1),
                               vox_index, num_segments=v_cap)      # one fused scatter
    voxel_bxyz = sums[:, :4] / jnp.maximum(sums[:, 4:5], 1.0)

    # decode packed keys back into integer voxel bcoords (b, cx, cy, cz)
    b = ukeys // mb
    r = ukeys - b * mb
    cx = r // mx
    r = r - cx * mx
    cy = r // my
    cz = r - cy * my
    voxel_bcoords = jnp.stack([b, cx + cmin[0], cy + cmin[1], cz + cmin[2]],
                              axis=1).astype(jnp.int32)             # [v_cap, 4]

    centmask = voxel_center_and_mask(jnp.transpose(voxel_bcoords), tv)  # [5, v_cap]
    voxel_bcenter = jnp.transpose(centmask[0:4])                        # [v_cap, 4]
    mod_mask = centmask[4] > 0.5

    final_mask = mod_mask & (ukeys >= 0)
    order = jnp.argsort(jnp.logical_not(final_mask), stable=True)       # valid voxels first
    num_voxels = jnp.sum(final_mask.astype(jnp.int32))

    return dict(
        bcenter=voxel_bcenter[order],
        bcoords=voxel_bcoords[order],
        bxyz=voxel_bxyz[order],
        num_voxels=num_voxels,
    )


if __name__ == "__main__":
    key = jax.random.PRNGKey(0)
    kb, kx = jax.random.split(key)
    N, B = 200, 2
    batch_idx = jax.random.randint(kb, (N, 1), 0, B).astype(jnp.float32)
    xyz = jax.random.uniform(kx, (N, 3), minval=1.0, maxval=9.0, dtype=jnp.float32)
    point_bxyz = jnp.concatenate([batch_idx, xyz], axis=1)              # [N, 4] (b,x,y,z)

    out = jax.jit(voxel_center_sampler)(point_bxyz)
    jax.block_until_ready(out)
    assert out["bcenter"].shape[1] == 4 and out["bcoords"].shape[1] == 4
    print("KERNEL_OK")
</pallas_src>

<mosaic_0001>
module attributes {stable_mosaic.version = 11 : i64} {
  func.func private @main(%arg0: i32) attributes {dimension_semantics = [#tpu.dimension_semantics<core_parallel>], iteration_bounds = array<i64: 2>, tpu.core_type = #tpu.core_type<sc_scalar_subcore>, window_params = []} {
    return
  }
}

module attributes {stable_mosaic.version = 11 : i64} {
  func.func private @main(%arg0: i32) attributes {dimension_semantics = [#tpu.dimension_semantics<core_parallel>], iteration_bounds = array<i64: 2>, tpu.core_type = #tpu.core_type<sc_scalar_subcore>, window_params = []} {
    return
  }
}

module attributes {stable_mosaic.version = 11 : i64} {
  func.func @_expand_voxelize_kernel(%arg0: i32, %arg1: memref<8xi32, #tpu.memory_space<smem>>, %arg2: memref<4x256xf32, #tpu.memory_space<vmem>>, %arg3: memref<108x256xf32, #tpu.memory_space<vmem>>, %arg4: memref<27x256xi32, #tpu.memory_space<vmem>>) attributes {dimension_semantics = [#tpu.dimension_semantics<parallel>], iteration_bounds = array<i64: 1>, scalar_prefetch = 1 : i64, scratch_operands = 0 : i64, tpu.core_type = #tpu.core_type<tc>, window_params = [{transform_indices = @transform_0, window_bounds = array<i64: 4, 256>}, {transform_indices = @transform_1, window_bounds = array<i64: 108, 256>}, {transform_indices = @transform_2, window_bounds = array<i64: 27, 256>}]} {
    %c0 = arith.constant 0 : index
    %0 = memref.load %arg1[%c0] : memref<8xi32, #tpu.memory_space<smem>>
    %c1 = arith.constant 1 : index
    %1 = memref.load %arg1[%c1] : memref<8xi32, #tpu.memory_space<smem>>
    %c2 = arith.constant 2 : index
    %2 = memref.load %arg1[%c2] : memref<8xi32, #tpu.memory_space<smem>>
    %c3 = arith.constant 3 : index
    %3 = memref.load %arg1[%c3] : memref<8xi32, #tpu.memory_space<smem>>
    %c4 = arith.constant 4 : index
    %4 = memref.load %arg1[%c4] : memref<8xi32, #tpu.memory_space<smem>>
    %c5 = arith.constant 5 : index
    %5 = memref.load %arg1[%c5] : memref<8xi32, #tpu.memory_space<smem>>
    %c0_0 = arith.constant 0 : index
    %c0_1 = arith.constant 0 : index
    %6 = vector.load %arg2[%c0_0, %c0_1] : memref<4x256xf32, #tpu.memory_space<vmem>>, vector<4x256xf32>
    %7 = vector.extract_strided_slice %6 {offsets = [0, 0], sizes = [1, 256], strides = [1, 1]} : vector<4x256xf32> to vector<1x256xf32>
    %8 = vector.extract_strided_slice %6 {offsets = [1, 0], sizes = [1, 256], strides = [1, 1]} : vector<4x256xf32> to vector<1x256xf32>
    %9 = vector.extract_strided_slice %6 {offsets = [2, 0], sizes = [1, 256], strides = [1, 1]} : vector<4x256xf32> to vector<1x256xf32>
    %10 = vector.extract_strided_slice %6 {offsets = [3, 0], sizes = [1, 256], strides = [1, 1]} : vector<4x256xf32> to vector<1x256xf32>
    %11 = arith.fptosi %7 : vector<1x256xf32> to vector<1x256xi32>
    %12 = vector.broadcast %5 : i32 to vector<1x256xi32>
    %13 = arith.muli %11, %12 : vector<1x256xi32>
    %cst = arith.constant -2.000000e-01 : f32
    %14 = vector.broadcast %cst : f32 to vector<1x256xf32>
    %15 = arith.addf %8, %14 : vector<1x256xf32>
    %cst_2 = arith.constant -2.000000e-01 : f32
    %16 = vector.broadcast %cst_2 : f32 to vector<1x256xf32>
    %17 = arith.addf %9, %16 : vector<1x256xf32>
    %cst_3 = arith.constant -2.000000e-01 : f32
    %18 = vector.broadcast %cst_3 : f32 to vector<1x256xf32>
    %19 = arith.addf %10, %18 : vector<1x256xf32>
    %20 = tpu.concatenate %7, %15, %17, %19 in 0 : vector<1x256xf32>, vector<1x256xf32>, vector<1x256xf32>, vector<1x256xf32> -> vector<4x256xf32>
    %c0_4 = arith.constant 0 : index
    %c0_5 = arith.constant 0 : index
    %21 = vector.load %arg3[%c0_4, %c0_5] : memref<108x256xf32, #tpu.memory_space<vmem>>, vector<4x256xf32>
    tpu.vector_store %arg3[%c0_4, %c0_5], %20 {strides = array<i32>} : memref<108x256xf32, #tpu.memory_space<vmem>>, vector<4x256xf32>,
    %cst_6 = arith.constant 0.000000e+00 : f32
    %22 = vector.broadcast %cst_6 : f32 to vector<1x256xf32>
    %23 = arith.subf %15, %22 : vector<1x256xf32>
    %cst_7 = arith.constant 5.000000e+00 : f32
    %24 = vector.broadcast %cst_7 : f32 to vector<1x256xf32>
    %25 = arith.mulf %23, %24 : vector<1x256xf32>
    %26 = math.floor %25 : vector<1x256xf32>
    %27 = arith.fptosi %26 : vector<1x256xf32> to vector<1x256xi32>
    %cst_8 = arith.constant 0.000000e+00 : f32
    %28 = vector.broadcast %cst_8 : f32 to vector<1x256xf32>
    %29 = arith.subf %17, %28 : vector<1x256xf32>
    %cst_9 = arith.constant 5.000000e+00 : f32
    %30 = vector.broadcast %cst_9 : f32 to vector<1x256xf32>
    %31 = arith.mulf %29, %30 : vector<1x256xf32>
    %32 = math.floor %31 : vector<1x256xf32>
    %33 = arith.fptosi %32 : vector<1x256xf32> to vector<1x256xi32>
    %cst_10 = arith.constant 0.000000e+00 : f32
    %34 = vector.broadcast %cst_10 : f32 to vector<1x256xf32>
    %35 = arith.subf %19, %34 : vector<1x256xf32>
    %cst_11 = arith.constant 5.000000e+00 : f32
    %36 = vector.broadcast %cst_11 : f32 to vector<1x256xf32>
    %37 = arith.mulf %35, %36 : vector<1x256xf32>
    %38 = math.floor %37 : vector<1x256xf32>
    %39 = arith.fptosi %38 : vector<1x256xf32> to vector<1x256xi32>
    %40 = vector.broadcast %0 : i32 to vector<1x256xi32>
    %41 = arith.subi %27, %40 : vector<1x256xi32>
    %42 = vector.broadcast %3 : i32 to vector<1x256xi32>
    %43 = arith.muli %41, %42 : vector<1x256xi32>
    %44 = arith.addi %13, %43 : vector<1x256xi32>
    %45 = vector.broadcast %1 : i32 to vector<1x256xi32>
    %46 = arith.subi %33, %45 : vector<1x256xi32>
    %47 = vector.broadcast %4 : i32 to vector<1x256xi32>
    %48 = arith.muli %46, %47 : vector<1x256xi32>
    %49 = arith.addi %44, %48 : vector<1x256xi32>
    %50 = vector.broadcast %2 : i32 to vector<1x256xi32>
    %51 = arith.subi %39, %50 : vector<1x256xi32>
    %52 = arith.addi %49, %51 : vector<1x256xi32>
    %c0_12 = arith.constant 0 : index
    %c0_13 = arith.constant 0 : index
    %53 = vector.load %arg4[%c0_12, %c0_13] : memref<27x256xi32, #tpu.memory_space<vmem>>, vector<1x256xi32>
    tpu.vector_store %arg4[%c0_12, %c0_13], %52 {strides = array<i32>} : memref<27x256xi32, #tpu.memory_space<vmem>>, vector<1x256xi32>,
    %cst_14 = arith.constant -2.000000e-01 : f32
    %54 = vector.broadcast %cst_14 : f32 to vector<1x256xf32>
    %55 = arith.addf %8, %54 : vector<1x256xf32>
    %cst_15 = arith.constant -2.000000e-01 : f32
    %56 = vector.broadcast %cst_15 : f32 to vector<1x256xf32>
    %57 = arith.addf %9, %56 : vector<1x256xf32>
    %cst_16 = arith.constant 0.000000e+00 : f32
    %58 = vector.broadcast %cst_16 : f32 to vector<1x256xf32>
    %59 = arith.addf %10, %58 : vector<1x256xf32>
    %60 = tpu.concatenate %7, %55, %57, %59 in 0 : vector<1x256xf32>, vector<1x256xf32>, vector<1x256xf32>, vector<1x256xf32> -> vector<4x256xf32>
    %c4_17 = arith.constant 4 : index
    %c0_18 = arith.constant 0 : index
    %61 = vector.load %arg3[%c4_17, %c0_18] : memref<108x256xf32, #tpu.memory_space<vmem>>, vector<4x256xf32>
    tpu.vector_store %arg3[%c4_17, %c0_18], %60 {strides = array<i32>} : memref<108x256xf32, #tpu.memory_space<vmem>>, vector<4x256xf32>,
    %cst_19 = arith.constant 0.000000e+00 : f32
    %62 = vector.broadcast %cst_19 : f32 to vector<1x256xf32>
    %63 = arith.subf %55, %62 : vector<1x256xf32>
    %cst_20 = arith.constant 5.000000e+00 : f32
    %64 = vector.broadcast %cst_20 : f32 to vector<1x256xf32>
    %65 = arith.mulf %63, %64 : vector<1x256xf32>
    %66 = math.floor %65 : vector<1x256xf32>
    %67 = arith.fptosi %66 : vector<1x256xf32> to vector<1x256xi32>
    %cst_21 = arith.constant 0.000000e+00 : f32
    %68 = vector.broadcast %cst_21 : f32 to vector<1x256xf32>
    %69 = arith.subf %57, %68 : vector<1x256xf32>
    %cst_22 = arith.constant 5.000000e+00 : f32
    %70 = vector.broadcast %cst_22 : f32 to vector<1x256xf32>
    %71 = arith.mulf %69, %70 : vector<1x256xf32>
    %72 = math.floor %71 : vector<1x256xf32>
    %73 = arith.fptosi %72 : vector<1x256xf32> to vector<1x256xi32>
    %cst_23 = arith.constant 0.000000e+00 : f32
    %74 = vector.broadcast %cst_23 : f32 to vector<1x256xf32>
    %75 = arith.subf %59, %74 : vector<1x256xf32>
    %cst_24 = arith.constant 5.000000e+00 : f32
    %76 = vector.broadcast %cst_24 : f32 to vector<1x256xf32>
    %77 = arith.mulf %75, %76 : vector<1x256xf32>
    %78 = math.floor %77 : vector<1x256xf32>
    %79 = arith.fptosi %78 : vector<1x256xf32> to vector<1x256xi32>
    %80 = vector.broadcast %0 : i32 to vector<1x256xi32>
    %81 = arith.subi %67, %80 : vector<1x256xi32>
    %82 = vector.broadcast %3 : i32 to vector<1x256xi32>
    %83 = arith.muli %81, %82 : vector<1x256xi32>
    %84 = arith.addi %13, %83 : vector<1x256xi32>
    %85 = vector.broadcast %1 : i32 to vector<1x256xi32>
    %86 = arith.subi %73, %85 : vector<1x256xi32>
    %87 = vector.broadcast %4 : i32 to vector<1x256xi32>
    %88 = arith.muli %86, %87 : vector<1x256xi32>
    %89 = arith.addi %84, %88 : vector<1x256xi32>
    %90 = vector.broadcast %2 : i32 to vector<1x256xi32>
    %91 = arith.subi %79, %90 : vector<1x256xi32>
    %92 = arith.addi %89, %91 : vector<1x256xi32>
    %c1_25 = arith.constant 1 : index
    %c0_26 = arith.constant 0 : index
    %93 = vector.load %arg4[%c1_25, %c0_26] : memref<27x256xi32, #tpu.memory_space<vmem>>, vector<1x256xi32>
    tpu.vector_store %arg4[%c1_25, %c0_26], %92 {strides = array<i32>} : memref<27x256xi32, #tpu.memory_space<vmem>>, vector<1x256xi32>,
    %cst_27 = arith.constant -2.000000e-01 : f32
    %94 = vector.broadcast %cst_27 : f32 to vector<1x256xf32>
    %95 = arith.addf %8, %94 : vector<1x256xf32>
    %cst_28 = arith.constant -2.000000e-01 : f32
    %96 = vector.broadcast %cst_28 : f32 to vector<1x256xf32>
    %97 = arith.addf %9, %96 : vector<1x256xf32>
    %cst_29 = arith.constant 2.000000e-01 : f32
    %98 = vector.broadcast %cst_29 : f32 to vector<1x256xf32>
    %99 = arith.addf %10, %98 : vector<1x256xf32>
    %100 = tpu.concatenate %7, %95, %97, %99 in 0 : vector<1x256xf32>, vector<1x256xf32>, vector<1x256xf32>, vector<1x256xf32> -> vector<4x256xf32>
    %c8 = arith.constant 8 : index
    %c0_30 = arith.constant 0 : index
    %101 = vector.load %arg3[%c8, %c0_30] : memref<108x256xf32, #tpu.memory_space<vmem>>, vector<4x256xf32>
    tpu.vector_store %arg3[%c8, %c0_30], %100 {strides = array<i32>} : memref<108x256xf32, #tpu.memory_space<vmem>>, vector<4x256xf32>,
    %cst_31 = arith.constant 0.000000e+00 : f32
    %102 = vector.broadcast %cst_31 : f32 to vector<1x256xf32>
    %103 = arith.subf %95, %102 : vector<1x256xf32>
    %cst_32 = arith.constant 5.000000e+00 : f32
    %104 = vector.broadcast %cst_32 : f32 to vector<1x256xf32>
    %105 = arith.mulf %103, %104 : vector<1x256xf32>
    %106 = math.floor %105 : vector<1x256xf32>
    %107 = arith.fptosi %106 : vector<1x256xf32> to vector<1x256xi32>
    %cst_33 = arith.constant 0.000000e+00 : f32
    %108 = vector.broadcast %cst_33 : f32 to vector<1x256xf32>
    %109 = arith.subf %97, %108 : vector<1x256xf32>
    %cst_34 = arith.constant 5.000000e+00 : f32
    %110 = vector.broadcast %cst_34 : f32 to vector<1x256xf32>
    %111 = arith.mulf %109, %110 : vector<1x256xf32>
    %112 = math.floor %111 : vector<1x256xf32>
    %113 = arith.fptosi %112 : vector<1x256xf32> to vector<1x256xi32>
    %cst_35 = arith.constant 0.000000e+00 : f32
    %114 = vector.broadcast %cst_35 : f32 to vector<1x256xf32>
    %115 = arith.subf %99, %114 : vector<1x256xf32>
    %cst_36 = arith.constant 5.000000e+00 : f32
    %116 = vector.broadcast %cst_36 : f32 to vector<1x256xf32>
    %117 = arith.mulf %115, %116 : vector<1x256xf32>
    %118 = math.floor %117 : vector<1x256xf32>
    %119 = arith.fptosi %118 : vector<1x256xf32> to vector<1x256xi32>
    %120 = vector.broadcast %0 : i32 to vector<1x256xi32>
    %121 = arith.subi %107, %120 : vector<1x256xi32>
    %122 = vector.broadcast %3 : i32 to vector<1x256xi32>
    %123 = arith.muli %121, %122 : vector<1x256xi32>
    %124 = arith.addi %13, %123 : vector<1x256xi32>
    %125 = vector.broadcast %1 : i32 to vector<1x256xi32>
    %126 = arith.subi %113, %125 : vector<1x256xi32>
    %127 = vector.broadcast %4 : i32 to vector<1x256xi32>
    %128 = arith.muli %126, %127 : vector<1x256xi32>
    %129 = arith.addi %124, %128 : vector<1x256xi32>
    %130 = vector.broadcast %2 : i32 to vector<1x256xi32>
    %131 = arith.subi %119, %130 : vector<1x256xi32>
    %132 = arith.addi %129, %131 : vector<1x256xi32>
    %c2_37 = arith.constant 2 : index
    %c0_38 = arith.constant 0 : index
    %133 = vector.load %arg4[%c2_37, %c0_38] : memref<27x256xi32, #tpu.memory_space<vmem>>, vector<1x256xi32>
    tpu.vector_store %arg4[%c2_37, %c0_38], %132 {strides = array<i32>} : memref<27x256xi32, #tpu.memory_space<vmem>>, vector<1x256xi32>,
    %cst_39 = arith.constant -2.000000e-01 : f32
    %134 = vector.broadcast %cst_39 : f32 to vector<1x256xf32>
    %135 = arith.addf %8, %134 : vector<1x256xf32>
    %cst_40 = arith.constant 0.000000e+00 : f32
    %136 = vector.broadcast %cst_40 : f32 to vector<1x256xf32>
    %137 = arith.addf %9, %136 : vector<1x256xf32>
    %cst_41 = arith.constant -2.000000e-01 : f32
    %138 = vector.broadcast %cst_41 : f32 to vector<1x256xf32>
    %139 = arith.addf %10, %138 : vector<1x256xf32>
    %140 = tpu.concatenate %7, %135, %137, %139 in 0 : vector<1x256xf32>, vector<1x256xf32>, vector<1x256xf32>, vector<1x256xf32> -> vector<4x256xf32>
    %c12 = arith.constant 12 : index
    %c0_42 = arith.constant 0 : index
    %141 = vector.load %arg3[%c12, %c0_42] : memref<108x256xf32, #tpu.memory_space<vmem>>, vector<4x256xf32>
    tpu.vector_store %arg3[%c12, %c0_42], %140 {strides = array<i32>} : memref<108x256xf32, #tpu.memory_space<vmem>>, vector<4x256xf32>,
    %cst_43 = arith.constant 0.000000e+00 : f32
    %142 = vector.broadcast %cst_43 : f32 to vector<1x256xf32>
    %143 = arith.subf %135, %142 : vector<1x256xf32>
    %cst_44 = arith.constant 5.000000e+00 : f32
    %144 = vector.broadcast %cst_44 : f32 to vector<1x256xf32>
    %145 = arith.mulf %143, %144 : vector<1x256xf32>
    %146 = math.floor %145 : vector<1x256xf32>
    %147 = arith.fptosi %146 : vector<1x256xf32> to vector<1x256xi32>
    %cst_45 = arith.constant 0.000000e+00 : f32
    %148 = vector.broadcast %cst_45 : f32 to vector<1x256xf32>
    %149 = arith.subf %137, %148 : vector<1x256xf32>
    %cst_46 = arith.constant 5.000000e+00 : f32
    %150 = vector.broadcast %cst_46 : f32 to vector<1x256xf32>
    %151 = arith.mulf %149, %150 : vector<1x256xf32>
    %152 = math.floor %151 : vector<1x256xf32>
    %153 = arith.fptosi %152 : vector<1x256xf32> to vector<1x256xi32>
    %cst_47 = arith.constant 0.000000e+00 : f32
    %154 = vector.broadcast %cst_47 : f32 to vector<1x256xf32>
    %155 = arith.subf %139, %154 : vector<1x256xf32>
    %cst_48 = arith.constant 5.000000e+00 : f32
    %156 = vector.broadcast %cst_48 : f32 to vector<1x256xf32>
    %157 = arith.mulf %155, %156 : vector<1x256xf32>
    %158 = math.floor %157 : vector<1x256xf32>
    %159 = arith.fptosi %158 : vector<1x256xf32> to vector<1x256xi32>
    %160 = vector.broadcast %0 : i32 to vector<1x256xi32>
    %161 = arith.subi %147, %160 : vector<1x256xi32>
    %162 = vector.broadcast %3 : i32 to vector<1x256xi32>
    %163 = arith.muli %161, %162 : vector<1x256xi32>
    %164 = arith.addi %13, %163 : vector<1x256xi32>
    %165 = vector.broadcast %1 : i32 to vector<1x256xi32>
    %166 = arith.subi %153, %165 : vector<1x256xi32>
    %167 = vector.broadcast %4 : i32 to vector<1x256xi32>
    %168 = arith.muli %166, %167 : vector<1x256xi32>
    %169 = arith.addi %164, %168 : vector<1x256xi32>
    %170 = vector.broadcast %2 : i32 to vector<1x256xi32>
    %171 = arith.subi %159, %170 : vector<1x256xi32>
    %172 = arith.addi %169, %171 : vector<1x256xi32>
    %c3_49 = arith.constant 3 : index
    %c0_50 = arith.constant 0 : index
    %173 = vector.load %arg4[%c3_49, %c0_50] : memref<27x256xi32, #tpu.memory_space<vmem>>, vector<1x256xi32>
    tpu.vector_store %arg4[%c3_49, %c0_50], %172 {strides = array<i32>} : memref<27x256xi32, #tpu.memory_space<vmem>>, vector<1x256xi32>,
    %cst_51 = arith.constant -2.000000e-01 : f32
    %174 = vector.broadcast %cst_51 : f32 to vector<1x256xf32>
    %175 = arith.addf %8, %174 : vector<1x256xf32>
    %cst_52 = arith.constant 0.000000e+00 : f32
    %176 = vector.broadcast %cst_52 : f32 to vector<1x256xf32>
    %177 = arith.addf %9, %176 : vector<1x256xf32>
    %cst_53 = arith.constant 0.000000e+00 : f32
    %178 = vector.broadcast %cst_53 : f32 to vector<1x256xf32>
    %179 = arith.addf %10, %178 : vector<1x256xf32>
    %180 = tpu.concatenate %7, %175, %177, %179 in 0 : vector<1x256xf32>, vector<1x256xf32>, vector<1x256xf32>, vector<1x256xf32> -> vector<4x256xf32>
    %c16 = arith.constant 16 : index
    %c0_54 = arith.constant 0 : index
    %181 = vector.load %arg3[%c16, %c0_54] : memref<108x256xf32, #tpu.memory_space<vmem>>, vector<4x256xf32>
    tpu.vector_store %arg3[%c16, %c0_54], %180 {strides = array<i32>} : memref<108x256xf32, #tpu.memory_space<vmem>>, vector<4x256xf32>,
    %cst_55 = arith.constant 0.000000e+00 : f32
    %182 = vector.broadcast %cst_55 : f32 to vector<1x256xf32>
    %183 = arith.subf %175, %182 : vector<1x256xf32>
    %cst_56 = arith.constant 5.000000e+00 : f32
    %184 = vector.broadcast %cst_56 : f32 to vector<1x256xf32>
    %185 = arith.mulf %183, %184 : vector<1x256xf32>
    %186 = math.floor %185 : vector<1x256xf32>
    %187 = arith.fptosi %186 : vector<1x256xf32> to vector<1x256xi32>
    %cst_57 = arith.constant 0.000000e+00 : f32
    %188 = vector.broadcast %cst_57 : f32 to vector<1x256xf32>
    %189 = arith.subf %177, %188 : vector<1x256xf32>
    %cst_58 = arith.constant 5.000000e+00 : f32
    %190 = vector.broadcast %cst_58 : f32 to vector<1x256xf32>
    %191 = arith.mulf %189, %190 : vector<1x256xf32>
    %192 = math.floor %191 : vector<1x256xf32>
    %193 = arith.fptosi %192 : vector<1x256xf32> to vector<1x256xi32>
    %cst_59 = arith.constant 0.000000e+00 : f32
    %194 = vector.broadcast %cst_59 : f32 to vector<1x256xf32>
    %195 = arith.subf %179, %194 : vector<1x256xf32>
    %cst_60 = arith.constant 5.000000e+00 : f32
    %196 = vector.broadcast %cst_60 : f32 to vector<1x256xf32>
    %197 = arith.mulf %195, %196 : vector<1x256xf32>
    %198 = math.floor %197 : vector<1x256xf32>
    %199 = arith.fptosi %198 : vector<1x256xf32> to vector<1x256xi32>
    %200 = vector.broadcast %0 : i32 to vector<1x256xi32>
    %201 = arith.subi %187, %200 : vector<1x256xi32>
    %202 = vector.broadcast %3 : i32 to vector<1x256xi32>
    %203 = arith.muli %201, %202 : vector<1x256xi32>
    %204 = arith.addi %13, %203 : vector<1x256xi32>
    %205 = vector.broadcast %1 : i32 to vector<1x256xi32>
    %206 = arith.subi %193, %205 : vector<1x256xi32>
    %207 = vector.broadcast %4 : i32 to vector<1x256xi32>
    %208 = arith.muli %206, %207 : vector<1x256xi32>
    %209 = arith.addi %204, %208 : vector<1x256xi32>
    %210 = vector.broadcast %2 : i32 to vector<1x256xi32>
    %211 = arith.subi %199, %210 : vector<1x256xi32>
    %212 = arith.addi %209, %211 : vector<1x256xi32>
    %c4_61 = arith.constant 4 : index
    %c0_62 = arith.constant 0 : index
    %213 = vector.load %arg4[%c4_61, %c0_62] : memref<27x256xi32, #tpu.memory_space<vmem>>, vector<1x256xi32>
    tpu.vector_store %arg4[%c4_61, %c0_62], %212 {strides = array<i32>} : memref<27x256xi32, #tpu.memory_space<vmem>>, vector<1x256xi32>,
    %cst_63 = arith.constant -2.000000e-01 : f32
    %214 = vector.broadcast %cst_63 : f32 to vector<1x256xf32>
    %215 = arith.addf %8, %214 : vector<1x256xf32>
    %cst_64 = arith.constant 0.000000e+00 : f32
    %216 = vector.broadcast %cst_64 : f32 to vector<1x256xf32>
    %217 = arith.addf %9, %216 : vector<1x256xf32>
    %cst_65 = arith.constant 2.000000e-01 : f32
    %218 = vector.broadcast %cst_65 : f32 to vector<1x256xf32>
    %219 = arith.addf %10, %218 : vector<1x256xf32>
    %220 = tpu.concatenate %7, %215, %217, %219 in 0 : vector<1x256xf32>, vector<1x256xf32>, vector<1x256xf32>, vector<1x256xf32> -> vector<4x256xf32>
    %c20 = arith.constant 20 : index
    %c0_66 = arith.constant 0 : index
    %221 = vector.load %arg3[%c20, %c0_66] : memref<108x256xf32, #tpu.memory_space<vmem>>, vector<4x256xf32>
    tpu.vector_store %arg3[%c20, %c0_66], %220 {strides = array<i32>} : memref<108x256xf32, #tpu.memory_space<vmem>>, vector<4x256xf32>,
    %cst_67 = arith.constant 0.000000e+00 : f32
    %222 = vector.broadcast %cst_67 : f32 to vector<1x256xf32>
    %223 = arith.subf %215, %222 : vector<1x256xf32>
    %cst_68 = arith.constant 5.000000e+00 : f32
    %224 = vector.broadcast %cst_68 : f32 to vector<1x256xf32>
    %225 = arith.mulf %223, %224 : vector<1x256xf32>
    %226 = math.floor %225 : vector<1x256xf32>
    %227 = arith.fptosi %226 : vector<1x256xf32> to vector<1x256xi32>
    %cst_69 = arith.constant 0.000000e+00 : f32
    %228 = vector.broadcast %cst_69 : f32 to vector<1x256xf32>
    %229 = arith.subf %217, %228 : vector<1x256xf32>
    %cst_70 = arith.constant 5.000000e+00 : f32
    %230 = vector.broadcast %cst_70 : f32 to vector<1x256xf32>
    %231 = arith.mulf %229, %230 : vector<1x256xf32>
    %232 = math.floor %231 : vector<1x256xf32>
    %233 = arith.fptosi %232 : vector<1x256xf32> to vector<1x256xi32>
    %cst_71 = arith.constant 0.000000e+00 : f32
    %234 = vector.broadcast %cst_71 : f32 to vector<1x256xf32>
    %235 = arith.subf %219, %234 : vector<1x256xf32>
    %cst_72 = arith.constant 5.000000e+00 : f32
    %236 = vector.broadcast %cst_72 : f32 to vector<1x256xf32>
    %237 = arith.mulf %235, %236 : vector<1x256xf32>
    %238 = math.floor %237 : vector<1x256xf32>
    %239 = arith.fptosi %238 : vector<1x256xf32> to vector<1x256xi32>
    %240 = vector.broadcast %0 : i32 to vector<1x256xi32>
    %241 = arith.subi %227, %240 : vector<1x256xi32>
    %242 = vector.broadcast %3 : i32 to vector<1x256xi32>
    %243 = arith.muli %241, %242 : vector<1x256xi32>
    %244 = arith.addi %13, %243 : vector<1x256xi32>
    %245 = vector.broadcast %1 : i32 to vector<1x256xi32>
    %246 = arith.subi %233, %245 : vector<1x256xi32>
    %247 = vector.broadcast %4 : i32 to vector<1x256xi32>
    %248 = arith.muli %246, %247 : vector<1x256xi32>
    %249 = arith.addi %244, %248 : vector<1x256xi32>
    %250 = vector.broadcast %2 : i32 to vector<1x256xi32>
    %251 = arith.subi %239, %250 : vector<1x256xi32>
    %252 = arith.addi %249, %251 : vector<1x256xi32>
    %c5_73 = arith.constant 5 : index
    %c0_74 = arith.constant 0 : index
    %253 = vector.load %arg4[%c5_73, %c0_74] : memref<27x256xi32, #tpu.memory_space<vmem>>, vector<1x256xi32>
    tpu.vector_store %arg4[%c5_73, %c0_74], %252 {strides = array<i32>} : memref<27x256xi32, #tpu.memory_space<vmem>>, vector<1x256xi32>,
    %cst_75 = arith.constant -2.000000e-01 : f32
    %254 = vector.broadcast %cst_75 : f32 to vector<1x256xf32>
    %255 = arith.addf %8, %254 : vector<1x256xf32>
    %cst_76 = arith.constant 2.000000e-01 : f32
    %256 = vector.broadcast %cst_76 : f32 to vector<1x256xf32>
    %257 = arith.addf %9, %256 : vector<1x256xf32>
    %cst_77 = arith.constant -2.000000e-01 : f32
    %258 = vector.broadcast %cst_77 : f32 to vector<1x256xf32>
    %259 = arith.addf %10, %258 : vector<1x256xf32>
    %260 = tpu.concatenate %7, %255, %257, %259 in 0 : vector<1x256xf32>, vector<1x256xf32>, vector<1x256xf32>, vector<1x256xf32> -> vector<4x256xf32>
    %c24 = arith.constant 24 : index
    %c0_78 = arith.constant 0 : index
    %261 = vector.load %arg3[%c24, %c0_78] : memref<108x256xf32, #tpu.memory_space<vmem>>, vector<4x256xf32>
    tpu.vector_store %arg3[%c24, %c0_78], %260 {strides = array<i32>} : memref<108x256xf32, #tpu.memory_space<vmem>>, vector<4x256xf32>,
    %cst_79 = arith.constant 0.000000e+00 : f32
    %262 = vector.broadcast %cst_79 : f32 to vector<1x256xf32>
    %263 = arith.subf %255, %262 : vector<1x256xf32>
    %cst_80 = arith.constant 5.000000e+00 : f32
    %264 = vector.broadcast %cst_80 : f32 to vector<1x256xf32>
    %265 = arith.mulf %263, %264 : vector<1x256xf32>
    %266 = math.floor %265 : vector<1x256xf32>
    %267 = arith.fptosi %266 : vector<1x256xf32> to vector<1x256xi32>
    %cst_81 = arith.constant 0.000000e+00 : f32
    %268 = vector.broadcast %cst_81 : f32 to vector<1x256xf32>
    %269 = arith.subf %257, %268 : vector<1x256xf32>
    %cst_82 = arith.constant 5.000000e+00 : f32
    %270 = vector.broadcast %cst_82 : f32 to vector<1x256xf32>
    %271 = arith.mulf %269, %270 : vector<1x256xf32>
    %272 = math.floor %271 : vector<1x256xf32>
    %273 = arith.fptosi %272 : vector<1x256xf32> to vector<1x256xi32>
    %cst_83 = arith.constant 0.000000e+00 : f32
    %274 = vector.broadcast %cst_83 : f32 to vector<1x256xf32>
    %275 = arith.subf %259, %274 : vector<1x256xf32>
    %cst_84 = arith.constant 5.000000e+00 : f32
    %276 = vector.broadcast %cst_84 : f32 to vector<1x256xf32>
    %277 = arith.mulf %275, %276 : vector<1x256xf32>
    %278 = math.floor %277 : vector<1x256xf32>
    %279 = arith.fptosi %278 : vector<1x256xf32> to vector<1x256xi32>
    %280 = vector.broadcast %0 : i32 to vector<1x256xi32>
    %281 = arith.subi %267, %280 : vector<1x256xi32>
    %282 = vector.broadcast %3 : i32 to vector<1x256xi32>
    %283 = arith.muli %281, %282 : vector<1x256xi32>
    %284 = arith.addi %13, %283 : vector<1x256xi32>
    %285 = vector.broadcast %1 : i32 to vector<1x256xi32>
    %286 = arith.subi %273, %285 : vector<1x256xi32>
    %287 = vector.broadcast %4 : i32 to vector<1x256xi32>
    %288 = arith.muli %286, %287 : vector<1x256xi32>
    %289 = arith.addi %284, %288 : vector<1x256xi32>
    %290 = vector.broadcast %2 : i32 to vector<1x256xi32>
    %291 = arith.subi %279, %290 : vector<1x256xi32>
    %292 = arith.addi %289, %291 : vector<1x256xi32>
    %c6 = arith.constant 6 : index
    %c0_85 = arith.constant 0 : index
    %293 = vector.load %arg4[%c6, %c0_85] : memref<27x256xi32, #tpu.memory_space<vmem>>, vector<1x256xi32>
    tpu.vector_store %arg4[%c6, %c0_85], %292 {strides = array<i32>} : memref<27x256xi32, #tpu.memory_space<vmem>>, vector<1x256xi32>,
    %cst_86 = arith.constant -2.000000e-01 : f32
    %294 = vector.broadcast %cst_86 : f32 to vector<1x256xf32>
    %295 = arith.addf %8, %294 : vector<1x256xf32>
    %cst_87 = arith.constant 2.000000e-01 : f32
    %296 = vector.broadcast %cst_87 : f32 to vector<1x256xf32>
    %297 = arith.addf %9, %296 : vector<1x256xf32>
    %cst_88 = arith.constant 0.000000e+00 : f32
    %298 = vector.broadcast %cst_88 : f32 to vector<1x256xf32>
    %299 = arith.addf %10, %298 : vector<1x256xf32>
    %300 = tpu.concatenate %7, %295, %297, %299 in 0 : vector<1x256xf32>, vector<1x256xf32>, vector<1x256xf32>, vector<1x256xf32> -> vector<4x256xf32>
    %c28 = arith.constant 28 : index
    %c0_89 = arith.constant 0 : index
    %301 = vector.load %arg3[%c28, %c0_89] : memref<108x256xf32, #tpu.memory_space<vmem>>, vector<4x256xf32>
    tpu.vector_store %arg3[%c28, %c0_89], %300 {strides = array<i32>} : memref<108x256xf32, #tpu.memory_space<vmem>>, vector<4x256xf32>,
    %cst_90 = arith.constant 0.000000e+00 : f32
    %302 = vector.broadcast %cst_90 : f32 to vector<1x256xf32>
    %303 = arith.subf %295, %302 : vector<1x256xf32>
    %cst_91 = arith.constant 5.000000e+00 : f32
    %304 = vector.broadcast %cst_91 : f32 to vector<1x256xf32>
    %305 = arith.mulf %303, %304 : vector<1x256xf32>
    %306 = math.floor %305 : vector<1x256xf32>
    %307 = arith.fptosi %306 : vector<1x256xf32> to vector<1x256xi32>
    %cst_92 = arith.constant 0.000000e+00 : f32
    %308 = vector.broadcast %cst_92 : f32 to vector<1x256xf32>
    %309 = arith.subf %297, %308 : vector<1x256xf32>
    %cst_93 = arith.constant 5.000000e+00 : f32
    %310 = vector.broadcast %cst_93 : f32 to vector<1x256xf32>
    %311 = arith.mulf %309, %310 : vector<1x256xf32>
    %312 = math.floor %311 : vector<1x256xf32>
    %313 = arith.fptosi %312 : vector<1x256xf32> to vector<1x256xi32>
    %cst_94 = arith.constant 0.000000e+00 : f32
    %314 = vector.broadcast %cst_94 : f32 to vector<1x256xf32>
    %315 = arith.subf %299, %314 : vector<1x256xf32>
    %cst_95 = arith.constant 5.000000e+00 : f32
    %316 = vector.broadcast %cst_95 : f32 to vector<1x256xf32>
    %317 = arith.mulf %315, %316 : vector<1x256xf32>
    %318 = math.floor %317 : vector<1x256xf32>
    %319 = arith.fptosi %318 : vector<1x256xf32> to vector<1x256xi32>
    %320 = vector.broadcast %0 : i32 to vector<1x256xi32>
    %321 = arith.subi %307, %320 : vector<1x256xi32>
    %322 = vector.broadcast %3 : i32 to vector<1x256xi32>
    %323 = arith.muli %321, %322 : vector<1x256xi32>
    %324 = arith.addi %13, %323 : vector<1x256xi32>
    %325 = vector.broadcast %1 : i32 to vector<1x256xi32>
    %326 = arith.subi %313, %325 : vector<1x256xi32>
    %327 = vector.broadcast %4 : i32 to vector<1x256xi32>
    %328 = arith.muli %326, %327 : vector<1x256xi32>
    %329 = arith.addi %324, %328 : vector<1x256xi32>
    %330 = vector.broadcast %2 : i32 to vector<1x256xi32>
    %331 = arith.subi %319, %330 : vector<1x256xi32>
    %332 = arith.addi %329, %331 : vector<1x256xi32>
    %c7 = arith.constant 7 : index
    %c0_96 = arith.constant 0 : index
    %333 = vector.load %arg4[%c7, %c0_96] : memref<27x256xi32, #tpu.memory_space<vmem>>, vector<1x256xi32>
    tpu.vector_store %arg4[%c7, %c0_96], %332 {strides = array<i32>} : memref<27x256xi32, #tpu.memory_space<vmem>>, vector<1x256xi32>,
    %cst_97 = arith.constant -2.000000e-01 : f32
    %334 = vector.broadcast %cst_97 : f32 to vector<1x256xf32>
    %335 = arith.addf %8, %334 : vector<1x256xf32>
    %cst_98 = arith.constant 2.000000e-01 : f32
    %336 = vector.broadcast %cst_98 : f32 to vector<1x256xf32>
    %337 = arith.addf %9, %336 : vector<1x256xf32>
    %cst_99 = arith.constant 2.000000e-01 : f32
    %338 = vector.broadcast %cst_99 : f32 to vector<1x256xf32>
    %339 = arith.addf %10, %338 : vector<1x256xf32>
    %340 = tpu.concatenate %7, %335, %337, %339 in 0 : vector<1x256xf32>, vector<1x256xf32>, vector<1x256xf32>, vector<1x256xf32> -> vector<4x256xf32>
    %c32 = arith.constant 32 : index
    %c0_100 = arith.constant 0 : index
    %341 = vector.load %arg3[%c32, %c0_100] : memref<108x256xf32, #tpu.memory_space<vmem>>, vector<4x256xf32>
    tpu.vector_store %arg3[%c32, %c0_100], %340 {strides = array<i32>} : memref<108x256xf32, #tpu.memory_space<vmem>>, vector<4x256xf32>,
    %cst_101 = arith.constant 0.000000e+00 : f32
    %342 = vector.broadcast %cst_101 : f32 to vector<1x256xf32>
    %343 = arith.subf %335, %342 : vector<1x256xf32>
    %cst_102 = arith.constant 5.000000e+00 : f32
    %344 = vector.broadcast %cst_102 : f32 to vector<1x256xf32>
    %345 = arith.mulf %343, %344 : vector<1x256xf32>
    %346 = math.floor %345 : vector<1x256xf32>
    %347 = arith.fptosi %346 : vector<1x256xf32> to vector<1x256xi32>
    %cst_103 = arith.constant 0.000000e+00 : f32
    %348 = vector.broadcast %cst_103 : f32 to vector<1x256xf32>
    %349 = arith.subf %337, %348 : vector<1x256xf32>
    %cst_104 = arith.constant 5.000000e+00 : f32
    %350 = vector.broadcast %cst_104 : f32 to vector<1x256xf32>
    %351 = arith.mulf %349, %350 : vector<1x256xf32>
    %352 = math.floor %351 : vector<1x256xf32>
    %353 = arith.fptosi %352 : vector<1x256xf32> to vector<1x256xi32>
    %cst_105 = arith.constant 0.000000e+00 : f32
    %354 = vector.broadcast %cst_105 : f32 to vector<1x256xf32>
    %355 = arith.subf %339, %354 : vector<1x256xf32>
    %cst_106 = arith.constant 5.000000e+00 : f32
    %356 = vector.broadcast %cst_106 : f32 to vector<1x256xf32>
    %357 = arith.mulf %355, %356 : vector<1x256xf32>
    %358 = math.floor %357 : vector<1x256xf32>
    %359 = arith.fptosi %358 : vector<1x256xf32> to vector<1x256xi32>
    %360 = vector.broadcast %0 : i32 to vector<1x256xi32>
    %361 = arith.subi %347, %360 : vector<1x256xi32>
    %362 = vector.broadcast %3 : i32 to vector<1x256xi32>
    %363 = arith.muli %361, %362 : vector<1x256xi32>
    %364 = arith.addi %13, %363 : vector<1x256xi32>
    %365 = vector.broadcast %1 : i32 to vector<1x256xi32>
    %366 = arith.subi %353, %365 : vector<1x256xi32>
    %367 = vector.broadcast %4 : i32 to vector<1x256xi32>
    %368 = arith.muli %366, %367 : vector<1x256xi32>
    %369 = arith.addi %364, %368 : vector<1x256xi32>
    %370 = vector.broadcast %2 : i32 to vector<1x256xi32>
    %371 = arith.subi %359, %370 : vector<1x256xi32>
    %372 = arith.addi %369, %371 : vector<1x256xi32>
    %c8_107 = arith.constant 8 : index
    %c0_108 = arith.constant 0 : index
    %373 = vector.load %arg4[%c8_107, %c0_108] : memref<27x256xi32, #tpu.memory_space<vmem>>, vector<1x256xi32>
    tpu.vector_store %arg4[%c8_107, %c0_108], %372 {strides = array<i32>} : memref<27x256xi32, #tpu.memory_space<vmem>>, vector<1x256xi32>,
    %cst_109 = arith.constant 0.000000e+00 : f32
    %374 = vector.broadcast %cst_109 : f32 to vector<1x256xf32>
    %375 = arith.addf %8, %374 : vector<1x256xf32>
    %cst_110 = arith.constant -2.000000e-01 : f32
    %376 = vector.broadcast %cst_110 : f32 to vector<1x256xf32>
    %377 = arith.addf %9, %376 : vector<1x256xf32>
    %cst_111 = arith.constant -2.000000e-01 : f32
    %378 = vector.broadcast %cst_111 : f32 to vector<1x256xf32>
    %379 = arith.addf %10, %378 : vector<1x256xf32>
    %380 = tpu.concatenate %7, %375, %377, %379 in 0 : vector<1x256xf32>, vector<1x256xf32>, vector<1x256xf32>, vector<1x256xf32> -> vector<4x256xf32>
    %c36 = arith.constant 36 : index
    %c0_112 = arith.constant 0 : index
    %381 = vector.load %arg3[%c36, %c0_112] : memref<108x256xf32, #tpu.memory_space<vmem>>, vector<4x256xf32>
    tpu.vector_store %arg3[%c36, %c0_112], %380 {strides = array<i32>} : memref<108x256xf32, #tpu.memory_space<vmem>>, vector<4x256xf32>,
    %cst_113 = arith.constant 0.000000e+00 : f32
    %382 = vector.broadcast %cst_113 : f32 to vector<1x256xf32>
    %383 = arith.subf %375, %382 : vector<1x256xf32>
    %cst_114 = arith.constant 5.000000e+00 : f32
    %384 = vector.broadcast %cst_114 : f32 to vector<1x256xf32>
    %385 = arith.mulf %383, %384 : vector<1x256xf32>
    %386 = math.floor %385 : vector<1x256xf32>
    %387 = arith.fptosi %386 : vector<1x256xf32> to vector<1x256xi32>
    %cst_115 = arith.constant 0.000000e+00 : f32
    %388 = vector.broadcast %cst_115 : f32 to vector<1x256xf32>
    %389 = arith.subf %377, %388 : vector<1x256xf32>
    %cst_116 = arith.constant 5.000000e+00 : f32
    %390 = vector.broadcast %cst_116 : f32 to vector<1x256xf32>
    %391 = arith.mulf %389, %390 : vector<1x256xf32>
    %392 = math.floor %391 : vector<1x256xf32>
    %393 = arith.fptosi %392 : vector<1x256xf32> to vector<1x256xi32>
    %cst_117 = arith.constant 0.000000e+00 : f32
    %394 = vector.broadcast %cst_117 : f32 to vector<1x256xf32>
    %395 = arith.subf %379, %394 : vector<1x256xf32>
    %cst_118 = arith.constant 5.000000e+00 : f32
    %396 = vector.broadcast %cst_118 : f32 to vector<1x256xf32>
    %397 = arith.mulf %395, %396 : vector<1x256xf32>
    %398 = math.floor %397 : vector<1x256xf32>
    %399 = arith.fptosi %398 : vector<1x256xf32> to vector<1x256xi32>
    %400 = vector.broadcast %0 : i32 to vector<1x256xi32>
    %401 = arith.subi %387, %400 : vector<1x256xi32>
    %402 = vector.broadcast %3 : i32 to vector<1x256xi32>
    %403 = arith.muli %401, %402 : vector<1x256xi32>
    %404 = arith.addi %13, %403 : vector<1x256xi32>
    %405 = vector.broadcast %1 : i32 to vector<1x256xi32>
    %406 = arith.subi %393, %405 : vector<1x256xi32>
    %407 = vector.broadcast %4 : i32 to vector<1x256xi32>
    %408 = arith.muli %406, %407 : vector<1x256xi32>
    %409 = arith.addi %404, %408 : vector<1x256xi32>
    %410 = vector.broadcast %2 : i32 to vector<1x256xi32>
    %411 = arith.subi %399, %410 : vector<1x256xi32>
    %412 = arith.addi %409, %411 : vector<1x256xi32>
    %c9 = arith.constant 9 : index
    %c0_119 = arith.constant 0 : index
    %413 = vector.load %arg4[%c9, %c0_119] : memref<27x256xi32, #tpu.memory_space<vmem>>, vector<1x256xi32>
    tpu.vector_store %arg4[%c9, %c0_119], %412 {strides = array<i32>} : memref<27x256xi32, #tpu.memory_space<vmem>>, vector<1x256xi32>,
    %cst_120 = arith.constant 0.000000e+00 : f32
    %414 = vector.broadcast %cst_120 : f32 to vector<1x256xf32>
    %415 = arith.addf %8, %414 : vector<1x256xf32>
    %cst_121 = arith.constant -2.000000e-01 : f32
    %416 = vector.broadcast %cst_121 : f32 to vector<1x256xf32>
    %417 = arith.addf %9, %416 : vector<1x256xf32>
    %cst_122 = arith.constant 0.000000e+00 : f32
    %418 = vector.broadcast %cst_122 : f32 to vector<1x256xf32>
    %419 = arith.addf %10, %418 : vector<1x256xf32>
    %420 = tpu.concatenate %7, %415, %417, %419 in 0 : vector<1x256xf32>, vector<1x256xf32>, vector<1x256xf32>, vector<1x256xf32> -> vector<4x256xf32>
    %c40 = arith.constant 40 : index
    %c0_123 = arith.constant 0 : index
    %421 = vector.load %arg3[%c40, %c0_123] : memref<108x256xf32, #tpu.memory_space<vmem>>, vector<4x256xf32>
    tpu.vector_store %arg3[%c40, %c0_123], %420 {strides = array<i32>} : memref<108x256xf32, #tpu.memory_space<vmem>>, vector<4x256xf32>,
    %cst_124 = arith.constant 0.000000e+00 : f32
    %422 = vector.broadcast %cst_124 : f32 to vector<1x256xf32>
    %423 = arith.subf %415, %422 : vector<1x256xf32>
    %cst_125 = arith.constant 5.000000e+00 : f32
    %424 = vector.broadcast %cst_125 : f32 to vector<1x256xf32>
    %425 = arith.mulf %423, %424 : vector<1x256xf32>
    %426 = math.floor %425 : vector<1x256xf32>
    %427 = arith.fptosi %426 : vector<1x256xf32> to vector<1x256xi32>
    %cst_126 = arith.constant 0.000000e+00 : f32
    %428 = vector.broadcast %cst_126 : f32 to vector<1x256xf32>
    %429 = arith.subf %417, %428 : vector<1x256xf32>
    %cst_127 = arith.constant 5.000000e+00 : f32
    %430 = vector.broadcast %cst_127 : f32 to vector<1x256xf32>
    %431 = arith.mulf %429, %430 : vector<1x256xf32>
    %432 = math.floor %431 : vector<1x256xf32>
    %433 = arith.fptosi %432 : vector<1x256xf32> to vector<1x256xi32>
    %cst_128 = arith.constant 0.000000e+00 : f32
    %434 = vector.broadcast %cst_128 : f32 to vector<1x256xf32>
    %435 = arith.subf %419, %434 : vector<1x256xf32>
    %cst_129 = arith.constant 5.000000e+00 : f32
    %436 = vector.broadcast %cst_129 : f32 to vector<1x256xf32>
    %437 = arith.mulf %435, %436 : vector<1x256xf32>
    %438 = math.floor %437 : vector<1x256xf32>
    %439 = arith.fptosi %438 : vector<1x256xf32> to vector<1x256xi32>
    %440 = vector.broadcast %0 : i32 to vector<1x256xi32>
    %441 = arith.subi %427, %440 : vector<1x256xi32>
    %442 = vector.broadcast %3 : i32 to vector<1x256xi32>
    %443 = arith.muli %441, %442 : vector<1x256xi32>
    %444 = arith.addi %13, %443 : vector<1x256xi32>
    %445 = vector.broadcast %1 : i32 to vector<1x256xi32>
    %446 = arith.subi %433, %445 : vector<1x256xi32>
    %447 = vector.broadcast %4 : i32 to vector<1x256xi32>
    %448 = arith.muli %446, %447 : vector<1x256xi32>
    %449 = arith.addi %444, %448 : vector<1x256xi32>
    %450 = vector.broadcast %2 : i32 to vector<1x256xi32>
    %451 = arith.subi %439, %450 : vector<1x256xi32>
    %452 = arith.addi %449, %451 : vector<1x256xi32>
    %c10 = arith.constant 10 : index
    %c0_130 = arith.constant 0 : index
    %453 = vector.load %arg4[%c10, %c0_130] : memref<27x256xi32, #tpu.memory_space<vmem>>, vector<1x256xi32>
    tpu.vector_store %arg4[%c10, %c0_130], %452 {strides = array<i32>} : memref<27x256xi32, #tpu.memory_space<vmem>>, vector<1x256xi32>,
    %cst_131 = arith.constant 0.000000e+00 : f32
    %454 = vector.broadcast %cst_131 : f32 to vector<1x256xf32>
    %455 = arith.addf %8, %454 : vector<1x256xf32>
    %cst_132 = arith.constant -2.000000e-01 : f32
    %456 = vector.broadcast %cst_132 : f32 to vector<1x256xf32>
    %457 = arith.addf %9, %456 : vector<1x256xf32>
    %cst_133 = arith.constant 2.000000e-01 : f32
    %458 = vector.broadcast %cst_133 : f32 to vector<1x256xf32>
    %459 = arith.addf %10, %458 : vector<1x256xf32>
    %460 = tpu.concatenate %7, %455, %457, %459 in 0 : vector<1x256xf32>, vector<1x256xf32>, vector<1x256xf32>, vector<1x256xf32> -> vector<4x256xf32>
    %c44 = arith.constant 44 : index
    %c0_134 = arith.constant 0 : index
    %461 = vector.load %arg3[%c44, %c0_134] : memref<108x256xf32, #tpu.memory_space<vmem>>, vector<4x256xf32>
    tpu.vector_store %arg3[%c44, %c0_134], %460 {strides = array<i32>} : memref<108x256xf32, #tpu.memory_space<vmem>>, vector<4x256xf32>,
    %cst_135 = arith.constant 0.000000e+00 : f32
    %462 = vector.broadcast %cst_135 : f32 to vector<1x256xf32>
    %463 = arith.subf %455, %462 : vector<1x256xf32>
    %cst_136 = arith.constant 5.000000e+00 : f32
    %464 = vector.broadcast %cst_136 : f32 to vector<1x256xf32>
    %465 = arith.mulf %463, %464 : vector<1x256xf32>
    %466 = math.floor %465 : vector<1x256xf32>
    %467 = arith.fptosi %466 : vector<1x256xf32> to vector<1x256xi32>
    %cst_137 = arith.constant 0.000000e+00 : f32
    %468 = vector.broadcast %cst_137 : f32 to vector<1x256xf32>
    %469 = arith.subf %457, %468 : vector<1x256xf32>
    %cst_138 = arith.constant 5.000000e+00 : f32
    %470 = vector.broadcast %cst_138 : f32 to vector<1x256xf32>
    %471 = arith.mulf %469, %470 : vector<1x256xf32>
    %472 = math.floor %471 : vector<1x256xf32>
    %473 = arith.fptosi %472 : vector<1x256xf32> to vector<1x256xi32>
    %cst_139 = arith.constant 0.000000e+00 : f32
    %474 = vector.broadcast %cst_139 : f32 to vector<1x256xf32>
    %475 = arith.subf %459, %474 : vector<1x256xf32>
    %cst_140 = arith.constant 5.000000e+00 : f32
    %476 = vector.broadcast %cst_140 : f32 to vector<1x256xf32>
    %477 = arith.mulf %475, %476 : vector<1x256xf32>
    %478 = math.floor %477 : vector<1x256xf32>
    %479 = arith.fptosi %478 : vector<1x256xf32> to vector<1x256xi32>
    %480 = vector.broadcast %0 : i32 to vector<1x256xi32>
    %481 = arith.subi %467, %480 : vector<1x256xi32>
    %482 = vector.broadcast %3 : i32 to vector<1x256xi32>
    %483 = arith.muli %481, %482 : vector<1x256xi32>
    %484 = arith.addi %13, %483 : vector<1x256xi32>
    %485 = vector.broadcast %1 : i32 to vector<1x256xi32>
    %486 = arith.subi %473, %485 : vector<1x256xi32>
    %487 = vector.broadcast %4 : i32 to vector<1x256xi32>
    %488 = arith.muli %486, %487 : vector<1x256xi32>
    %489 = arith.addi %484, %488 : vector<1x256xi32>
    %490 = vector.broadcast %2 : i32 to vector<1x256xi32>
    %491 = arith.subi %479, %490 : vector<1x256xi32>
    %492 = arith.addi %489, %491 : vector<1x256xi32>
    %c11 = arith.constant 11 : index
    %c0_141 = arith.constant 0 : index
    %493 = vector.load %arg4[%c11, %c0_141] : memref<27x256xi32, #tpu.memory_space<vmem>>, vector<1x256xi32>
    tpu.vector_store %arg4[%c11, %c0_141], %492 {strides = array<i32>} : memref<27x256xi32, #tpu.memory_space<vmem>>, vector<1x256xi32>,
    %cst_142 = arith.constant 0.000000e+00 : f32
    %494 = vector.broadcast %cst_142 : f32 to vector<1x256xf32>
    %495 = arith.addf %8, %494 : vector<1x256xf32>
    %cst_143 = arith.constant 0.000000e+00 : f32
    %496 = vector.broadcast %cst_143 : f32 to vector<1x256xf32>
    %497 = arith.addf %9, %496 : vector<1x256xf32>
    %cst_144 = arith.constant -2.000000e-01 : f32
    %498 = vector.broadcast %cst_144 : f32 to vector<1x256xf32>
    %499 = arith.addf %10, %498 : vector<1x256xf32>
    %500 = tpu.concatenate %7, %495, %497, %499 in 0 : vector<1x256xf32>, vector<1x256xf32>, vector<1x256xf32>, vector<1x256xf32> -> vector<4x256xf32>
    %c48 = arith.constant 48 : index
    %c0_145 = arith.constant 0 : index
    %501 = vector.load %arg3[%c48, %c0_145] : memref<108x256xf32, #tpu.memory_space<vmem>>, vector<4x256xf32>
    tpu.vector_store %arg3[%c48, %c0_145], %500 {strides = array<i32>} : memref<108x256xf32, #tpu.memory_space<vmem>>, vector<4x256xf32>,
    %cst_146 = arith.constant 0.000000e+00 : f32
    %502 = vector.broadcast %cst_146 : f32 to vector<1x256xf32>
    %503 = arith.subf %495, %502 : vector<1x256xf32>
    %cst_147 = arith.constant 5.000000e+00 : f32
    %504 = vector.broadcast %cst_147 : f32 to vector<1x256xf32>
    %505 = arith.mulf %503, %504 : vector<1x256xf32>
    %506 = math.floor %505 : vector<1x256xf32>
    %507 = arith.fptosi %506 : vector<1x256xf32> to vector<1x256xi32>
    %cst_148 = arith.constant 0.000000e+00 : f32
    %508 = vector.broadcast %cst_148 : f32 to vector<1x256xf32>
    %509 = arith.subf %497, %508 : vector<1x256xf32>
    %cst_149 = arith.constant 5.000000e+00 : f32
    %510 = vector.broadcast %cst_149 : f32 to vector<1x256xf32>
    %511 = arith.mulf %509, %510 : vector<1x256xf32>
    %512 = math.floor %511 : vector<1x256xf32>
    %513 = arith.fptosi %512 : vector<1x256xf32> to vector<1x256xi32>
    %cst_150 = arith.constant 0.000000e+00 : f32
    %514 = vector.broadcast %cst_150 : f32 to vector<1x256xf32>
    %515 = arith.subf %499, %514 : vector<1x256xf32>
    %cst_151 = arith.constant 5.000000e+00 : f32
    %516 = vector.broadcast %cst_151 : f32 to vector<1x256xf32>
    %517 = arith.mulf %515, %516 : vector<1x256xf32>
    %518 = math.floor %517 : vector<1x256xf32>
    %519 = arith.fptosi %518 : vector<1x256xf32> to vector<1x256xi32>
    %520 = vector.broadcast %0 : i32 to vector<1x256xi32>
    %521 = arith.subi %507, %520 : vector<1x256xi32>
    %522 = vector.broadcast %3 : i32 to vector<1x256xi32>
    %523 = arith.muli %521, %522 : vector<1x256xi32>
    %524 = arith.addi %13, %523 : vector<1x256xi32>
    %525 = vector.broadcast %1 : i32 to vector<1x256xi32>
    %526 = arith.subi %513, %525 : vector<1x256xi32>
    %527 = vector.broadcast %4 : i32 to vector<1x256xi32>
    %528 = arith.muli %526, %527 : vector<1x256xi32>
    %529 = arith.addi %524, %528 : vector<1x256xi32>
    %530 = vector.broadcast %2 : i32 to vector<1x256xi32>
    %531 = arith.subi %519, %530 : vector<1x256xi32>
    %532 = arith.addi %529, %531 : vector<1x256xi32>
    %c12_152 = arith.constant 12 : index
    %c0_153 = arith.constant 0 : index
    %533 = vector.load %arg4[%c12_152, %c0_153] : memref<27x256xi32, #tpu.memory_space<vmem>>, vector<1x256xi32>
    tpu.vector_store %arg4[%c12_152, %c0_153], %532 {strides = array<i32>} : memref<27x256xi32, #tpu.memory_space<vmem>>, vector<1x256xi32>,
    %cst_154 = arith.constant 0.000000e+00 : f32
    %534 = vector.broadcast %cst_154 : f32 to vector<1x256xf32>
    %535 = arith.addf %8, %534 : vector<1x256xf32>
    %cst_155 = arith.constant 0.000000e+00 : f32
    %536 = vector.broadcast %cst_155 : f32 to vector<1x256xf32>
    %537 = arith.addf %9, %536 : vector<1x256xf32>
    %cst_156 = arith.constant 0.000000e+00 : f32
    %538 = vector.broadcast %cst_156 : f32 to vector<1x256xf32>
    %539 = arith.addf %10, %538 : vector<1x256xf32>
    %540 = tpu.concatenate %7, %535, %537, %539 in 0 : vector<1x256xf32>, vector<1x256xf32>, vector<1x256xf32>, vector<1x256xf32> -> vector<4x256xf32>
    %c52 = arith.constant 52 : index
    %c0_157 = arith.constant 0 : index
    %541 = vector.load %arg3[%c52, %c0_157] : memref<108x256xf32, #tpu.memory_space<vmem>>, vector<4x256xf32>
    tpu.vector_store %arg3[%c52, %c0_157], %540 {strides = array<i32>} : memref<108x256xf32, #tpu.memory_space<vmem>>, vector<4x256xf32>,
    %cst_158 = arith.constant 0.000000e+00 : f32
    %542 = vector.broadcast %cst_158 : f32 to vector<1x256xf32>
    %543 = arith.subf %535, %542 : vector<1x256xf32>
    %cst_159 = arith.constant 5.000000e+00 : f32
    %544 = vector.broadcast %cst_159 : f32 to vector<1x256xf32>
    %545 = arith.mulf %543, %544 : vector<1x256xf32>
    %546 = math.floor %545 : vector<1x256xf32>
    %547 = arith.fptosi %546 : vector<1x256xf32> to vector<1x256xi32>
    %cst_160 = arith.constant 0.000000e+00 : f32
    %548 = vector.broadcast %cst_160 : f32 to vector<1x256xf32>
    %549 = arith.subf %537, %548 : vector<1x256xf32>
    %cst_161 = arith.constant 5.000000e+00 : f32
    %550 = vector.broadcast %cst_161 : f32 to vector<1x256xf32>
    %551 = arith.mulf %549, %550 : vector<1x256xf32>
    %552 = math.floor %551 : vector<1x256xf32>
    %553 = arith.fptosi %552 : vector<1x256xf32> to vector<1x256xi32>
    %cst_162 = arith.constant 0.000000e+00 : f32
    %554 = vector.broadcast %cst_162 : f32 to vector<1x256xf32>
    %555 = arith.subf %539, %554 : vector<1x256xf32>
    %cst_163 = arith.constant 5.000000e+00 : f32
    %556 = vector.broadcast %cst_163 : f32 to vector<1x256xf32>
    %557 = arith.mulf %555, %556 : vector<1x256xf32>
    %558 = math.floor %557 : vector<1x256xf32>
    %559 = arith.fptosi %558 : vector<1x256xf32> to vector<1x256xi32>
    %560 = vector.broadcast %0 : i32 to vector<1x256xi32>
    %561 = arith.subi %547, %560 : vector<1x256xi32>
    %562 = vector.broadcast %3 : i32 to vector<1x256xi32>
    %563 = arith.muli %561, %562 : vector<1x256xi32>
    %564 = arith.addi %13, %563 : vector<1x256xi32>
    %565 = vector.broadcast %1 : i32 to vector<1x256xi32>
    %566 = arith.subi %553, %565 : vector<1x256xi32>
    %567 = vector.broadcast %4 : i32 to vector<1x256xi32>
    %568 = arith.muli %566, %567 : vector<1x256xi32>
    %569 = arith.addi %564, %568 : vector<1x256xi32>
    %570 = vector.broadcast %2 : i32 to vector<1x256xi32>
    %571 = arith.subi %559, %570 : vector<1x256xi32>
    %572 = arith.addi %569, %571 : vector<1x256xi32>
    %c13 = arith.constant 13 : index
    %c0_164 = arith.constant 0 : index
    %573 = vector.load %arg4[%c13, %c0_164] : memref<27x256xi32, #tpu.memory_space<vmem>>, vector<1x256xi32>
    tpu.vector_store %arg4[%c13, %c0_164], %572 {strides = array<i32>} : memref<27x256xi32, #tpu.memory_space<vmem>>, vector<1x256xi32>,
    %cst_165 = arith.constant 0.000000e+00 : f32
    %574 = vector.broadcast %cst_165 : f32 to vector<1x256xf32>
    %575 = arith.addf %8, %574 : vector<1x256xf32>
    %cst_166 = arith.constant 0.000000e+00 : f32
    %576 = vector.broadcast %cst_166 : f32 to vector<1x256xf32>
    %577 = arith.addf %9, %576 : vector<1x256xf32>
    %cst_167 = arith.constant 2.000000e-01 : f32
    %578 = vector.broadcast %cst_167 : f32 to vector<1x256xf32>
    %579 = arith.addf %10, %578 : vector<1x256xf32>
    %580 = tpu.concatenate %7, %575, %577, %579 in 0 : vector<1x256xf32>, vector<1x256xf32>, vector<1x256xf32>, vector<1x256xf32> -> vector<4x256xf32>
    %c56 = arith.constant 56 : index
    %c0_168 = arith.constant 0 : index
    %581 = vector.load %arg3[%c56, %c0_168] : memref<108x256xf32, #tpu.memory_space<vmem>>, vector<4x256xf32>
    tpu.vector_store %arg3[%c56, %c0_168], %580 {strides = array<i32>} : memref<108x256xf32, #tpu.memory_space<vmem>>, vector<4x256xf32>,
    %cst_169 = arith.constant 0.000000e+00 : f32
    %582 = vector.broadcast %cst_169 : f32 to vector<1x256xf32>
    %583 = arith.subf %575, %582 : vector<1x256xf32>
    %cst_170 = arith.constant 5.000000e+00 : f32
    %584 = vector.broadcast %cst_170 : f32 to vector<1x256xf32>
    %585 = arith.mulf %583, %584 : vector<1x256xf32>
    %586 = math.floor %585 : vector<1x256xf32>
    %587 = arith.fptosi %586 : vector<1x256xf32> to vector<1x256xi32>
    %cst_171 = arith.constant 0.000000e+00 : f32
    %588 = vector.broadcast %cst_171 : f32 to vector<1x256xf32>
    %589 = arith.subf %577, %588 : vector<1x256xf32>
    %cst_172 = arith.constant 5.000000e+00 : f32
    %590 = vector.broadcast %cst_172 : f32 to vector<1x256xf32>
    %591 = arith.mulf %589, %590 : vector<1x256xf32>
    %592 = math.floor %591 : vector<1x256xf32>
    %593 = arith.fptosi %592 : vector<1x256xf32> to vector<1x256xi32>
    %cst_173 = arith.constant 0.000000e+00 : f32
    %594 = vector.broadcast %cst_173 : f32 to vector<1x256xf32>
    %595 = arith.subf %579, %594 : vector<1x256xf32>
    %cst_174 = arith.constant 5.000000e+00 : f32
    %596 = vector.broadcast %cst_174 : f32 to vector<1x256xf32>
    %597 = arith.mulf %595, %596 : vector<1x256xf32>
    %598 = math.floor %597 : vector<1x256xf32>
    %599 = arith.fptosi %598 : vector<1x256xf32> to vector<1x256xi32>
    %600 = vector.broadcast %0 : i32 to vector<1x256xi32>
    %601 = arith.subi %587, %600 : vector<1x256xi32>
    %602 = vector.broadcast %3 : i32 to vector<1x256xi32>
    %603 = arith.muli %601, %602 : vector<1x256xi32>
    %604 = arith.addi %13, %603 : vector<1x256xi32>
    %605 = vector.broadcast %1 : i32 to vector<1x256xi32>
    %606 = arith.subi %593, %605 : vector<1x256xi32>
    %607 = vector.broadcast %4 : i32 to vector<1x256xi32>
    %608 = arith.muli %606, %607 : vector<1x256xi32>
    %609 = arith.addi %604, %608 : vector<1x256xi32>
    %610 = vector.broadcast %2 : i32 to vector<1x256xi32>
    %611 = arith.subi %599, %610 : vector<1x256xi32>
    %612 = arith.addi %609, %611 : vector<1x256xi32>
    %c14 = arith.constant 14 : index
    %c0_175 = arith.constant 0 : index
    %613 = vector.load %arg4[%c14, %c0_175] : memref<27x256xi32, #tpu.memory_space<vmem>>, vector<1x256xi32>
    tpu.vector_store %arg4[%c14, %c0_175], %612 {strides = array<i32>} : memref<27x256xi32, #tpu.memory_space<vmem>>, vector<1x256xi32>,
    %cst_176 = arith.constant 0.000000e+00 : f32
    %614 = vector.broadcast %cst_176 : f32 to vector<1x256xf32>
    %615 = arith.addf %8, %614 : vector<1x256xf32>
    %cst_177 = arith.constant 2.000000e-01 : f32
    %616 = vector.broadcast %cst_177 : f32 to vector<1x256xf32>
    %617 = arith.addf %9, %616 : vector<1x256xf32>
    %cst_178 = arith.constant -2.000000e-01 : f32
    %618 = vector.broadcast %cst_178 : f32 to vector<1x256xf32>
    %619 = arith.addf %10, %618 : vector<1x256xf32>
    %620 = tpu.concatenate %7, %615, %617, %619 in 0 : vector<1x256xf32>, vector<1x256xf32>, vector<1x256xf32>, vector<1x256xf32> -> vector<4x256xf32>
    %c60 = arith.constant 60 : index
    %c0_179 = arith.constant 0 : index
    %621 = vector.load %arg3[%c60, %c0_179] : memref<108x256xf32, #tpu.memory_space<vmem>>, vector<4x256xf32>
    tpu.vector_store %arg3[%c60, %c0_179], %620 {strides = array<i32>} : memref<108x256xf32, #tpu.memory_space<vmem>>, vector<4x256xf32>,
    %cst_180 = arith.constant 0.000000e+00 : f32
    %622 = vector.broadcast %cst_180 : f32 to vector<1x256xf32>
    %623 = arith.subf %615, %622 : vector<1x256xf32>
    %cst_181 = arith.constant 5.000000e+00 : f32
    %624 = vector.broadcast %cst_181 : f32 to vector<1x256xf32>
    %625 = arith.mulf %623, %624 : vector<1x256xf32>
    %626 = math.floor %625 : vector<1x256xf32>
    %627 = arith.fptosi %626 : vector<1x256xf32> to vector<1x256xi32>
    %cst_182 = arith.constant 0.000000e+00 : f32
    %628 = vector.broadcast %cst_182 : f32 to vector<1x256xf32>
    %629 = arith.subf %617, %628 : vector<1x256xf32>
    %cst_183 = arith.constant 5.000000e+00 : f32
    %630 = vector.broadcast %cst_183 : f32 to vector<1x256xf32>
    %631 = arith.mulf %629, %630 : vector<1x256xf32>
    %632 = math.floor %631 : vector<1x256xf32>
    %633 = arith.fptosi %632 : vector<1x256xf32> to vector<1x256xi32>
    %cst_184 = arith.constant 0.000000e+00 : f32
    %634 = vector.broadcast %cst_184 : f32 to vector<1x256xf32>
    %635 = arith.subf %619, %634 : vector<1x256xf32>
    %cst_185 = arith.constant 5.000000e+00 : f32
    %636 = vector.broadcast %cst_185 : f32 to vector<1x256xf32>
    %637 = arith.mulf %635, %636 : vector<1x256xf32>
    %638 = math.floor %637 : vector<1x256xf32>
    %639 = arith.fptosi %638 : vector<1x256xf32> to vector<1x256xi32>
    %640 = vector.broadcast %0 : i32 to vector<1x256xi32>
    %641 = arith.subi %627, %640 : vector<1x256xi32>
    %642 = vector.broadcast %3 : i32 to vector<1x256xi32>
    %643 = arith.muli %641, %642 : vector<1x256xi32>
    %644 = arith.addi %13, %643 : vector<1x256xi32>
    %645 = vector.broadcast %1 : i32 to vector<1x256xi32>
    %646 = arith.subi %633, %645 : vector<1x256xi32>
    %647 = vector.broadcast %4 : i32 to vector<1x256xi32>
    %648 = arith.muli %646, %647 : vector<1x256xi32>
    %649 = arith.addi %644, %648 : vector<1x256xi32>
    %650 = vector.broadcast %2 : i32 to vector<1x256xi32>
    %651 = arith.subi %639, %650 : vector<1x256xi32>
    %652 = arith.addi %649, %651 : vector<1x256xi32>
    %c15 = arith.constant 15 : index
    %c0_186 = arith.constant 0 : index
    %653 = vector.load %arg4[%c15, %c0_186] : memref<27x256xi32, #tpu.memory_space<vmem>>, vector<1x256xi32>
    tpu.vector_store %arg4[%c15, %c0_186], %652 {strides = array<i32>} : memref<27x256xi32, #tpu.memory_space<vmem>>, vector<1x256xi32>,
    %cst_187 = arith.constant 0.000000e+00 : f32
    %654 = vector.broadcast %cst_187 : f32 to vector<1x256xf32>
    %655 = arith.addf %8, %654 : vector<1x256xf32>
    %cst_188 = arith.constant 2.000000e-01 : f32
    %656 = vector.broadcast %cst_188 : f32 to vector<1x256xf32>
    %657 = arith.addf %9, %656 : vector<1x256xf32>
    %cst_189 = arith.constant 0.000000e+00 : f32
    %658 = vector.broadcast %cst_189 : f32 to vector<1x256xf32>
    %659 = arith.addf %10, %658 : vector<1x256xf32>
    %660 = tpu.concatenate %7, %655, %657, %659 in 0 : vector<1x256xf32>, vector<1x256xf32>, vector<1x256xf32>, vector<1x256xf32> -> vector<4x256xf32>
    %c64 = arith.constant 64 : index
    %c0_190 = arith.constant 0 : index
    %661 = vector.load %arg3[%c64, %c0_190] : memref<108x256xf32, #tpu.memory_space<vmem>>, vector<4x256xf32>
    tpu.vector_store %arg3[%c64, %c0_190], %660 {strides = array<i32>} : memref<108x256xf32, #tpu.memory_space<vmem>>, vector<4x256xf32>,
    %cst_191 = arith.constant 0.000000e+00 : f32
    %662 = vector.broadcast %cst_191 : f32 to vector<1x256xf32>
    %663 = arith.subf %655, %662 : vector<1x256xf32>
    %cst_192 = arith.constant 5.000000e+00 : f32
    %664 = vector.broadcast %cst_192 : f32 to vector<1x256xf32>
    %665 = arith.mulf %663, %664 : vector<1x256xf32>
    %666 = math.floor %665 : vector<1x256xf32>
    %667 = arith.fptosi %666 : vector<1x256xf32> to vector<1x256xi32>
    %cst_193 = arith.constant 0.000000e+00 : f32
    %668 = vector.broadcast %cst_193 : f32 to vector<1x256xf32>
    %669 = arith.subf %657, %668 : vector<1x256xf32>
    %cst_194 = arith.constant 5.000000e+00 : f32
    %670 = vector.broadcast %cst_194 : f32 to vector<1x256xf32>
    %671 = arith.mulf %669, %670 : vector<1x256xf32>
    %672 = math.floor %671 : vector<1x256xf32>
    %673 = arith.fptosi %672 : vector<1x256xf32> to vector<1x256xi32>
    %cst_195 = arith.constant 0.000000e+00 : f32
    %674 = vector.broadcast %cst_195 : f32 to vector<1x256xf32>
    %675 = arith.subf %659, %674 : vector<1x256xf32>
    %cst_196 = arith.constant 5.000000e+00 : f32
    %676 = vector.broadcast %cst_196 : f32 to vector<1x256xf32>
    %677 = arith.mulf %675, %676 : vector<1x256xf32>
    %678 = math.floor %677 : vector<1x256xf32>
    %679 = arith.fptosi %678 : vector<1x256xf32> to vector<1x256xi32>
    %680 = vector.broadcast %0 : i32 to vector<1x256xi32>
    %681 = arith.subi %667, %680 : vector<1x256xi32>
    %682 = vector.broadcast %3 : i32 to vector<1x256xi32>
    %683 = arith.muli %681, %682 : vector<1x256xi32>
    %684 = arith.addi %13, %683 : vector<1x256xi32>
    %685 = vector.broadcast %1 : i32 to vector<1x256xi32>
    %686 = arith.subi %673, %685 : vector<1x256xi32>
    %687 = vector.broadcast %4 : i32 to vector<1x256xi32>
    %688 = arith.muli %686, %687 : vector<1x256xi32>
    %689 = arith.addi %684, %688 : vector<1x256xi32>
    %690 = vector.broadcast %2 : i32 to vector<1x256xi32>
    %691 = arith.subi %679, %690 : vector<1x256xi32>
    %692 = arith.addi %689, %691 : vector<1x256xi32>
    %c16_197 = arith.constant 16 : index
    %c0_198 = arith.constant 0 : index
    %693 = vector.load %arg4[%c16_197, %c0_198] : memref<27x256xi32, #tpu.memory_space<vmem>>, vector<1x256xi32>
    tpu.vector_store %arg4[%c16_197, %c0_198], %692 {strides = array<i32>} : memref<27x256xi32, #tpu.memory_space<vmem>>, vector<1x256xi32>,
    %cst_199 = arith.constant 0.000000e+00 : f32
    %694 = vector.broadcast %cst_199 : f32 to vector<1x256xf32>
    %695 = arith.addf %8, %694 : vector<1x256xf32>
    %cst_200 = arith.constant 2.000000e-01 : f32
    %696 = vector.broadcast %cst_200 : f32 to vector<1x256xf32>
    %697 = arith.addf %9, %696 : vector<1x256xf32>
    %cst_201 = arith.constant 2.000000e-01 : f32
    %698 = vector.broadcast %cst_201 : f32 to vector<1x256xf32>
    %699 = arith.addf %10, %698 : vector<1x256xf32>
    %700 = tpu.concatenate %7, %695, %697, %699 in 0 : vector<1x256xf32>, vector<1x256xf32>, vector<1x256xf32>, vector<1x256xf32> -> vector<4x256xf32>
    %c68 = arith.constant 68 : index
    %c0_202 = arith.constant 0 : index
    %701 = vector.load %arg3[%c68, %c0_202] : memref<108x256xf32, #tpu.memory_space<vmem>>, vector<4x256xf32>
    tpu.vector_store %arg3[%c68, %c0_202], %700 {strides = array<i32>} : memref<108x256xf32, #tpu.memory_space<vmem>>, vector<4x256xf32>,
    %cst_203 = arith.constant 0.000000e+00 : f32
    %702 = vector.broadcast %cst_203 : f32 to vector<1x256xf32>
    %703 = arith.subf %695, %702 : vector<1x256xf32>
    %cst_204 = arith.constant 5.000000e+00 : f32
    %704 = vector.broadcast %cst_204 : f32 to vector<1x256xf32>
    %705 = arith.mulf %703, %704 : vector<1x256xf32>
    %706 = math.floor %705 : vector<1x256xf32>
    %707 = arith.fptosi %706 : vector<1x256xf32> to vector<1x256xi32>
    %cst_205 = arith.constant 0.000000e+00 : f32
    %708 = vector.broadcast %cst_205 : f32 to vector<1x256xf32>
    %709 = arith.subf %697, %708 : vector<1x256xf32>
    %cst_206 = arith.constant 5.000000e+00 : f32
    %710 = vector.broadcast %cst_206 : f32 to vector<1x256xf32>
    %711 = arith.mulf %709, %710 : vector<1x256xf32>
    %712 = math.floor %711 : vector<1x256xf32>
    %713 = arith.fptosi %712 : vector<1x256xf32> to vector<1x256xi32>
    %cst_207 = arith.constant 0.000000e+00 : f32
    %714 = vector.broadcast %cst_207 : f32 to vector<1x256xf32>
    %715 = arith.subf %699, %714 : vector<1x256xf32>
    %cst_208 = arith.constant 5.000000e+00 : f32
    %716 = vector.broadcast %cst_208 : f32 to vector<1x256xf32>
    %717 = arith.mulf %715, %716 : vector<1x256xf32>
    %718 = math.floor %717 : vector<1x256xf32>
    %719 = arith.fptosi %718 : vector<1x256xf32> to vector<1x256xi32>
    %720 = vector.broadcast %0 : i32 to vector<1x256xi32>
    %721 = arith.subi %707, %720 : vector<1x256xi32>
    %722 = vector.broadcast %3 : i32 to vector<1x256xi32>
    %723 = arith.muli %721, %722 : vector<1x256xi32>
    %724 = arith.addi %13, %723 : vector<1x256xi32>
    %725 = vector.broadcast %1 : i32 to vector<1x256xi32>
    %726 = arith.subi %713, %725 : vector<1x256xi32>
    %727 = vector.broadcast %4 : i32 to vector<1x256xi32>
    %728 = arith.muli %726, %727 : vector<1x256xi32>
    %729 = arith.addi %724, %728 : vector<1x256xi32>
    %730 = vector.broadcast %2 : i32 to vector<1x256xi32>
    %731 = arith.subi %719, %730 : vector<1x256xi32>
    %732 = arith.addi %729, %731 : vector<1x256xi32>
    %c17 = arith.constant 17 : index
    %c0_209 = arith.constant 0 : index
    %733 = vector.load %arg4[%c17, %c0_209] : memref<27x256xi32, #tpu.memory_space<vmem>>, vector<1x256xi32>
    tpu.vector_store %arg4[%c17, %c0_209], %732 {strides = array<i32>} : memref<27x256xi32, #tpu.memory_space<vmem>>, vector<1x256xi32>,
    %cst_210 = arith.constant 2.000000e-01 : f32
    %734 = vector.broadcast %cst_210 : f32 to vector<1x256xf32>
    %735 = arith.addf %8, %734 : vector<1x256xf32>
    %cst_211 = arith.constant -2.000000e-01 : f32
    %736 = vector.broadcast %cst_211 : f32 to vector<1x256xf32>
    %737 = arith.addf %9, %736 : vector<1x256xf32>
    %cst_212 = arith.constant -2.000000e-01 : f32
    %738 = vector.broadcast %cst_212 : f32 to vector<1x256xf32>
    %739 = arith.addf %10, %738 : vector<1x256xf32>
    %740 = tpu.concatenate %7, %735, %737, %739 in 0 : vector<1x256xf32>, vector<1x256xf32>, vector<1x256xf32>, vector<1x256xf32> -> vector<4x256xf32>
    %c72 = arith.constant 72 : index
    %c0_213 = arith.constant 0 : index
    %741 = vector.load %arg3[%c72, %c0_213] : memref<108x256xf32, #tpu.memory_space<vmem>>, vector<4x256xf32>
    tpu.vector_store %arg3[%c72, %c0_213], %740 {strides = array<i32>} : memref<108x256xf32, #tpu.memory_space<vmem>>, vector<4x256xf32>,
    %cst_214 = arith.constant 0.000000e+00 : f32
    %742 = vector.broadcast %cst_214 : f32 to vector<1x256xf32>
    %743 = arith.subf %735, %742 : vector<1x256xf32>
    %cst_215 = arith.constant 5.000000e+00 : f32
    %744 = vector.broadcast %cst_215 : f32 to vector<1x256xf32>
    %745 = arith.mulf %743, %744 : vector<1x256xf32>
    %746 = math.floor %745 : vector<1x256xf32>
    %747 = arith.fptosi %746 : vector<1x256xf32> to vector<1x256xi32>
    %cst_216 = arith.constant 0.000000e+00 : f32
    %748 = vector.broadcast %cst_216 : f32 to vector<1x256xf32>
    %749 = arith.subf %737, %748 : vector<1x256xf32>
    %cst_217 = arith.constant 5.000000e+00 : f32
    %750 = vector.broadcast %cst_217 : f32 to vector<1x256xf32>
    %751 = arith.mulf %749, %750 : vector<1x256xf32>
    %752 = math.floor %751 : vector<1x256xf32>
    %753 = arith.fptosi %752 : vector<1x256xf32> to vector<1x256xi32>
    %cst_218 = arith.constant 0.000000e+00 : f32
    %754 = vector.broadcast %cst_218 : f32 to vector<1x256xf32>
    %755 = arith.subf %739, %754 : vector<1x256xf32>
    %cst_219 = arith.constant 5.000000e+00 : f32
    %756 = vector.broadcast %cst_219 : f32 to vector<1x256xf32>
    %757 = arith.mulf %755, %756 : vector<1x256xf32>
    %758 = math.floor %757 : vector<1x256xf32>
    %759 = arith.fptosi %758 : vector<1x256xf32> to vector<1x256xi32>
    %760 = vector.broadcast %0 : i32 to vector<1x256xi32>
    %761 = arith.subi %747, %760 : vector<1x256xi32>
    %762 = vector.broadcast %3 : i32 to vector<1x256xi32>
    %763 = arith.muli %761, %762 : vector<1x256xi32>
    %764 = arith.addi %13, %763 : vector<1x256xi32>
    %765 = vector.broadcast %1 : i32 to vector<1x256xi32>
    %766 = arith.subi %753, %765 : vector<1x256xi32>
    %767 = vector.broadcast %4 : i32 to vector<1x256xi32>
    %768 = arith.muli %766, %767 : vector<1x256xi32>
    %769 = arith.addi %764, %768 : vector<1x256xi32>
    %770 = vector.broadcast %2 : i32 to vector<1x256xi32>
    %771 = arith.subi %759, %770 : vector<1x256xi32>
    %772 = arith.addi %769, %771 : vector<1x256xi32>
    %c18 = arith.constant 18 : index
    %c0_220 = arith.constant 0 : index
    %773 = vector.load %arg4[%c18, %c0_220] : memref<27x256xi32, #tpu.memory_space<vmem>>, vector<1x256xi32>
    tpu.vector_store %arg4[%c18, %c0_220], %772 {strides = array<i32>} : memref<27x256xi32, #tpu.memory_space<vmem>>, vector<1x256xi32>,
    %cst_221 = arith.constant 2.000000e-01 : f32
    %774 = vector.broadcast %cst_221 : f32 to vector<1x256xf32>
    %775 = arith.addf %8, %774 : vector<1x256xf32>
    %cst_222 = arith.constant -2.000000e-01 : f32
    %776 = vector.broadcast %cst_222 : f32 to vector<1x256xf32>
    %777 = arith.addf %9, %776 : vector<1x256xf32>
    %cst_223 = arith.constant 0.000000e+00 : f32
    %778 = vector.broadcast %cst_223 : f32 to vector<1x256xf32>
    %779 = arith.addf %10, %778 : vector<1x256xf32>
    %780 = tpu.concatenate %7, %775, %777, %779 in 0 : vector<1x256xf32>, vector<1x256xf32>, vector<1x256xf32>, vector<1x256xf32> -> vector<4x256xf32>
    %c76 = arith.constant 76 : index
    %c0_224 = arith.constant 0 : index
    %781 = vector.load %arg3[%c76, %c0_224] : memref<108x256xf32, #tpu.memory_space<vmem>>, vector<4x256xf32>
    tpu.vector_store %arg3[%c76, %c0_224], %780 {strides = array<i32>} : memref<108x256xf32, #tpu.memory_space<vmem>>, vector<4x256xf32>,
    %cst_225 = arith.constant 0.000000e+00 : f32
    %782 = vector.broadcast %cst_225 : f32 to vector<1x256xf32>
    %783 = arith.subf %775, %782 : vector<1x256xf32>
    %cst_226 = arith.constant 5.000000e+00 : f32
    %784 = vector.broadcast %cst_226 : f32 to vector<1x256xf32>
    %785 = arith.mulf %783, %784 : vector<1x256xf32>
    %786 = math.floor %785 : vector<1x256xf32>
    %787 = arith.fptosi %786 : vector<1x256xf32> to vector<1x256xi32>
    %cst_227 = arith.constant 0.000000e+00 : f32
    %788 = vector.broadcast %cst_227 : f32 to vector<1x256xf32>
    %789 = arith.subf %777, %788 : vector<1x256xf32>
    %cst_228 = arith.constant 5.000000e+00 : f32
    %790 = vector.broadcast %cst_228 : f32 to vector<1x256xf32>
    %791 = arith.mulf %789, %790 : vector<1x256xf32>
    %792 = math.floor %791 : vector<1x256xf32>
    %793 = arith.fptosi %792 : vector<1x256xf32> to vector<1x256xi32>
    %cst_229 = arith.constant 0.000000e+00 : f32
    %794 = vector.broadcast %cst_229 : f32 to vector<1x256xf32>
    %795 = arith.subf %779, %794 : vector<1x256xf32>
    %cst_230 = arith.constant 5.000000e+00 : f32
    %796 = vector.broadcast %cst_230 : f32 to vector<1x256xf32>
    %797 = arith.mulf %795, %796 : vector<1x256xf32>
    %798 = math.floor %797 : vector<1x256xf32>
    %799 = arith.fptosi %798 : vector<1x256xf32> to vector<1x256xi32>
    %800 = vector.broadcast %0 : i32 to vector<1x256xi32>
    %801 = arith.subi %787, %800 : vector<1x256xi32>
    %802 = vector.broadcast %3 : i32 to vector<1x256xi32>
    %803 = arith.muli %801, %802 : vector<1x256xi32>
    %804 = arith.addi %13, %803 : vector<1x256xi32>
    %805 = vector.broadcast %1 : i32 to vector<1x256xi32>
    %806 = arith.subi %793, %805 : vector<1x256xi32>
    %807 = vector.broadcast %4 : i32 to vector<1x256xi32>
    %808 = arith.muli %806, %807 : vector<1x256xi32>
    %809 = arith.addi %804, %808 : vector<1x256xi32>
    %810 = vector.broadcast %2 : i32 to vector<1x256xi32>
    %811 = arith.subi %799, %810 : vector<1x256xi32>
    %812 = arith.addi %809, %811 : vector<1x256xi32>
    %c19 = arith.constant 19 : index
    %c0_231 = arith.constant 0 : index
    %813 = vector.load %arg4[%c19, %c0_231] : memref<27x256xi32, #tpu.memory_space<vmem>>, vector<1x256xi32>
    tpu.vector_store %arg4[%c19, %c0_231], %812 {strides = array<i32>} : memref<27x256xi32, #tpu.memory_space<vmem>>, vector<1x256xi32>,
    %cst_232 = arith.constant 2.000000e-01 : f32
    %814 = vector.broadcast %cst_232 : f32 to vector<1x256xf32>
    %815 = arith.addf %8, %814 : vector<1x256xf32>
    %cst_233 = arith.constant -2.000000e-01 : f32
    %816 = vector.broadcast %cst_233 : f32 to vector<1x256xf32>
    %817 = arith.addf %9, %816 : vector<1x256xf32>
    %cst_234 = arith.constant 2.000000e-01 : f32
    %818 = vector.broadcast %cst_234 : f32 to vector<1x256xf32>
    %819 = arith.addf %10, %818 : vector<1x256xf32>
    %820 = tpu.concatenate %7, %815, %817, %819 in 0 : vector<1x256xf32>, vector<1x256xf32>, vector<1x256xf32>, vector<1x256xf32> -> vector<4x256xf32>
    %c80 = arith.constant 80 : index
    %c0_235 = arith.constant 0 : index
    %821 = vector.load %arg3[%c80, %c0_235] : memref<108x256xf32, #tpu.memory_space<vmem>>, vector<4x256xf32>
    tpu.vector_store %arg3[%c80, %c0_235], %820 {strides = array<i32>} : memref<108x256xf32, #tpu.memory_space<vmem>>, vector<4x256xf32>,
    %cst_236 = arith.constant 0.000000e+00 : f32
    %822 = vector.broadcast %cst_236 : f32 to vector<1x256xf32>
    %823 = arith.subf %815, %822 : vector<1x256xf32>
    %cst_237 = arith.constant 5.000000e+00 : f32
    %824 = vector.broadcast %cst_237 : f32 to vector<1x256xf32>
    %825 = arith.mulf %823, %824 : vector<1x256xf32>
    %826 = math.floor %825 : vector<1x256xf32>
    %827 = arith.fptosi %826 : vector<1x256xf32> to vector<1x256xi32>
    %cst_238 = arith.constant 0.000000e+00 : f32
    %828 = vector.broadcast %cst_238 : f32 to vector<1x256xf32>
    %829 = arith.subf %817, %828 : vector<1x256xf32>
    %cst_239 = arith.constant 5.000000e+00 : f32
    %830 = vector.broadcast %cst_239 : f32 to vector<1x256xf32>
    %831 = arith.mulf %829, %830 : vector<1x256xf32>
    %832 = math.floor %831 : vector<1x256xf32>
    %833 = arith.fptosi %832 : vector<1x256xf32> to vector<1x256xi32>
    %cst_240 = arith.constant 0.000000e+00 : f32
    %834 = vector.broadcast %cst_240 : f32 to vector<1x256xf32>
    %835 = arith.subf %819, %834 : vector<1x256xf32>
    %cst_241 = arith.constant 5.000000e+00 : f32
    %836 = vector.broadcast %cst_241 : f32 to vector<1x256xf32>
    %837 = arith.mulf %835, %836 : vector<1x256xf32>
    %838 = math.floor %837 : vector<1x256xf32>
    %839 = arith.fptosi %838 : vector<1x256xf32> to vector<1x256xi32>
    %840 = vector.broadcast %0 : i32 to vector<1x256xi32>
    %841 = arith.subi %827, %840 : vector<1x256xi32>
    %842 = vector.broadcast %3 : i32 to vector<1x256xi32>
    %843 = arith.muli %841, %842 : vector<1x256xi32>
    %844 = arith.addi %13, %843 : vector<1x256xi32>
    %845 = vector.broadcast %1 : i32 to vector<1x256xi32>
    %846 = arith.subi %833, %845 : vector<1x256xi32>
    %847 = vector.broadcast %4 : i32 to vector<1x256xi32>
    %848 = arith.muli %846, %847 : vector<1x256xi32>
    %849 = arith.addi %844, %848 : vector<1x256xi32>
    %850 = vector.broadcast %2 : i32 to vector<1x256xi32>
    %851 = arith.subi %839, %850 : vector<1x256xi32>
    %852 = arith.addi %849, %851 : vector<1x256xi32>
    %c20_242 = arith.constant 20 : index
    %c0_243 = arith.constant 0 : index
    %853 = vector.load %arg4[%c20_242, %c0_243] : memref<27x256xi32, #tpu.memory_space<vmem>>, vector<1x256xi32>
    tpu.vector_store %arg4[%c20_242, %c0_243], %852 {strides = array<i32>} : memref<27x256xi32, #tpu.memory_space<vmem>>, vector<1x256xi32>,
    %cst_244 = arith.constant 2.000000e-01 : f32
    %854 = vector.broadcast %cst_244 : f32 to vector<1x256xf32>
    %855 = arith.addf %8, %854 : vector<1x256xf32>
    %cst_245 = arith.constant 0.000000e+00 : f32
    %856 = vector.broadcast %cst_245 : f32 to vector<1x256xf32>
    %857 = arith.addf %9, %856 : vector<1x256xf32>
    %cst_246 = arith.constant -2.000000e-01 : f32
    %858 = vector.broadcast %cst_246 : f32 to vector<1x256xf32>
    %859 = arith.addf %10, %858 : vector<1x256xf32>
    %860 = tpu.concatenate %7, %855, %857, %859 in 0 : vector<1x256xf32>, vector<1x256xf32>, vector<1x256xf32>, vector<1x256xf32> -> vector<4x256xf32>
    %c84 = arith.constant 84 : index
    %c0_247 = arith.constant 0 : index
    %861 = vector.load %arg3[%c84, %c0_247] : memref<108x256xf32, #tpu.memory_space<vmem>>, vector<4x256xf32>
    tpu.vector_store %arg3[%c84, %c0_247], %860 {strides = array<i32>} : memref<108x256xf32, #tpu.memory_space<vmem>>, vector<4x256xf32>,
    %cst_248 = arith.constant 0.000000e+00 : f32
    %862 = vector.broadcast %cst_248 : f32 to vector<1x256xf32>
    %863 = arith.subf %855, %862 : vector<1x256xf32>
    %cst_249 = arith.constant 5.000000e+00 : f32
    %864 = vector.broadcast %cst_249 : f32 to vector<1x256xf32>
    %865 = arith.mulf %863, %864 : vector<1x256xf32>
    %866 = math.floor %865 : vector<1x256xf32>
    %867 = arith.fptosi %866 : vector<1x256xf32> to vector<1x256xi32>
    %cst_250 = arith.constant 0.000000e+00 : f32
    %868 = vector.broadcast %cst_250 : f32 to vector<1x256xf32>
    %869 = arith.subf %857, %868 : vector<1x256xf32>
    %cst_251 = arith.constant 5.000000e+00 : f32
    %870 = vector.broadcast %cst_251 : f32 to vector<1x256xf32>
    %871 = arith.mulf %869, %870 : vector<1x256xf32>
    %872 = math.floor %871 : vector<1x256xf32>
    %873 = arith.fptosi %872 : vector<1x256xf32> to vector<1x256xi32>
    %cst_252 = arith.constant 0.000000e+00 : f32
    %874 = vector.broadcast %cst_252 : f32 to vector<1x256xf32>
    %875 = arith.subf %859, %874 : vector<1x256xf32>
    %cst_253 = arith.constant 5.000000e+00 : f32
    %876 = vector.broadcast %cst_253 : f32 to vector<1x256xf32>
    %877 = arith.mulf %875, %876 : vector<1x256xf32>
    %878 = math.floor %877 : vector<1x256xf32>
    %879 = arith.fptosi %878 : vector<1x256xf32> to vector<1x256xi32>
    %880 = vector.broadcast %0 : i32 to vector<1x256xi32>
    %881 = arith.subi %867, %880 : vector<1x256xi32>
    %882 = vector.broadcast %3 : i32 to vector<1x256xi32>
    %883 = arith.muli %881, %882 : vector<1x256xi32>
    %884 = arith.addi %13, %883 : vector<1x256xi32>
    %885 = vector.broadcast %1 : i32 to vector<1x256xi32>
    %886 = arith.subi %873, %885 : vector<1x256xi32>
    %887 = vector.broadcast %4 : i32 to vector<1x256xi32>
    %888 = arith.muli %886, %887 : vector<1x256xi32>
    %889 = arith.addi %884, %888 : vector<1x256xi32>
    %890 = vector.broadcast %2 : i32 to vector<1x256xi32>
    %891 = arith.subi %879, %890 : vector<1x256xi32>
    %892 = arith.addi %889, %891 : vector<1x256xi32>
    %c21 = arith.constant 21 : index
    %c0_254 = arith.constant 0 : index
    %893 = vector.load %arg4[%c21, %c0_254] : memref<27x256xi32, #tpu.memory_space<vmem>>, vector<1x256xi32>
    tpu.vector_store %arg4[%c21, %c0_254], %892 {strides = array<i32>} : memref<27x256xi32, #tpu.memory_space<vmem>>, vector<1x256xi32>,
    %cst_255 = arith.constant 2.000000e-01 : f32
    %894 = vector.broadcast %cst_255 : f32 to vector<1x256xf32>
    %895 = arith.addf %8, %894 : vector<1x256xf32>
    %cst_256 = arith.constant 0.000000e+00 : f32
    %896 = vector.broadcast %cst_256 : f32 to vector<1x256xf32>
    %897 = arith.addf %9, %896 : vector<1x256xf32>
    %cst_257 = arith.constant 0.000000e+00 : f32
    %898 = vector.broadcast %cst_257 : f32 to vector<1x256xf32>
    %899 = arith.addf %10, %898 : vector<1x256xf32>
    %900 = tpu.concatenate %7, %895, %897, %899 in 0 : vector<1x256xf32>, vector<1x256xf32>, vector<1x256xf32>, vector<1x256xf32> -> vector<4x256xf32>
    %c88 = arith.constant 88 : index
    %c0_258 = arith.constant 0 : index
    %901 = vector.load %arg3[%c88, %c0_258] : memref<108x256xf32, #tpu.memory_space<vmem>>, vector<4x256xf32>
    tpu.vector_store %arg3[%c88, %c0_258], %900 {strides = array<i32>} : memref<108x256xf32, #tpu.memory_space<vmem>>, vector<4x256xf32>,
    %cst_259 = arith.constant 0.000000e+00 : f32
    %902 = vector.broadcast %cst_259 : f32 to vector<1x256xf32>
    %903 = arith.subf %895, %902 : vector<1x256xf32>
    %cst_260 = arith.constant 5.000000e+00 : f32
    %904 = vector.broadcast %cst_260 : f32 to vector<1x256xf32>
    %905 = arith.mulf %903, %904 : vector<1x256xf32>
    %906 = math.floor %905 : vector<1x256xf32>
    %907 = arith.fptosi %906 : vector<1x256xf32> to vector<1x256xi32>
    %cst_261 = arith.constant 0.000000e+00 : f32
    %908 = vector.broadcast %cst_261 : f32 to vector<1x256xf32>
    %909 = arith.subf %897, %908 : vector<1x256xf32>
    %cst_262 = arith.constant 5.000000e+00 : f32
    %910 = vector.broadcast %cst_262 : f32 to vector<1x256xf32>
    %911 = arith.mulf %909, %910 : vector<1x256xf32>
    %912 = math.floor %911 : vector<1x256xf32>
    %913 = arith.fptosi %912 : vector<1x256xf32> to vector<1x256xi32>
    %cst_263 = arith.constant 0.000000e+00 : f32
    %914 = vector.broadcast %cst_263 : f32 to vector<1x256xf32>
    %915 = arith.subf %899, %914 : vector<1x256xf32>
    %cst_264 = arith.constant 5.000000e+00 : f32
    %916 = vector.broadcast %cst_264 : f32 to vector<1x256xf32>
    %917 = arith.mulf %915, %916 : vector<1x256xf32>
    %918 = math.floor %917 : vector<1x256xf32>
    %919 = arith.fptosi %918 : vector<1x256xf32> to vector<1x256xi32>
    %920 = vector.broadcast %0 : i32 to vector<1x256xi32>
    %921 = arith.subi %907, %920 : vector<1x256xi32>
    %922 = vector.broadcast %3 : i32 to vector<1x256xi32>
    %923 = arith.muli %921, %922 : vector<1x256xi32>
    %924 = arith.addi %13, %923 : vector<1x256xi32>
    %925 = vector.broadcast %1 : i32 to vector<1x256xi32>
    %926 = arith.subi %913, %925 : vector<1x256xi32>
    %927 = vector.broadcast %4 : i32 to vector<1x256xi32>
    %928 = arith.muli %926, %927 : vector<1x256xi32>
    %929 = arith.addi %924, %928 : vector<1x256xi32>
    %930 = vector.broadcast %2 : i32 to vector<1x256xi32>
    %931 = arith.subi %919, %930 : vector<1x256xi32>
    %932 = arith.addi %929, %931 : vector<1x256xi32>
    %c22 = arith.constant 22 : index
    %c0_265 = arith.constant 0 : index
    %933 = vector.load %arg4[%c22, %c0_265] : memref<27x256xi32, #tpu.memory_space<vmem>>, vector<1x256xi32>
    tpu.vector_store %arg4[%c22, %c0_265], %932 {strides = array<i32>} : memref<27x256xi32, #tpu.memory_space<vmem>>, vector<1x256xi32>,
    %cst_266 = arith.constant 2.000000e-01 : f32
    %934 = vector.broadcast %cst_266 : f32 to vector<1x256xf32>
    %935 = arith.addf %8, %934 : vector<1x256xf32>
    %cst_267 = arith.constant 0.000000e+00 : f32
    %936 = vector.broadcast %cst_267 : f32 to vector<1x256xf32>
    %937 = arith.addf %9, %936 : vector<1x256xf32>
    %cst_268 = arith.constant 2.000000e-01 : f32
    %938 = vector.broadcast %cst_268 : f32 to vector<1x256xf32>
    %939 = arith.addf %10, %938 : vector<1x256xf32>
    %940 = tpu.concatenate %7, %935, %937, %939 in 0 : vector<1x256xf32>, vector<1x256xf32>, vector<1x256xf32>, vector<1x256xf32> -> vector<4x256xf32>
    %c92 = arith.constant 92 : index
    %c0_269 = arith.constant 0 : index
    %941 = vector.load %arg3[%c92, %c0_269] : memref<108x256xf32, #tpu.memory_space<vmem>>, vector<4x256xf32>
    tpu.vector_store %arg3[%c92, %c0_269], %940 {strides = array<i32>} : memref<108x256xf32, #tpu.memory_space<vmem>>, vector<4x256xf32>,
    %cst_270 = arith.constant 0.000000e+00 : f32
    %942 = vector.broadcast %cst_270 : f32 to vector<1x256xf32>
    %943 = arith.subf %935, %942 : vector<1x256xf32>
    %cst_271 = arith.constant 5.000000e+00 : f32
    %944 = vector.broadcast %cst_271 : f32 to vector<1x256xf32>
    %945 = arith.mulf %943, %944 : vector<1x256xf32>
    %946 = math.floor %945 : vector<1x256xf32>
    %947 = arith.fptosi %946 : vector<1x256xf32> to vector<1x256xi32>
    %cst_272 = arith.constant 0.000000e+00 : f32
    %948 = vector.broadcast %cst_272 : f32 to vector<1x256xf32>
    %949 = arith.subf %937, %948 : vector<1x256xf32>
    %cst_273 = arith.constant 5.000000e+00 : f32
    %950 = vector.broadcast %cst_273 : f32 to vector<1x256xf32>
    %951 = arith.mulf %949, %950 : vector<1x256xf32>
    %952 = math.floor %951 : vector<1x256xf32>
    %953 = arith.fptosi %952 : vector<1x256xf32> to vector<1x256xi32>
    %cst_274 = arith.constant 0.000000e+00 : f32
    %954 = vector.broadcast %cst_274 : f32 to vector<1x256xf32>
    %955 = arith.subf %939, %954 : vector<1x256xf32>
    %cst_275 = arith.constant 5.000000e+00 : f32
    %956 = vector.broadcast %cst_275 : f32 to vector<1x256xf32>
    %957 = arith.mulf %955, %956 : vector<1x256xf32>
    %958 = math.floor %957 : vector<1x256xf32>
    %959 = arith.fptosi %958 : vector<1x256xf32> to vector<1x256xi32>
    %960 = vector.broadcast %0 : i32 to vector<1x256xi32>
    %961 = arith.subi %947, %960 : vector<1x256xi32>
    %962 = vector.broadcast %3 : i32 to vector<1x256xi32>
    %963 = arith.muli %961, %962 : vector<1x256xi32>
    %964 = arith.addi %13, %963 : vector<1x256xi32>
    %965 = vector.broadcast %1 : i32 to vector<1x256xi32>
    %966 = arith.subi %953, %965 : vector<1x256xi32>
    %967 = vector.broadcast %4 : i32 to vector<1x256xi32>
    %968 = arith.muli %966, %967 : vector<1x256xi32>
    %969 = arith.addi %964, %968 : vector<1x256xi32>
    %970 = vector.broadcast %2 : i32 to vector<1x256xi32>
    %971 = arith.subi %959, %970 : vector<1x256xi32>
    %972 = arith.addi %969, %971 : vector<1x256xi32>
    %c23 = arith.constant 23 : index
    %c0_276 = arith.constant 0 : index
    %973 = vector.load %arg4[%c23, %c0_276] : memref<27x256xi32, #tpu.memory_space<vmem>>, vector<1x256xi32>
    tpu.vector_store %arg4[%c23, %c0_276], %972 {strides = array<i32>} : memref<27x256xi32, #tpu.memory_space<vmem>>, vector<1x256xi32>,
    %cst_277 = arith.constant 2.000000e-01 : f32
    %974 = vector.broadcast %cst_277 : f32 to vector<1x256xf32>
    %975 = arith.addf %8, %974 : vector<1x256xf32>
    %cst_278 = arith.constant 2.000000e-01 : f32
    %976 = vector.broadcast %cst_278 : f32 to vector<1x256xf32>
    %977 = arith.addf %9, %976 : vector<1x256xf32>
    %cst_279 = arith.constant -2.000000e-01 : f32
    %978 = vector.broadcast %cst_279 : f32 to vector<1x256xf32>
    %979 = arith.addf %10, %978 : vector<1x256xf32>
    %980 = tpu.concatenate %7, %975, %977, %979 in 0 : vector<1x256xf32>, vector<1x256xf32>, vector<1x256xf32>, vector<1x256xf32> -> vector<4x256xf32>
    %c96 = arith.constant 96 : index
    %c0_280 = arith.constant 0 : index
    %981 = vector.load %arg3[%c96, %c0_280] : memref<108x256xf32, #tpu.memory_space<vmem>>, vector<4x256xf32>
    tpu.vector_store %arg3[%c96, %c0_280], %980 {strides = array<i32>} : memref<108x256xf32, #tpu.memory_space<vmem>>, vector<4x256xf32>,
    %cst_281 = arith.constant 0.000000e+00 : f32
    %982 = vector.broadcast %cst_281 : f32 to vector<1x256xf32>
    %983 = arith.subf %975, %982 : vector<1x256xf32>
    %cst_282 = arith.constant 5.000000e+00 : f32
    %984 = vector.broadcast %cst_282 : f32 to vector<1x256xf32>
    %985 = arith.mulf %983, %984 : vector<1x256xf32>
    %986 = math.floor %985 : vector<1x256xf32>
    %987 = arith.fptosi %986 : vector<1x256xf32> to vector<1x256xi32>
    %cst_283 = arith.constant 0.000000e+00 : f32
    %988 = vector.broadcast %cst_283 : f32 to vector<1x256xf32>
    %989 = arith.subf %977, %988 : vector<1x256xf32>
    %cst_284 = arith.constant 5.000000e+00 : f32
    %990 = vector.broadcast %cst_284 : f32 to vector<1x256xf32>
    %991 = arith.mulf %989, %990 : vector<1x256xf32>
    %992 = math.floor %991 : vector<1x256xf32>
    %993 = arith.fptosi %992 : vector<1x256xf32> to vector<1x256xi32>
    %cst_285 = arith.constant 0.000000e+00 : f32
    %994 = vector.broadcast %cst_285 : f32 to vector<1x256xf32>
    %995 = arith.subf %979, %994 : vector<1x256xf32>
    %cst_286 = arith.constant 5.000000e+00 : f32
    %996 = vector.broadcast %cst_286 : f32 to vector<1x256xf32>
    %997 = arith.mulf %995, %996 : vector<1x256xf32>
    %998 = math.floor %997 : vector<1x256xf32>
    %999 = arith.fptosi %998 : vector<1x256xf32> to vector<1x256xi32>
    %1000 = vector.broadcast %0 : i32 to vector<1x256xi32>
    %1001 = arith.subi %987, %1000 : vector<1x256xi32>
    %1002 = vector.broadcast %3 : i32 to vector<1x256xi32>
    %1003 = arith.muli %1001, %1002 : vector<1x256xi32>
    %1004 = arith.addi %13, %1003 : vector<1x256xi32>
    %1005 = vector.broadcast %1 : i32 to vector<1x256xi32>
    %1006 = arith.subi %993, %1005 : vector<1x256xi32>
    %1007 = vector.broadcast %4 : i32 to vector<1x256xi32>
    %1008 = arith.muli %1006, %1007 : vector<1x256xi32>
    %1009 = arith.addi %1004, %1008 : vector<1x256xi32>
    %1010 = vector.broadcast %2 : i32 to vector<1x256xi32>
    %1011 = arith.subi %999, %1010 : vector<1x256xi32>
    %1012 = arith.addi %1009, %1011 : vector<1x256xi32>
    %c24_287 = arith.constant 24 : index
    %c0_288 = arith.constant 0 : index
    %1013 = vector.load %arg4[%c24_287, %c0_288] : memref<27x256xi32, #tpu.memory_space<vmem>>, vector<1x256xi32>
    tpu.vector_store %arg4[%c24_287, %c0_288], %1012 {strides = array<i32>} : memref<27x256xi32, #tpu.memory_space<vmem>>, vector<1x256xi32>,
    %cst_289 = arith.constant 2.000000e-01 : f32
    %1014 = vector.broadcast %cst_289 : f32 to vector<1x256xf32>
    %1015 = arith.addf %8, %1014 : vector<1x256xf32>
    %cst_290 = arith.constant 2.000000e-01 : f32
    %1016 = vector.broadcast %cst_290 : f32 to vector<1x256xf32>
    %1017 = arith.addf %9, %1016 : vector<1x256xf32>
    %cst_291 = arith.constant 0.000000e+00 : f32
    %1018 = vector.broadcast %cst_291 : f32 to vector<1x256xf32>
    %1019 = arith.addf %10, %1018 : vector<1x256xf32>
    %1020 = tpu.concatenate %7, %1015, %1017, %1019 in 0 : vector<1x256xf32>, vector<1x256xf32>, vector<1x256xf32>, vector<1x256xf32> -> vector<4x256xf32>
    %c100 = arith.constant 100 : index
    %c0_292 = arith.constant 0 : index
    %1021 = vector.load %arg3[%c100, %c0_292] : memref<108x256xf32, #tpu.memory_space<vmem>>, vector<4x256xf32>
    tpu.vector_store %arg3[%c100, %c0_292], %1020 {strides = array<i32>} : memref<108x256xf32, #tpu.memory_space<vmem>>, vector<4x256xf32>,
    %cst_293 = arith.constant 0.000000e+00 : f32
    %1022 = vector.broadcast %cst_293 : f32 to vector<1x256xf32>
    %1023 = arith.subf %1015, %1022 : vector<1x256xf32>
    %cst_294 = arith.constant 5.000000e+00 : f32
    %1024 = vector.broadcast %cst_294 : f32 to vector<1x256xf32>
    %1025 = arith.mulf %1023, %1024 : vector<1x256xf32>
    %1026 = math.floor %1025 : vector<1x256xf32>
    %1027 = arith.fptosi %1026 : vector<1x256xf32> to vector<1x256xi32>
    %cst_295 = arith.constant 0.000000e+00 : f32
    %1028 = vector.broadcast %cst_295 : f32 to vector<1x256xf32>
    %1029 = arith.subf %1017, %1028 : vector<1x256xf32>
    %cst_296 = arith.constant 5.000000e+00 : f32
    %1030 = vector.broadcast %cst_296 : f32 to vector<1x256xf32>
    %1031 = arith.mulf %1029, %1030 : vector<1x256xf32>
    %1032 = math.floor %1031 : vector<1x256xf32>
    %1033 = arith.fptosi %1032 : vector<1x256xf32> to vector<1x256xi32>
    %cst_297 = arith.constant 0.000000e+00 : f32
    %1034 = vector.broadcast %cst_297 : f32 to vector<1x256xf32>
    %1035 = arith.subf %1019, %1034 : vector<1x256xf32>
    %cst_298 = arith.constant 5.000000e+00 : f32
    %1036 = vector.broadcast %cst_298 : f32 to vector<1x256xf32>
    %1037 = arith.mulf %1035, %1036 : vector<1x256xf32>
    %1038 = math.floor %1037 : vector<1x256xf32>
    %1039 = arith.fptosi %1038 : vector<1x256xf32> to vector<1x256xi32>
    %1040 = vector.broadcast %0 : i32 to vector<1x256xi32>
    %1041 = arith.subi %1027, %1040 : vector<1x256xi32>
    %1042 = vector.broadcast %3 : i32 to vector<1x256xi32>
    %1043 = arith.muli %1041, %1042 : vector<1x256xi32>
    %1044 = arith.addi %13, %1043 : vector<1x256xi32>
    %1045 = vector.broadcast %1 : i32 to vector<1x256xi32>
    %1046 = arith.subi %1033, %1045 : vector<1x256xi32>
    %1047 = vector.broadcast %4 : i32 to vector<1x256xi32>
    %1048 = arith.muli %1046, %1047 : vector<1x256xi32>
    %1049 = arith.addi %1044, %1048 : vector<1x256xi32>
    %1050 = vector.broadcast %2 : i32 to vector<1x256xi32>
    %1051 = arith.subi %1039, %1050 : vector<1x256xi32>
    %1052 = arith.addi %1049, %1051 : vector<1x256xi32>
    %c25 = arith.constant 25 : index
    %c0_299 = arith.constant 0 : index
    %1053 = vector.load %arg4[%c25, %c0_299] : memref<27x256xi32, #tpu.memory_space<vmem>>, vector<1x256xi32>
    tpu.vector_store %arg4[%c25, %c0_299], %1052 {strides = array<i32>} : memref<27x256xi32, #tpu.memory_space<vmem>>, vector<1x256xi32>,
    %cst_300 = arith.constant 2.000000e-01 : f32
    %1054 = vector.broadcast %cst_300 : f32 to vector<1x256xf32>
    %1055 = arith.addf %8, %1054 : vector<1x256xf32>
    %cst_301 = arith.constant 2.000000e-01 : f32
    %1056 = vector.broadcast %cst_301 : f32 to vector<1x256xf32>
    %1057 = arith.addf %9, %1056 : vector<1x256xf32>
    %cst_302 = arith.constant 2.000000e-01 : f32
    %1058 = vector.broadcast %cst_302 : f32 to vector<1x256xf32>
    %1059 = arith.addf %10, %1058 : vector<1x256xf32>
    %1060 = tpu.concatenate %7, %1055, %1057, %1059 in 0 : vector<1x256xf32>, vector<1x256xf32>, vector<1x256xf32>, vector<1x256xf32> -> vector<4x256xf32>
    %c104 = arith.constant 104 : index
    %c0_303 = arith.constant 0 : index
    %1061 = vector.load %arg3[%c104, %c0_303] : memref<108x256xf32, #tpu.memory_space<vmem>>, vector<4x256xf32>
    tpu.vector_store %arg3[%c104, %c0_303], %1060 {strides = array<i32>} : memref<108x256xf32, #tpu.memory_space<vmem>>, vector<4x256xf32>,
    %cst_304 = arith.constant 0.000000e+00 : f32
    %1062 = vector.broadcast %cst_304 : f32 to vector<1x256xf32>
    %1063 = arith.subf %1055, %1062 : vector<1x256xf32>
    %cst_305 = arith.constant 5.000000e+00 : f32
    %1064 = vector.broadcast %cst_305 : f32 to vector<1x256xf32>
    %1065 = arith.mulf %1063, %1064 : vector<1x256xf32>
    %1066 = math.floor %1065 : vector<1x256xf32>
    %1067 = arith.fptosi %1066 : vector<1x256xf32> to vector<1x256xi32>
    %cst_306 = arith.constant 0.000000e+00 : f32
    %1068 = vector.broadcast %cst_306 : f32 to vector<1x256xf32>
    %1069 = arith.subf %1057, %1068 : vector<1x256xf32>
    %cst_307 = arith.constant 5.000000e+00 : f32
    %1070 = vector.broadcast %cst_307 : f32 to vector<1x256xf32>
    %1071 = arith.mulf %1069, %1070 : vector<1x256xf32>
    %1072 = math.floor %1071 : vector<1x256xf32>
    %1073 = arith.fptosi %1072 : vector<1x256xf32> to vector<1x256xi32>
    %cst_308 = arith.constant 0.000000e+00 : f32
    %1074 = vector.broadcast %cst_308 : f32 to vector<1x256xf32>
    %1075 = arith.subf %1059, %1074 : vector<1x256xf32>
    %cst_309 = arith.constant 5.000000e+00 : f32
    %1076 = vector.broadcast %cst_309 : f32 to vector<1x256xf32>
    %1077 = arith.mulf %1075, %1076 : vector<1x256xf32>
    %1078 = math.floor %1077 : vector<1x256xf32>
    %1079 = arith.fptosi %1078 : vector<1x256xf32> to vector<1x256xi32>
    %1080 = vector.broadcast %0 : i32 to vector<1x256xi32>
    %1081 = arith.subi %1067, %1080 : vector<1x256xi32>
    %1082 = vector.broadcast %3 : i32 to vector<1x256xi32>
    %1083 = arith.muli %1081, %1082 : vector<1x256xi32>
    %1084 = arith.addi %13, %1083 : vector<1x256xi32>
    %1085 = vector.broadcast %1 : i32 to vector<1x256xi32>
    %1086 = arith.subi %1073, %1085 : vector<1x256xi32>
    %1087 = vector.broadcast %4 : i32 to vector<1x256xi32>
    %1088 = arith.muli %1086, %1087 : vector<1x256xi32>
    %1089 = arith.addi %1084, %1088 : vector<1x256xi32>
    %1090 = vector.broadcast %2 : i32 to vector<1x256xi32>
    %1091 = arith.subi %1079, %1090 : vector<1x256xi32>
    %1092 = arith.addi %1089, %1091 : vector<1x256xi32>
    %c26 = arith.constant 26 : index
    %c0_310 = arith.constant 0 : index
    %1093 = vector.load %arg4[%c26, %c0_310] : memref<27x256xi32, #tpu.memory_space<vmem>>, vector<1x256xi32>
    tpu.vector_store %arg4[%c26, %c0_310], %1092 {strides = array<i32>} : memref<27x256xi32, #tpu.memory_space<vmem>>, vector<1x256xi32>,
    return
  }
  func.func @transform_0(%arg0: i32, %arg1: memref<8xi32, #tpu.memory_space<smem>>) -> (i32, i32) {
    %c0_i32 = arith.constant 0 : i32
    %c0_i32_0 = arith.constant 0 : i32
    return %c0_i32, %arg0 : i32, i32
  }
  func.func @transform_1(%arg0: i32, %arg1: memref<8xi32, #tpu.memory_space<smem>>) -> (i32, i32) {
    %c0_i32 = arith.constant 0 : i32
    %c0_i32_0 = arith.constant 0 : i32
    return %c0_i32, %arg0 : i32, i32
  }
  func.func @transform_2(%arg0: i32, %arg1: memref<8xi32, #tpu.memory_space<smem>>) -> (i32, i32) {
    %c0_i32 = arith.constant 0 : i32
    %c0_i32_0 = arith.constant 0 : i32
    return %c0_i32, %arg0 : i32, i32
  }
}

module attributes {stable_mosaic.version = 11 : i64} {
  func.func @_voxel_center_mask_kernel(%arg0: i32, %arg1: memref<4x4096xi32, #tpu.memory_space<vmem>>, %arg2: memref<5x4096xf32, #tpu.memory_space<vmem>>) attributes {dimension_semantics = [#tpu.dimension_semantics<parallel>], iteration_bounds = array<i64: 2>, scalar_prefetch = 0 : i64, scratch_operands = 0 : i64, tpu.core_type = #tpu.core_type<tc>, window_params = [{transform_indices = @transform_0, window_bounds = array<i64: 4, 4096>}, {transform_indices = @transform_1, window_bounds = array<i64: 5, 4096>}]} {
    %c0 = arith.constant 0 : index
    %c0_0 = arith.constant 0 : index
    %0 = vector.load %arg1[%c0, %c0_0] : memref<4x4096xi32, #tpu.memory_space<vmem>>, vector<4x4096xi32>
    %1 = arith.sitofp %0 : vector<4x4096xi32> to vector<4x4096xf32>
    %2 = vector.extract_strided_slice %1 {offsets = [0, 0], sizes = [1, 4096], strides = [1, 1]} : vector<4x4096xf32> to vector<1x4096xf32>
    %3 = vector.extract_strided_slice %1 {offsets = [1, 0], sizes = [1, 4096], strides = [1, 1]} : vector<4x4096xf32> to vector<1x4096xf32>
    %4 = vector.extract_strided_slice %1 {offsets = [2, 0], sizes = [1, 4096], strides = [1, 1]} : vector<4x4096xf32> to vector<1x4096xf32>
    %5 = vector.extract_strided_slice %1 {offsets = [3, 0], sizes = [1, 4096], strides = [1, 1]} : vector<4x4096xf32> to vector<1x4096xf32>
    %cst = arith.constant 5.000000e-01 : f32
    %6 = vector.broadcast %cst : f32 to vector<1x4096xf32>
    %7 = arith.addf %3, %6 : vector<1x4096xf32>
    %cst_1 = arith.constant 2.000000e-01 : f32
    %8 = vector.broadcast %cst_1 : f32 to vector<1x4096xf32>
    %9 = arith.mulf %7, %8 : vector<1x4096xf32>
    %cst_2 = arith.constant 0.000000e+00 : f32
    %10 = vector.broadcast %cst_2 : f32 to vector<1x4096xf32>
    %11 = arith.addf %9, %10 : vector<1x4096xf32>
    %cst_3 = arith.constant 5.000000e-01 : f32
    %12 = vector.broadcast %cst_3 : f32 to vector<1x4096xf32>
    %13 = arith.addf %4, %12 : vector<1x4096xf32>
    %cst_4 = arith.constant 2.000000e-01 : f32
    %14 = vector.broadcast %cst_4 : f32 to vector<1x4096xf32>
    %15 = arith.mulf %13, %14 : vector<1x4096xf32>
    %cst_5 = arith.constant 0.000000e+00 : f32
    %16 = vector.broadcast %cst_5 : f32 to vector<1x4096xf32>
    %17 = arith.addf %15, %16 : vector<1x4096xf32>
    %cst_6 = arith.constant 5.000000e-01 : f32
    %18 = vector.broadcast %cst_6 : f32 to vector<1x4096xf32>
    %19 = arith.addf %5, %18 : vector<1x4096xf32>
    %cst_7 = arith.constant 2.000000e-01 : f32
    %20 = vector.broadcast %cst_7 : f32 to vector<1x4096xf32>
    %21 = arith.mulf %19, %20 : vector<1x4096xf32>
    %cst_8 = arith.constant 0.000000e+00 : f32
    %22 = vector.broadcast %cst_8 : f32 to vector<1x4096xf32>
    %23 = arith.addf %21, %22 : vector<1x4096xf32>
    %cst_9 = arith.constant 5.000000e-01 : f32
    %24 = vector.broadcast %cst_9 : f32 to vector<1x4096xf32>
    %25 = arith.mulf %5, %24 : vector<1x4096xf32>
    %26 = math.floor %25 : vector<1x4096xf32>
    %cst_10 = arith.constant 2.000000e+00 : f32
    %27 = vector.broadcast %cst_10 : f32 to vector<1x4096xf32>
    %28 = arith.mulf %26, %27 : vector<1x4096xf32>
    %29 = arith.subf %5, %28 : vector<1x4096xf32>
    %cst_11 = arith.constant 1.000000e+00 : f32
    %30 = vector.broadcast %cst_11 : f32 to vector<1x4096xf32>
    %31 = arith.cmpf oeq, %29, %30 : vector<1x4096xf32>
    %cst_12 = arith.constant 5.000000e-01 : f32
    %32 = vector.broadcast %cst_12 : f32 to vector<1x4096xf32>
    %33 = arith.mulf %3, %32 : vector<1x4096xf32>
    %34 = math.floor %33 : vector<1x4096xf32>
    %cst_13 = arith.constant 2.000000e+00 : f32
    %35 = vector.broadcast %cst_13 : f32 to vector<1x4096xf32>
    %36 = arith.mulf %34, %35 : vector<1x4096xf32>
    %37 = arith.subf %3, %36 : vector<1x4096xf32>
    %cst_14 = arith.constant 0.000000e+00 : f32
    %38 = vector.broadcast %cst_14 : f32 to vector<1x4096xf32>
    %39 = arith.cmpf oeq, %37, %38 : vector<1x4096xf32>
    %40 = arith.andi %31, %39 : vector<1x4096xi1>
    %cst_15 = arith.constant 5.000000e-01 : f32
    %41 = vector.broadcast %cst_15 : f32 to vector<1x4096xf32>
    %42 = arith.mulf %4, %41 : vector<1x4096xf32>
    %43 = math.floor %42 : vector<1x4096xf32>
    %cst_16 = arith.constant 2.000000e+00 : f32
    %44 = vector.broadcast %cst_16 : f32 to vector<1x4096xf32>
    %45 = arith.mulf %43, %44 : vector<1x4096xf32>
    %46 = arith.subf %4, %45 : vector<1x4096xf32>
    %cst_17 = arith.constant 0.000000e+00 : f32
    %47 = vector.broadcast %cst_17 : f32 to vector<1x4096xf32>
    %48 = arith.cmpf oeq, %46, %47 : vector<1x4096xf32>
    %49 = arith.andi %40, %48 : vector<1x4096xi1>
    %50 = arith.extui %49 : vector<1x4096xi1> to vector<1x4096xi32>
    %51 = arith.sitofp %50 : vector<1x4096xi32> to vector<1x4096xf32>
    %52 = tpu.concatenate %2, %11, %17, %23, %51 in 0 : vector<1x4096xf32>, vector<1x4096xf32>, vector<1x4096xf32>, vector<1x4096xf32>, vector<1x4096xf32> -> vector<5x4096xf32>
    %c0_18 = arith.constant 0 : index
    %c0_19 = arith.constant 0 : index
    %53 = vector.load %arg2[%c0_18, %c0_19] : memref<5x4096xf32, #tpu.memory_space<vmem>>, vector<5x4096xf32>
    tpu.vector_store %arg2[%c0_18, %c0_19], %52 {strides = array<i32>} : memref<5x4096xf32, #tpu.memory_space<vmem>>, vector<5x4096xf32>,
    return
  }
  func.func @transform_0(%arg0: i32) -> (i32, i32) {
    %c0_i32 = arith.constant 0 : i32
    %c0_i32_0 = arith.constant 0 : i32
    return %c0_i32, %arg0 : i32, i32
  }
  func.func @transform_1(%arg0: i32) -> (i32, i32) {
    %c0_i32 = arith.constant 0 : i32
    %c0_i32_0 = arith.constant 0 : i32
    return %c0_i32, %arg0 : i32, i32
  }
}

</mosaic_0001>

<llo_original>
// kernel: voxel_center_sampler.2
$region0: #{voxel_center_sampler.2}
  #allocation0 [shape = 'u32[]', space=smem, size = 0x4, offset = 0x4, fixed_abs, tag = 'smem constant byte address 0x4 - core index']
  #allocation1 [shape = 'u32[144,128]{1,0:T(1,128)}', space=vmem, size = 0x12000, scoped, tag = 'internal scratch']
  #allocation2 [shape = 's32[1]{0}', space=sflag, size = 0x4, scoped, tag = 'scoped memory for voxel_center_sampler.2']
  #allocation3 [shape = 'u8[512]{0}', space=smem, size = 0x200, scoped, tag = 'prefetched SMEM operand 0']
  %s0 = inlined_call_operand.vmem [shape: s32[8], index: 0, kind: input, shape index: {}]
  %s1 = inlined_call_operand.vmem [shape: f32[4,256], index: 1, kind: input, shape index: {}]
  %s2 = inlined_call_operand.vmem [shape: f32[108,256], index: 2, kind: output, shape index: {0}]
  %s3 = inlined_call_operand.vmem [shape: s32[27,256], index: 3, kind: output, shape index: {1}]
  %4 = xla_tuple %s2, %s3
  %s5 = sld [smem:[#allocation0]]
  $region22: #{voxel_center_sampler.2} parent=0
    _
  %s7 = ssub.s32 1, %s5
  %s8 = scalar_select 0, %s7, %s5
  %s9 = sshll.u32 %s0, 4
  %s10 = int_to_ptr.vmem [resolvable:$true] %s9
  %12 = dma.vmem_to_smem %s10, 16, [#allocation3], [#allocation2]
  %13 = dma.done [#allocation2], 16
  %14 = sfence
  // Predicated region
  $region2: #{voxel_center_sampler.2} parent=0 // pred_check
    _
  $region3: #{voxel_center_sampler.2} parent=0 // pred_check_branch
    %16 = sbr.rel (0) target = $region5
  $region4: #{voxel_center_sampler.2} parent=0 // pred_region
    _
  $region5: #{voxel_center_sampler.2} parent=0 // pred_fallthru
    _
  %s17 = sld [smem:[#allocation3]]
  %s18 = sld [smem:[#allocation3 + $0x1]]
  %s19 = sld [smem:[#allocation3 + $0x2]]
  %s20 = sld [smem:[#allocation3 + $0x3]]
  %s21 = sld [smem:[#allocation3 + $0x4]]
  %s22 = sld [smem:[#allocation3 + $0x5]]
  %v23 = vld [vmem:[%s1] sm:$0xff]
  %v24 = vcvt.f32.s32.to.zero.pseudo %v23
  %v25 = vstv %s22
  %v26 = vmul.u32 %v24, %v25
  %v27 = vadd.f32 %v23, -0.2
  %v29 = vlaneseq
  %v30 = vshrl.u32 %v29, 7
  %v31 = vsub.s32 0, %v30
  %v32 = vrot.slane %v23, %v31
  %v33 = vlaneseq
  %v34 = vshrl.u32 %v33, 7
  %v35 = vsub.s32 4, %v34
  %v36 = vrot.slane %v23, %v35
  %v40 = vlaneseq
  %v41 = vshrl.u32 %v40, 7
  %v42 = vsub.s32 1, %v41
  %v43 = vrot.slane %v27, %v42
  %v44 = vlaneseq
  %v45 = vshrl.u32 %v44, 7
  %v46 = vsub.s32 5, %v45
  %v47 = vrot.slane %v27, %v46
  %v50 = vlaneseq
  %v51 = vshrl.u32 %v50, 7
  %v52 = vsub.s32 2, %v51
  %v53 = vrot.slane %v27, %v52
  %v54 = vlaneseq
  %v55 = vshrl.u32 %v54, 7
  %v56 = vsub.s32 6, %v55
  %v57 = vrot.slane %v27, %v56
  %v60 = vlaneseq
  %v61 = vshrl.u32 %v60, 7
  %v62 = vsub.s32 3, %v61
  %v63 = vrot.slane %v27, %v62
  %v64 = vlaneseq
  %v65 = vshrl.u32 %v64, 7
  %v66 = vsub.s32 7, %v65
  %v67 = vrot.slane %v27, %v66
  %vm70 = vcmask 1040384
  %v71 = vsel %vm70, %v32, %v43
  %v72 = vsel %vm70, %v36, %v47
  %vm73 = vcmask 1041408
  %v74 = vsel %vm73, %v71, %v53
  %v75 = vsel %vm73, %v72, %v57
  %vm76 = vcmask 1042432
  %v77 = vsel %vm76, %v74, %v63
  %v78 = vsel %vm76, %v75, %v67
  %79 = vst [vmem:[%s2] sm:$0xf] %v77
  %80 = vst [vmem:[%s2 + $0x8] sm:$0xf] %v78
  %v81 = vmul.f32 %v27, 5.0
  %v82 = vfloor.f32 %v81
  %v83 = vcvt.f32.s32.to.zero.pseudo %v82
  %v84 = vstv %s17
  %v85 = vsub.s32 %v83, %v84
  %v86 = vstv %s20
  %v87 = vmul.u32 %v85, %v86
  %v88 = vrot.slane %v87, 5
  %v89 = vrot.slane %v88, 4
  %v90 = vadd.s32 %v26, %v89
  %v91 = vstv %s18
  %v92 = vsub.s32 %v83, %v91
  %v93 = vstv %s21
  %v94 = vmul.u32 %v92, %v93
  %v95 = vrot.slane %v94, 6
  %v96 = vrot.slane %v95, 4
  %v97 = vadd.s32 %v90, %v96
  %v98 = vstv %s19
  %v99 = vsub.s32 %v83, %v98
  %v100 = vrot.slane %v99, 7
  %v101 = vrot.slane %v100, 4
  %v102 = vadd.s32 %v97, %v101
  %v104 = vunpack.c.l.s4 1966171168
  %v105 = vunpack.c.0.s8 %v104
  %v106 = vlaneseq
  %v107 = vshrl.u32 %v106, 7
  %v108 = vsub.s32 %v105, %v107
  %v109 = vrot.slane %v102, %v108
  %v111 = vunpack.c.l.s4 1966171168
  %v112 = vunpack.c.0.s8 %v111
  %v113 = vlaneseq
  %v114 = vshrl.u32 %v113, 7
  %v115 = vsub.s32 %v112, %v114
  %v116 = vrot.slane %v109, %v115
  %v117 = vlaneseq
  %vm118 = vcmp.ge.s32.totalorder %v117, 0
  %vm119 = vcmp.lt.s32.totalorder %v117, 256
  %vm120 = vmand %vm118, %vm119
  %121 = vst.msk [vmem:[%s3] ss:$8 sm:$0x3] %vm120, %v116
  %122 = vst.msk [vmem:[%s3] ss:$8 sm:$0x0] %vm120, %v116
  %v123 = vadd.f32 %v23, 0.0
  %v125 = vlaneseq
  %v126 = vshrl.u32 %v125, 7
  %v127 = vsub.s32 3, %v126
  %v128 = vrot.slane %v123, %v127
  %v129 = vlaneseq
  %v130 = vshrl.u32 %v129, 7
  %v131 = vsub.s32 7, %v130
  %v132 = vrot.slane %v123, %v131
  %v135 = vsel %vm76, %v74, %v128
  %v136 = vsel %vm76, %v75, %v132
  %v139 = vrot.slane %v135, 4
  %v140 = vrot.slane %v136, 4
  %143 = vst [vmem:[%s2] sm:$0xf0] %v139
  %144 = vst [vmem:[%s2 + $0x8] sm:$0xf0] %v140
  %v145 = vmul.f32 %v123, 5.0
  %v146 = vfloor.f32 %v145
  %v147 = vcvt.f32.s32.to.zero.pseudo %v146
  %v148 = vsub.s32 %v147, %v98
  %v149 = vrot.slane %v148, 7
  %v150 = vrot.slane %v149, 4
  %v151 = vadd.s32 %v97, %v150
  %v153 = vunpack.c.l.s4 1966171168
  %v154 = vunpack.c.0.s8 %v153
  %v155 = vlaneseq
  %v156 = vshrl.u32 %v155, 7
  %v157 = vsub.s32 %v154, %v156
  %v158 = vrot.slane %v151, %v157
  %v160 = vunpack.c.l.s4 1966171168
  %v161 = vunpack.c.0.s8 %v160
  %v162 = vlaneseq
  %v163 = vshrl.u32 %v162, 7
  %v164 = vsub.s32 %v161, %v163
  %v165 = vrot.slane %v158, %v164
  %s166 = scalar_lea.vmem %s3, 1
  %167 = vst.msk [vmem:[%s166] ss:$8 sm:$0x3] %vm120, %v165
  %168 = vst.msk [vmem:[%s166] ss:$8 sm:$0x0] %vm120, %v165
  %v169 = vadd.f32 %v23, 0.2
  %v171 = vlaneseq
  %v172 = vshrl.u32 %v171, 7
  %v173 = vsub.s32 3, %v172
  %v174 = vrot.slane %v169, %v173
  %v175 = vlaneseq
  %v176 = vshrl.u32 %v175, 7
  %v177 = vsub.s32 7, %v176
  %v178 = vrot.slane %v169, %v177
  %v181 = vsel %vm76, %v74, %v174
  %v182 = vsel %vm76, %v75, %v178
  %183 = vst [vmem:[%s2 + $0x10] sm:$0xf] %v181
  %184 = vst [vmem:[%s2 + $0x18] sm:$0xf] %v182
  %v185 = vmul.f32 %v169, 5.0
  %v186 = vfloor.f32 %v185
  %v187 = vcvt.f32.s32.to.zero.pseudo %v186
  %v188 = vsub.s32 %v187, %v98
  %v189 = vrot.slane %v188, 7
  %v190 = vrot.slane %v189, 4
  %v191 = vadd.s32 %v97, %v190
  %v193 = vunpack.c.l.s4 1966171168
  %v194 = vunpack.c.0.s8 %v193
  %v195 = vlaneseq
  %v196 = vshrl.u32 %v195, 7
  %v197 = vsub.s32 %v194, %v196
  %v198 = vrot.slane %v191, %v197
  %v200 = vunpack.c.l.s4 1966171168
  %v201 = vunpack.c.0.s8 %v200
  %v202 = vlaneseq
  %v203 = vshrl.u32 %v202, 7
  %v204 = vsub.s32 %v201, %v203
  %v205 = vrot.slane %v198, %v204
  %s206 = scalar_lea.vmem %s3, 2
  %207 = vst.msk [vmem:[%s206] ss:$8 sm:$0x3] %vm120, %v205
  %208 = vst.msk [vmem:[%s206] ss:$8 sm:$0x0] %vm120, %v205
  %v209 = vlaneseq
  %v210 = vshrl.u32 %v209, 7
  %v211 = vsub.s32 2, %v210
  %v212 = vrot.slane %v123, %v211
  %v213 = vlaneseq
  %v214 = vshrl.u32 %v213, 7
  %v215 = vsub.s32 6, %v214
  %v216 = vrot.slane %v123, %v215
  %v219 = vsel %vm73, %v71, %v212
  %v220 = vsel %vm73, %v72, %v216
  %v221 = vsel %vm76, %v219, %v63
  %v222 = vsel %vm76, %v220, %v67
  %v225 = vrot.slane %v221, 4
  %v226 = vrot.slane %v222, 4
  %229 = vst [vmem:[%s2 + $0x10] sm:$0xf0] %v225
  %230 = vst [vmem:[%s2 + $0x18] sm:$0xf0] %v226
  %v231 = vsub.s32 %v147, %v91
  %v232 = vmul.u32 %v231, %v93
  %v233 = vrot.slane %v232, 6
  %v234 = vrot.slane %v233, 4
  %v235 = vadd.s32 %v90, %v234
  %v236 = vadd.s32 %v235, %v101
  %v238 = vunpack.c.l.s4 1966171168
  %v239 = vunpack.c.0.s8 %v238
  %v240 = vlaneseq
  %v241 = vshrl.u32 %v240, 7
  %v242 = vsub.s32 %v239, %v241
  %v243 = vrot.slane %v236, %v242
  %v245 = vunpack.c.l.s4 1966171168
  %v246 = vunpack.c.0.s8 %v245
  %v247 = vlaneseq
  %v248 = vshrl.u32 %v247, 7
  %v249 = vsub.s32 %v246, %v248
  %v250 = vrot.slane %v243, %v249
  %s251 = scalar_lea.vmem %s3, 3
  %252 = vst.msk [vmem:[%s251] ss:$8 sm:$0x3] %vm120, %v250
  %253 = vst.msk [vmem:[%s251] ss:$8 sm:$0x0] %vm120, %v250
  %v254 = vsel %vm76, %v219, %v128
  %v255 = vsel %vm76, %v220, %v132
  %256 = vst [vmem:[%s2 + $0x20] sm:$0xf] %v254
  %257 = vst [vmem:[%s2 + $0x28] sm:$0xf] %v255
  %v258 = vadd.s32 %v235, %v150
  %v260 = vunpack.c.l.s4 1966171168
  %v261 = vunpack.c.0.s8 %v260
  %v262 = vlaneseq
  %v263 = vshrl.u32 %v262, 7
  %v264 = vsub.s32 %v261, %v263
  %v265 = vrot.slane %v258, %v264
  %v267 = vunpack.c.l.s4 1966171168
  %v268 = vunpack.c.0.s8 %v267
  %v269 = vlaneseq
  %v270 = vshrl.u32 %v269, 7
  %v271 = vsub.s32 %v268, %v270
  %v272 = vrot.slane %v265, %v271
  %s273 = scalar_lea.vmem %s3, 4
  %274 = vst.msk [vmem:[%s273] ss:$8 sm:$0x3] %vm120, %v272
  %275 = vst.msk [vmem:[%s273] ss:$8 sm:$0x0] %vm120, %v272
  %v276 = vsel %vm76, %v219, %v174
  %v277 = vsel %vm76, %v220, %v178
  %v280 = vrot.slane %v276, 4
  %v281 = vrot.slane %v277, 4
  %284 = vst [vmem:[%s2 + $0x20] sm:$0xf0] %v280
  %285 = vst [vmem:[%s2 + $0x28] sm:$0xf0] %v281
  %v286 = vadd.s32 %v235, %v190
  %v288 = vunpack.c.l.s4 1966171168
  %v289 = vunpack.c.0.s8 %v288
  %v290 = vlaneseq
  %v291 = vshrl.u32 %v290, 7
  %v292 = vsub.s32 %v289, %v291
  %v293 = vrot.slane %v286, %v292
  %v295 = vunpack.c.l.s4 1966171168
  %v296 = vunpack.c.0.s8 %v295
  %v297 = vlaneseq
  %v298 = vshrl.u32 %v297, 7
  %v299 = vsub.s32 %v296, %v298
  %v300 = vrot.slane %v293, %v299
  %s301 = scalar_lea.vmem %s3, 5
  %302 = vst.msk [vmem:[%s301] ss:$8 sm:$0x3] %vm120, %v300
  %303 = vst.msk [vmem:[%s301] ss:$8 sm:$0x0] %vm120, %v300
  %v304 = vlaneseq
  %v305 = vshrl.u32 %v304, 7
  %v306 = vsub.s32 2, %v305
  %v307 = vrot.slane %v169, %v306
  %v308 = vlaneseq
  %v309 = vshrl.u32 %v308, 7
  %v310 = vsub.s32 6, %v309
  %v311 = vrot.slane %v169, %v310
  %v314 = vsel %vm73, %v71, %v307
  %v315 = vsel %vm73, %v72, %v311
  %v316 = vsel %vm76, %v314, %v63
  %v317 = vsel %vm76, %v315, %v67
  %318 = vst [vmem:[%s2 + $0x30] sm:$0xf] %v316
  %319 = vst [vmem:[%s2 + $0x38] sm:$0xf] %v317
  %v320 = vsub.s32 %v187, %v91
  %v321 = vmul.u32 %v320, %v93
  %v322 = vrot.slane %v321, 6
  %v323 = vrot.slane %v322, 4
  %v324 = vadd.s32 %v90, %v323
  %v325 = vadd.s32 %v324, %v101
  %v327 = vunpack.c.l.s4 1966171168
  %v328 = vunpack.c.0.s8 %v327
  %v329 = vlaneseq
  %v330 = vshrl.u32 %v329, 7
  %v331 = vsub.s32 %v328, %v330
  %v332 = vrot.slane %v325, %v331
  %v334 = vunpack.c.l.s4 1966171168
  %v335 = vunpack.c.0.s8 %v334
  %v336 = vlaneseq
  %v337 = vshrl.u32 %v336, 7
  %v338 = vsub.s32 %v335, %v337
  %v339 = vrot.slane %v332, %v338
  %s340 = scalar_lea.vmem %s3, 6
  %341 = vst.msk [vmem:[%s340] ss:$8 sm:$0x3] %vm120, %v339
  %342 = vst.msk [vmem:[%s340] ss:$8 sm:$0x0] %vm120, %v339
  %v343 = vsel %vm76, %v314, %v128
  %v344 = vsel %vm76, %v315, %v132
  %v347 = vrot.slane %v343, 4
  %v348 = vrot.slane %v344, 4
  %351 = vst [vmem:[%s2 + $0x30] sm:$0xf0] %v347
  %352 = vst [vmem:[%s2 + $0x38] sm:$0xf0] %v348
  %v353 = vadd.s32 %v324, %v150
  %v355 = vunpack.c.l.s4 1966171168
  %v356 = vunpack.c.0.s8 %v355
  %v357 = vlaneseq
  %v358 = vshrl.u32 %v357, 7
  %v359 = vsub.s32 %v356, %v358
  %v360 = vrot.slane %v353, %v359
  %v362 = vunpack.c.l.s4 1966171168
  %v363 = vunpack.c.0.s8 %v362
  %v364 = vlaneseq
  %v365 = vshrl.u32 %v364, 7
  %v366 = vsub.s32 %v363, %v365
  %v367 = vrot.slane %v360, %v366
  %s368 = scalar_lea.vmem %s3, 7
  %369 = vst.msk [vmem:[%s368] ss:$8 sm:$0x3] %vm120, %v367
  %370 = vst.msk [vmem:[%s368] ss:$8 sm:$0x0] %vm120, %v367
  %v371 = vsel %vm76, %v314, %v174
  %v372 = vsel %vm76, %v315, %v178
  %373 = vst [vmem:[%s2 + $0x40] sm:$0xf] %v371
  %374 = vst [vmem:[%s2 + $0x48] sm:$0xf] %v372
  %v375 = vadd.s32 %v324, %v190
  %v377 = vunpack.c.l.s4 1966171168
  %v378 = vunpack.c.0.s8 %v377
  %v379 = vlaneseq
  %v380 = vshrl.u32 %v379, 7
  %v381 = vsub.s32 %v378, %v380
  %v382 = vrot.slane %v375, %v381
  %v384 = vunpack.c.l.s4 1966171168
  %v385 = vunpack.c.0.s8 %v384
  %v386 = vlaneseq
  %v387 = vshrl.u32 %v386, 7
  %v388 = vsub.s32 %v385, %v387
  %v389 = vrot.slane %v382, %v388
  %s390 = scalar_lea.vmem %s3, 16
  %391 = vst.msk [vmem:[%s390] ss:$8 sm:$0x3] %vm120, %v389
  %392 = vst.msk [vmem:[%s390] ss:$8 sm:$0x0] %vm120, %v389
  %v393 = vlaneseq
  %v394 = vshrl.u32 %v393, 7
  %v395 = vsub.s32 1, %v394
  %v396 = vrot.slane %v123, %v395
  %v397 = vlaneseq
  %v398 = vshrl.u32 %v397, 7
  %v399 = vsub.s32 5, %v398
  %v400 = vrot.slane %v123, %v399
  %v403 = vsel %vm70, %v32, %v396
  %v404 = vsel %vm70, %v36, %v400
  %v405 = vsel %vm73, %v403, %v53
  %v406 = vsel %vm73, %v404, %v57
  %v407 = vsel %vm76, %v405, %v63
  %v408 = vsel %vm76, %v406, %v67
  %v411 = vrot.slane %v407, 4
  %v412 = vrot.slane %v408, 4
  %415 = vst [vmem:[%s2 + $0x40] sm:$0xf0] %v411
  %416 = vst [vmem:[%s2 + $0x48] sm:$0xf0] %v412
  %v417 = vsub.s32 %v147, %v84
  %v418 = vmul.u32 %v417, %v86
  %v419 = vrot.slane %v418, 5
  %v420 = vrot.slane %v419, 4
  %v421 = vadd.s32 %v26, %v420
  %v422 = vadd.s32 %v421, %v96
  %v423 = vadd.s32 %v422, %v101
  %v425 = vunpack.c.l.s4 1966171168
  %v426 = vunpack.c.0.s8 %v425
  %v427 = vlaneseq
  %v428 = vshrl.u32 %v427, 7
  %v429 = vsub.s32 %v426, %v428
  %v430 = vrot.slane %v423, %v429
  %v432 = vunpack.c.l.s4 1966171168
  %v433 = vunpack.c.0.s8 %v432
  %v434 = vlaneseq
  %v435 = vshrl.u32 %v434, 7
  %v436 = vsub.s32 %v433, %v435
  %v437 = vrot.slane %v430, %v436
  %s438 = scalar_lea.vmem %s3, 17
  %439 = vst.msk [vmem:[%s438] ss:$8 sm:$0x3] %vm120, %v437
  %440 = vst.msk [vmem:[%s438] ss:$8 sm:$0x0] %vm120, %v437
  %v441 = vsel %vm76, %v405, %v128
  %v442 = vsel %vm76, %v406, %v132
  %443 = vst [vmem:[%s2 + $0x50] sm:$0xf] %v441
  %444 = vst [vmem:[%s2 + $0x58] sm:$0xf] %v442
  %v445 = vadd.s32 %v422, %v150
  %v447 = vunpack.c.l.s4 1966171168
  %v448 = vunpack.c.0.s8 %v447
  %v449 = vlaneseq
  %v450 = vshrl.u32 %v449, 7
  %v451 = vsub.s32 %v448, %v450
  %v452 = vrot.slane %v445, %v451
  %v454 = vunpack.c.l.s4 1966171168
  %v455 = vunpack.c.0.s8 %v454
  %v456 = vlaneseq
  %v457 = vshrl.u32 %v456, 7
  %v458 = vsub.s32 %v455, %v457
  %v459 = vrot.slane %v452, %v458
  %s460 = scalar_lea.vmem %s3, 18
  %461 = vst.msk [vmem:[%s460] ss:$8 sm:$0x3] %vm120, %v459
  %462 = vst.msk [vmem:[%s460] ss:$8 sm:$0x0] %vm120, %v459
  %v463 = vsel %vm76, %v405, %v174
  %v464 = vsel %vm76, %v406, %v178
  %v467 = vrot.slane %v463, 4
  %v468 = vrot.slane %v464, 4
  %471 = vst [vmem:[%s2 + $0x50] sm:$0xf0] %v467
  %472 = vst [vmem:[%s2 + $0x58] sm:$0xf0] %v468
  %v473 = vadd.s32 %v422, %v190
  %v475 = vunpack.c.l.s4 1966171168
  %v476 = vunpack.c.0.s8 %v475
  %v477 = vlaneseq
  %v478 = vshrl.u32 %v477, 7
  %v479 = vsub.s32 %v476, %v478
  %v480 = vrot.slane %v473, %v479
  %v482 = vunpack.c.l.s4 1966171168
  %v483 = vunpack.c.0.s8 %v482
  %v484 = vlaneseq
  %v485 = vshrl.u32 %v484, 7
  %v486 = vsub.s32 %v483, %v485
  %v487 = vrot.slane %v480, %v486
  %s488 = scalar_lea.vmem %s3, 19
  %489 = vst.msk [vmem:[%s488] ss:$8 sm:$0x3] %vm120, %v487
  %490 = vst.msk [vmem:[%s488] ss:$8 sm:$0x0] %vm120, %v487
  %v491 = vsel %vm73, %v403, %v212
  %v492 = vsel %vm73, %v404, %v216
  %v493 = vsel %vm76, %v491, %v63
  %v494 = vsel %vm76, %v492, %v67
  %495 = vst [vmem:[%s2 + $0x60] sm:$0xf] %v493
  %496 = vst [vmem:[%s2 + $0x68] sm:$0xf] %v494
  %v497 = vadd.s32 %v421, %v234
  %v498 = vadd.s32 %v497, %v101
  %v500 = vunpack.c.l.s4 1966171168
  %v501 = vunpack.c.0.s8 %v500
  %v502 = vlaneseq
  %v503 = vshrl.u32 %v502, 7
  %v504 = vsub.s32 %v501, %v503
  %v505 = vrot.slane %v498, %v504
  %v507 = vunpack.c.l.s4 1966171168
  %v508 = vunpack.c.0.s8 %v507
  %v509 = vlaneseq
  %v510 = vshrl.u32 %v509, 7
  %v511 = vsub.s32 %v508, %v510
  %v512 = vrot.slane %v505, %v511
  %s513 = scalar_lea.vmem %s3, 20
  %514 = vst.msk [vmem:[%s513] ss:$8 sm:$0x3] %vm120, %v512
  %515 = vst.msk [vmem:[%s513] ss:$8 sm:$0x0] %vm120, %v512
  %v516 = vsel %vm76, %v491, %v128
  %v517 = vsel %vm76, %v492, %v132
  %v520 = vrot.slane %v516, 4
  %v521 = vrot.slane %v517, 4
  %524 = vst [vmem:[%s2 + $0x60] sm:$0xf0] %v520
  %525 = vst [vmem:[%s2 + $0x68] sm:$0xf0] %v521
  %v526 = vadd.s32 %v497, %v150
  %v528 = vunpack.c.l.s4 1966171168
  %v529 = vunpack.c.0.s8 %v528
  %v530 = vlaneseq
  %v531 = vshrl.u32 %v530, 7
  %v532 = vsub.s32 %v529, %v531
  %v533 = vrot.slane %v526, %v532
  %v535 = vunpack.c.l.s4 1966171168
  %v536 = vunpack.c.0.s8 %v535
  %v537 = vlaneseq
  %v538 = vshrl.u32 %v537, 7
  %v539 = vsub.s32 %v536, %v538
  %v540 = vrot.slane %v533, %v539
  %s541 = scalar_lea.vmem %s3, 21
  %542 = vst.msk [vmem:[%s541] ss:$8 sm:$0x3] %vm120, %v540
  %543 = vst.msk [vmem:[%s541] ss:$8 sm:$0x0] %vm120, %v540
  %v544 = vsel %vm76, %v491, %v174
  %v545 = vsel %vm76, %v492, %v178
  %546 = vst [vmem:[%s2 + $0x70] sm:$0xf] %v544
  %547 = vst [vmem:[%s2 + $0x78] sm:$0xf] %v545
  %v548 = vadd.s32 %v497, %v190
  %v550 = vunpack.c.l.s4 1966171168
  %v551 = vunpack.c.0.s8 %v550
  %v552 = vlaneseq
  %v553 = vshrl.u32 %v552, 7
  %v554 = vsub.s32 %v551, %v553
  %v555 = vrot.slane %v548, %v554
  %v557 = vunpack.c.l.s4 1966171168
  %v558 = vunpack.c.0.s8 %v557
  %v559 = vlaneseq
  %v560 = vshrl.u32 %v559, 7
  %v561 = vsub.s32 %v558, %v560
  %v562 = vrot.slane %v555, %v561
  %s563 = scalar_lea.vmem %s3, 22
  %564 = vst.msk [vmem:[%s563] ss:$8 sm:$0x3] %vm120, %v562
  %565 = vst.msk [vmem:[%s563] ss:$8 sm:$0x0] %vm120, %v562
  %v566 = vsel %vm73, %v403, %v307
  %v567 = vsel %vm73, %v404, %v311
  %v568 = vsel %vm76, %v566, %v63
  %v569 = vsel %vm76, %v567, %v67
  %v572 = vrot.slane %v568, 4
  %v573 = vrot.slane %v569, 4
  %576 = vst [vmem:[%s2 + $0x70] sm:$0xf0] %v572
  %577 = vst [vmem:[%s2 + $0x78] sm:$0xf0] %v573
  %v578 = vadd.s32 %v421, %v323
  %v579 = vadd.s32 %v578, %v101
  %v581 = vunpack.c.l.s4 1966171168
  %v582 = vunpack.c.0.s8 %v581
  %v583 = vlaneseq
  %v584 = vshrl.u32 %v583, 7
  %v585 = vsub.s32 %v582, %v584
  %v586 = vrot.slane %v579, %v585
  %v588 = vunpack.c.l.s4 1966171168
  %v589 = vunpack.c.0.s8 %v588
  %v590 = vlaneseq
  %v591 = vshrl.u32 %v590, 7
  %v592 = vsub.s32 %v589, %v591
  %v593 = vrot.slane %v586, %v592
  %s594 = scalar_lea.vmem %s3, 23
  %595 = vst.msk [vmem:[%s594] ss:$8 sm:$0x3] %vm120, %v593
  %596 = vst.msk [vmem:[%s594] ss:$8 sm:$0x0] %vm120, %v593
  %v597 = vsel %vm76, %v566, %v128
  %v598 = vsel %vm76, %v567, %v132
  %599 = vst [vmem:[%s2 + $0x80] sm:$0xf] %v597
  %600 = vst [vmem:[%s2 + $0x88] sm:$0xf] %v598
  %v601 = vadd.s32 %v578, %v150
  %v603 = vunpack.c.l.s4 1966171168
  %v604 = vunpack.c.0.s8 %v603
  %v605 = vlaneseq
  %v606 = vshrl.u32 %v605, 7
  %v607 = vsub.s32 %v604, %v606
  %v608 = vrot.slane %v601, %v607
  %v610 = vunpack.c.l.s4 1966171168
  %v611 = vunpack.c.0.s8 %v610
  %v612 = vlaneseq
  %v613 = vshrl.u32 %v612, 7
  %v614 = vsub.s32 %v611, %v613
  %v615 = vrot.slane %v608, %v614
  %s616 = scalar_lea.vmem %s3, 32
  %617 = vst.msk [vmem:[%s616] ss:$8 sm:$0x3] %vm120, %v615
  %618 = vst.msk [vmem:[%s616] ss:$8 sm:$0x0] %vm120, %v615
  %v619 = vsel %vm76, %v566, %v174
  %v620 = vsel %vm76, %v567, %v178
  %v623 = vrot.slane %v619, 4
  %v624 = vrot.slane %v620, 4
  %627 = vst [vmem:[%s2 + $0x80] sm:$0xf0] %v623
  %628 = vst [vmem:[%s2 + $0x88] sm:$0xf0] %v624
  %v629 = vadd.s32 %v578, %v190
  %v631 = vunpack.c.l.s4 1966171168
  %v632 = vunpack.c.0.s8 %v631
  %v633 = vlaneseq
  %v634 = vshrl.u32 %v633, 7
  %v635 = vsub.s32 %v632, %v634
  %v636 = vrot.slane %v629, %v635
  %v638 = vunpack.c.l.s4 1966171168
  %v639 = vunpack.c.0.s8 %v638
  %v640 = vlaneseq
  %v641 = vshrl.u32 %v640, 7
  %v642 = vsub.s32 %v639, %v641
  %v643 = vrot.slane %v636, %v642
  %s644 = scalar_lea.vmem %s3, 33
  %645 = vst.msk [vmem:[%s644] ss:$8 sm:$0x3] %vm120, %v643
  %646 = vst.msk [vmem:[%s644] ss:$8 sm:$0x0] %vm120, %v643
  %v647 = vlaneseq
  %v648 = vshrl.u32 %v647, 7
  %v649 = vsub.s32 1, %v648
  %v650 = vrot.slane %v169, %v649
  %v651 = vlaneseq
  %v652 = vshrl.u32 %v651, 7
  %v653 = vsub.s32 5, %v652
  %v654 = vrot.slane %v169, %v653
  %v657 = vsel %vm70, %v32, %v650
  %v658 = vsel %vm70, %v36, %v654
  %v659 = vsel %vm73, %v657, %v53
  %v660 = vsel %vm73, %v658, %v57
  %v661 = vsel %vm76, %v659, %v63
  %v662 = vsel %vm76, %v660, %v67
  %663 = vst [vmem:[%s2 + $0x90] sm:$0xf] %v661
  %664 = vst [vmem:[%s2 + $0x98] sm:$0xf] %v662
  %v665 = vsub.s32 %v187, %v84
  %v666 = vmul.u32 %v665, %v86
  %v667 = vrot.slane %v666, 5
  %v668 = vrot.slane %v667, 4
  %v669 = vadd.s32 %v26, %v668
  %v670 = vadd.s32 %v669, %v96
  %v671 = vadd.s32 %v670, %v101
  %v673 = vunpack.c.l.s4 1966171168
  %v674 = vunpack.c.0.s8 %v673
  %v675 = vlaneseq
  %v676 = vshrl.u32 %v675, 7
  %v677 = vsub.s32 %v674, %v676
  %v678 = vrot.slane %v671, %v677
  %v680 = vunpack.c.l.s4 1966171168
  %v681 = vunpack.c.0.s8 %v680
  %v682 = vlaneseq
  %v683 = vshrl.u32 %v682, 7
  %v684 = vsub.s32 %v681, %v683
  %v685 = vrot.slane %v678, %v684
  %s686 = scalar_lea.vmem %s3, 34
  %687 = vst.msk [vmem:[%s686] ss:$8 sm:$0x3] %vm120, %v685
  %688 = vst.msk [vmem:[%s686] ss:$8 sm:$0x0] %vm120, %v685
  %v689 = vsel %vm76, %v659, %v128
  %v690 = vsel %vm76, %v660, %v132
  %v693 = vrot.slane %v689, 4
  %v694 = vrot.slane %v690, 4
  %697 = vst [vmem:[%s2 + $0x90] sm:$0xf0] %v693
  %698 = vst [vmem:[%s2 + $0x98] sm:$0xf0] %v694
  %v699 = vadd.s32 %v670, %v150
  %v701 = vunpack.c.l.s4 1966171168
  %v702 = vunpack.c.0.s8 %v701
  %v703 = vlaneseq
  %v704 = vshrl.u32 %v703, 7
  %v705 = vsub.s32 %v702, %v704
  %v706 = vrot.slane %v699, %v705
  %v708 = vunpack.c.l.s4 1966171168
  %v709 = vunpack.c.0.s8 %v708
  %v710 = vlaneseq
  %v711 = vshrl.u32 %v710, 7
  %v712 = vsub.s32 %v709, %v711
  %v713 = vrot.slane %v706, %v712
  %s714 = scalar_lea.vmem %s3, 35
  %715 = vst.msk [vmem:[%s714] ss:$8 sm:$0x3] %vm120, %v713
  %716 = vst.msk [vmem:[%s714] ss:$8 sm:$0x0] %vm120, %v713
  %v717 = vsel %vm76, %v659, %v174
  %v718 = vsel %vm76, %v660, %v178
  %719 = vst [vmem:[%s2 + $0xa0] sm:$0xf] %v717
  %720 = vst [vmem:[%s2 + $0xa8] sm:$0xf] %v718
  %v721 = vadd.s32 %v670, %v190
  %v723 = vunpack.c.l.s4 1966171168
  %v724 = vunpack.c.0.s8 %v723
  %v725 = vlaneseq
  %v726 = vshrl.u32 %v725, 7
  %v727 = vsub.s32 %v724, %v726
  %v728 = vrot.slane %v721, %v727
  %v730 = vunpack.c.l.s4 1966171168
  %v731 = vunpack.c.0.s8 %v730
  %v732 = vlaneseq
  %v733 = vshrl.u32 %v732, 7
  %v734 = vsub.s32 %v731, %v733
  %v735 = vrot.slane %v728, %v734
  %s736 = scalar_lea.vmem %s3, 36
  %737 = vst.msk [vmem:[%s736] ss:$8 sm:$0x3] %vm120, %v735
  %738 = vst.msk [vmem:[%s736] ss:$8 sm:$0x0] %vm120, %v735
  %v739 = vsel %vm73, %v657, %v212
  %v740 = vsel %vm73, %v658, %v216
  %v741 = vsel %vm76, %v739, %v63
  %v742 = vsel %vm76, %v740, %v67
  %v745 = vrot.slane %v741, 4
  %v746 = vrot.slane %v742, 4
  %749 = vst [vmem:[%s2 + $0xa0] sm:$0xf0] %v745
  %750 = vst [vmem:[%s2 + $0xa8] sm:$0xf0] %v746
  %v751 = vadd.s32 %v669, %v234
  %v752 = vadd.s32 %v751, %v101
  %v754 = vunpack.c.l.s4 1966171168
  %v755 = vunpack.c.0.s8 %v754
  %v756 = vlaneseq
  %v757 = vshrl.u32 %v756, 7
  %v758 = vsub.s32 %v755, %v757
  %v759 = vrot.slane %v752, %v758
  %v761 = vunpack.c.l.s4 1966171168
  %v762 = vunpack.c.0.s8 %v761
  %v763 = vlaneseq
  %v764 = vshrl.u32 %v763, 7
  %v765 = vsub.s32 %v762, %v764
  %v766 = vrot.slane %v759, %v765
  %s767 = scalar_lea.vmem %s3, 37
  %768 = vst.msk [vmem:[%s767] ss:$8 sm:$0x3] %vm120, %v766
  %769 = vst.msk [vmem:[%s767] ss:$8 sm:$0x0] %vm120, %v766
  %v770 = vsel %vm76, %v739, %v128
  %v771 = vsel %vm76, %v740, %v132
  %772 = vst [vmem:[%s2 + $0xb0] sm:$0xf] %v770
  %773 = vst [vmem:[%s2 + $0xb8] sm:$0xf] %v771
  %v774 = vadd.s32 %v751, %v150
  %v776 = vunpack.c.l.s4 1966171168
  %v777 = vunpack.c.0.s8 %v776
  %v778 = vlaneseq
  %v779 = vshrl.u32 %v778, 7
  %v780 = vsub.s32 %v777, %v779
  %v781 = vrot.slane %v774, %v780
  %v783 = vunpack.c.l.s4 1966171168
  %v784 = vunpack.c.0.s8 %v783
  %v785 = vlaneseq
  %v786 = vshrl.u32 %v785, 7
  %v787 = vsub.s32 %v784, %v786
  %v788 = vrot.slane %v781, %v787
  %s789 = scalar_lea.vmem %s3, 38
  %790 = vst.msk [vmem:[%s789] ss:$8 sm:$0x3] %vm120, %v788
  %791 = vst.msk [vmem:[%s789] ss:$8 sm:$0x0] %vm120, %v788
  %v792 = vsel %vm76, %v739, %v174
  %v793 = vsel %vm76, %v740, %v178
  %v796 = vrot.slane %v792, 4
  %v797 = vrot.slane %v793, 4
  %800 = vst [vmem:[%s2 + $0xb0] sm:$0xf0] %v796
  %801 = vst [vmem:[%s2 + $0xb8] sm:$0xf0] %v797
  %v802 = vadd.s32 %v751, %v190
  %v804 = vunpack.c.l.s4 1966171168
  %v805 = vunpack.c.0.s8 %v804
  %v806 = vlaneseq
  %v807 = vshrl.u32 %v806, 7
  %v808 = vsub.s32 %v805, %v807
  %v809 = vrot.slane %v802, %v808
  %v811 = vunpack.c.l.s4 1966171168
  %v812 = vunpack.c.0.s8 %v811
  %v813 = vlaneseq
  %v814 = vshrl.u32 %v813, 7
  %v815 = vsub.s32 %v812, %v814
  %v816 = vrot.slane %v809, %v815
  %s817 = scalar_lea.vmem %s3, 39
  %818 = vst.msk [vmem:[%s817] ss:$8 sm:$0x3] %vm120, %v816
  %819 = vst.msk [vmem:[%s817] ss:$8 sm:$0x0] %vm120, %v816
  %v820 = vsel %vm73, %v657, %v307
  %v821 = vsel %vm73, %v658, %v311
  %v822 = vsel %vm76, %v820, %v63
  %v823 = vsel %vm76, %v821, %v67
  %824 = vst [vmem:[%s2 + $0xc0] sm:$0xf] %v822
  %825 = vst [vmem:[%s2 + $0xc8] sm:$0xf] %v823
  %v826 = vadd.s32 %v669, %v323
  %v827 = vadd.s32 %v826, %v101
  %v829 = vunpack.c.l.s4 1966171168
  %v830 = vunpack.c.0.s8 %v829
  %v831 = vlaneseq
  %v832 = vshrl.u32 %v831, 7
  %v833 = vsub.s32 %v830, %v832
  %v834 = vrot.slane %v827, %v833
  %v836 = vunpack.c.l.s4 1966171168
  %v837 = vunpack.c.0.s8 %v836
  %v838 = vlaneseq
  %v839 = vshrl.u32 %v838, 7
  %v840 = vsub.s32 %v837, %v839
  %v841 = vrot.slane %v834, %v840
  %s842 = scalar_lea.vmem %s3, 48
  %843 = vst.msk [vmem:[%s842] ss:$8 sm:$0x3] %vm120, %v841
  %844 = vst.msk [vmem:[%s842] ss:$8 sm:$0x0] %vm120, %v841
  %v845 = vsel %vm76, %v820, %v128
  %v846 = vsel %vm76, %v821, %v132
  %v849 = vrot.slane %v845, 4
  %v850 = vrot.slane %v846, 4
  %853 = vst [vmem:[%s2 + $0xc0] sm:$0xf0] %v849
  %854 = vst [vmem:[%s2 + $0xc8] sm:$0xf0] %v850
  %v855 = vadd.s32 %v826, %v150
  %v857 = vunpack.c.l.s4 1966171168
  %v858 = vunpack.c.0.s8 %v857
  %v859 = vlaneseq
  %v860 = vshrl.u32 %v859, 7
  %v861 = vsub.s32 %v858, %v860
  %v862 = vrot.slane %v855, %v861
  %v864 = vunpack.c.l.s4 1966171168
  %v865 = vunpack.c.0.s8 %v864
  %v866 = vlaneseq
  %v867 = vshrl.u32 %v866, 7
  %v868 = vsub.s32 %v865, %v867
  %v869 = vrot.slane %v862, %v868
  %s870 = scalar_lea.vmem %s3, 49
  %871 = vst.msk [vmem:[%s870] ss:$8 sm:$0x3] %vm120, %v869
  %872 = vst.msk [vmem:[%s870] ss:$8 sm:$0x0] %vm120, %v869
  %v873 = vsel %vm76, %v820, %v174
  %v874 = vsel %vm76, %v821, %v178
  %875 = vst [vmem:[%s2 + $0xd0] sm:$0xf] %v873
  %876 = vst [vmem:[%s2 + $0xd8] sm:$0xf] %v874
  %v877 = vadd.s32 %v826, %v190
  %v879 = vunpack.c.l.s4 1966171168
  %v880 = vunpack.c.0.s8 %v879
  %v881 = vlaneseq
  %v882 = vshrl.u32 %v881, 7
  %v883 = vsub.s32 %v880, %v882
  %v884 = vrot.slane %v877, %v883
  %v886 = vunpack.c.l.s4 1966171168
  %v887 = vunpack.c.0.s8 %v886
  %v888 = vlaneseq
  %v889 = vshrl.u32 %v888, 7
  %v890 = vsub.s32 %v887, %v889
  %v891 = vrot.slane %v884, %v890
  %s892 = scalar_lea.vmem %s3, 50
  %893 = vst.msk [vmem:[%s892] ss:$8 sm:$0x3] %vm120, %v891
  %894 = vst.msk [vmem:[%s892] ss:$8 sm:$0x0] %vm120, %v891
  // Predicated region
  $region6: #{voxel_center_sampler.2} parent=0 // pred_check
    _
  $region7: #{voxel_center_sampler.2} parent=0 // pred_check_branch
    %896 = sbr.rel (0) target = $region9
  $region8: #{voxel_center_sampler.2} parent=0 // pred_region
    _
  $region9: #{voxel_center_sampler.2} parent=0 // pred_fallthru
    _
  // Predicated region
  $region10: #{voxel_center_sampler.2} parent=0 // pred_check
    _
  $region11: #{voxel_center_sampler.2} parent=0 // pred_check_branch
    %898 = sbr.rel (0) target = $region13
  $region12: #{voxel_center_sampler.2} parent=0 // pred_region
    _
  $region13: #{voxel_center_sampler.2} parent=0 // pred_fallthru
    _
  // Predicated region
  $region14: #{voxel_center_sampler.2} parent=0 // pred_check
    _
  $region15: #{voxel_center_sampler.2} parent=0 // pred_check_branch
    %900 = sbr.rel (0) target = $region17
  $region16: #{voxel_center_sampler.2} parent=0 // pred_region
    _
  $region17: #{voxel_center_sampler.2} parent=0 // pred_fallthru
    _
  // Predicated region
  $region18: #{voxel_center_sampler.2} parent=0 // pred_check
    _
  $region19: #{voxel_center_sampler.2} parent=0 // pred_check_branch
    %902 = sbr.rel (0) target = $region21
  $region20: #{voxel_center_sampler.2} parent=0 // pred_region
    _
  $region21: #{voxel_center_sampler.2} parent=0 // pred_fallthru
    _

// kernel: voxel_center_sampler.3
$region0: #{voxel_center_sampler.3}
  #allocation0 [shape = 'u32[]', space=smem, size = 0x4, offset = 0x4, fixed_abs, tag = 'smem constant byte address 0x4 - core index']
  #allocation1 [shape = 'u32[144,128]{1,0:T(1,128)}', space=vmem, size = 0x12000, scoped, tag = 'internal scratch']
  %s0 = inlined_call_operand.vmem [shape: s32[4,8192], index: 0, kind: input, shape index: {}]
  %s1 = inlined_call_operand.vmem [shape: f32[5,8192], index: 1, kind: output, shape index: {}]
  %s2 = sld [smem:[#allocation0]]
  $region37: #{voxel_center_sampler.3} parent=0
    _
  %s4 = ssub.s32 1, %s2
  %s5 = scalar_select 0, %s4, %s2
  loop: start=0, step=1, limit=4
  $region2: #{voxel_center_sampler.3} parent=0 // loop_pre_header
    _
  $region3: #{voxel_center_sampler.3} parent=0 // loop_header
    %s7 = sphi 0, %s11
    %p8 = scmp.ge.s32.totalorder %s7, 4
    %s17 = sphi 0, %s19
    %s20 = sphi 0, %s17
    %s21 = sphi 0, %s20
    %s37 = sphi 0, %s21
    %s43 = sphi 0, %s45
    %s46 = sphi 0, %s43
    %s47 = sphi 0, %s46
    %s63 = sphi 0, %s47
  $region4: #{voxel_center_sampler.3} parent=0 // loop_header_branch
    %10 = sbr.rel (%p8) target = $region8
  $region5: #{voxel_center_sampler.3} parent=0 // loop_body
    %s12 = ssub.s32 %s7, 1
    %s13 = ssub.s32 %s7, 2
    %s14 = sadd.s32 %s7, 1
    %s15 = ssub.s32 %s7, %s14
    %p16 = scmp.eq.s32.totalorder %s15, 0
    %s18 = sadd.s32 %s17, 1
    %s19 = scalar_select %p16, %s17, %s18
    %p22 = pneg %p16
    %p23 = scmp.eq.s32.totalorder %s7, 1
    %p24 = por %p22, %p23
    %p25 = scmp.ne.s32.totalorder %s17, %s20
    %p26 = scmp.eq.s32.totalorder %s7, 0
    %p27 = por %p25, %p26
    %p28 = scmp.ne.s32.totalorder %s17, %s20
    %p29 = scmp.eq.s32.totalorder %s12, 1
    %p30 = por %p28, %p29
    %p31 = scmp.ne.s32.totalorder %s20, %s21
    %p32 = scmp.eq.s32.totalorder %s12, 0
    %p33 = por %p31, %p32
    %p34 = scmp.ne.s32.totalorder %s20, %s21
    %p35 = scmp.eq.s32.totalorder %s13, 1
    %p36 = por %p34, %p35
    %p38 = scmp.ne.s32.totalorder %s21, %s37
    %p39 = scmp.eq.s32.totalorder %s13, 0
    %p40 = por %p38, %p39
    %s41 = ssub.s32 %s7, %s14
    %p42 = scmp.eq.s32.totalorder %s41, 0
    %s44 = sadd.s32 %s43, 1
    %s45 = scalar_select %p42, %s43, %s44
    %p48 = pneg %p42
    %p49 = scmp.eq.s32.totalorder %s7, 1
    %p50 = por %p48, %p49
    %p51 = scmp.ne.s32.totalorder %s43, %s46
    %p52 = scmp.eq.s32.totalorder %s7, 0
    %p53 = por %p51, %p52
    %p54 = scmp.ne.s32.totalorder %s43, %s46
    %p55 = scmp.eq.s32.totalorder %s12, 1
    %p56 = por %p54, %p55
    %p57 = scmp.ne.s32.totalorder %s46, %s47
    %p58 = scmp.eq.s32.totalorder %s12, 0
    %p59 = por %p57, %p58
    %p60 = scmp.ne.s32.totalorder %s46, %s47
    %p61 = scmp.eq.s32.totalorder %s13, 1
    %p62 = por %p60, %p61
    %p64 = scmp.ne.s32.totalorder %s47, %s63
    %p65 = scmp.eq.s32.totalorder %s13, 0
    %p66 = por %p64, %p65
    %p67 = scmp.le.s32.totalorder 1, %s7
    %p68 = scmp.lt.s32.totalorder %s7, 3
    %p69 = pnand %p67, %p68
    %p70 = pneg %p69
    // Predicated region
    $region9: #{voxel_center_sampler.3} parent=5 // pred_check
      _
    $region10: #{voxel_center_sampler.3} parent=5 // pred_check_branch
      %72 = sbr.rel (%p69) target = $region12
    $region11: #{voxel_center_sampler.3} parent=5 // pred_region
      %s73 = ssub.s32 %s7, 1
    $region12: #{voxel_center_sampler.3} parent=5 // pred_fallthru
      _
    %p74 = scmp.lt.s32.totalorder %s7, 2
    // Predicated region
    $region13: #{voxel_center_sampler.3} parent=5 // pred_check
      %p75 = pneg %p74
    $region14: #{voxel_center_sampler.3} parent=5 // pred_check_branch
      %77 = sbr.rel (%p75) target = $region16
    $region15: #{voxel_center_sampler.3} parent=5 // pred_region
      // Predicated region
      $region17: #{voxel_center_sampler.3} parent=15 // pred_check
        %p78 = pneg %p27
      $region18: #{voxel_center_sampler.3} parent=15 // pred_check_branch
        %80 = sbr.rel (%p78) target = $region20
      $region19: #{voxel_center_sampler.3} parent=15 // pred_region
        %s81 = smul.u32 32, %s7
        %p82 = scmp.lt.s32.totalorder %s81, 63
        %s83 = scalar_select %p82, %s81, 63
        %s84 = smul.addr %s83, 4
        %s85 = scalar_lea.vmem %s0, %s84
        %s86 = smul.u32 32, %s7
      $region20: #{voxel_center_sampler.3} parent=15 // pred_fallthru
        _
    $region16: #{voxel_center_sampler.3} parent=5 // pred_fallthru
      _
    %p87 = scmp.le.s32.totalorder 1, %s7
    %p88 = scmp.lt.s32.totalorder %s7, 3
    %p89 = pnand %p87, %p88
    %p90 = pneg %p89
    // Predicated region
    $region21: #{voxel_center_sampler.3} parent=5 // pred_check
      _
    $region22: #{voxel_center_sampler.3} parent=5 // pred_check_branch
      %92 = sbr.rel (%p89) target = $region24
    $region23: #{voxel_center_sampler.3} parent=5 // pred_region
      %s93 = ssub.s32 %s7, 1
      %s94 = smul.u32 32, %s12
      %p95 = scmp.lt.s32.totalorder %s94, 63
      %s96 = scalar_select %p95, %s94, 63
      %s97 = smul.addr %s96, 4
      %s98 = scalar_lea.vmem %s0, %s97
      %p99 = pneg %p33
      %p100 = pneg %p30
      %p101 = pneg %p59
      %p102 = pneg %p56
      %s103 = smul.u32 32, %s12
      %p104 = scmp.lt.s32.totalorder %s103, 63
      %s105 = scalar_select %p104, %s103, 63
      %s106 = smul.addr %s105, 8
      %s107 = scalar_lea.vmem %s1, %s106
      %s108 = smul.u32 32, %s12
      %p109 = scmp.lt.s32.totalorder %s108, 63
      %s110 = scalar_select %p109, %s108, 63
      %s111 = smul.addr %s110, 4
      %s112 = scalar_lea.vmem %s0, %s111
      %s113 = smul.u32 32, %s12
      %s114 = smul.u32 32, %s12
      %p115 = scmp.lt.s32.totalorder %s114, 63
      %s116 = scalar_select %p115, %s114, 63
      %s117 = smul.addr %s116, 8
      %s118 = scalar_lea.vmem %s1, %s117
      %s119 = smul.u32 32, %s12
      %v120 = vld [vmem:[%s112] sm:$0xff]
      %v121 = vld [vmem:[%s112 + $0x8] sm:$0xff]
      %v122 = vld [vmem:[%s112 + $0x10] sm:$0xff]
      %v123 = vld [vmem:[%s112 + $0x18] sm:$0xff]
      %v124 = vld [vmem:[%s112 + $0x20] sm:$0xff]
      %v125 = vld [vmem:[%s112 + $0x28] sm:$0xff]
      %v126 = vld [vmem:[%s112 + $0x30] sm:$0xff]
      %v127 = vld [vmem:[%s112 + $0x38] sm:$0xff]
      %v128 = vld [vmem:[%s112 + $0x40] sm:$0xff]
      %v129 = vld [vmem:[%s112 + $0x48] sm:$0xff]
      %v130 = vld [vmem:[%s112 + $0x50] sm:$0xff]
      %v131 = vld [vmem:[%s112 + $0x58] sm:$0xff]
      %v132 = vld [vmem:[%s112 + $0x60] sm:$0xff]
      %v133 = vld [vmem:[%s112 + $0x68] sm:$0xff]
      %v134 = vld [vmem:[%s112 + $0x70] sm:$0xff]
      %v135 = vld [vmem:[%s112 + $0x78] sm:$0xff]
      %v136 = vcvt.s32.f32 %v120
      %v137 = vcvt.s32.f32 %v121
      %v138 = vcvt.s32.f32 %v122
      %v139 = vcvt.s32.f32 %v123
      %v140 = vcvt.s32.f32 %v124
      %v141 = vcvt.s32.f32 %v125
      %v142 = vcvt.s32.f32 %v126
      %v143 = vcvt.s32.f32 %v127
      %v144 = vcvt.s32.f32 %v128
      %v145 = vcvt.s32.f32 %v129
      %v146 = vcvt.s32.f32 %v130
      %v147 = vcvt.s32.f32 %v131
      %v148 = vcvt.s32.f32 %v132
      %v149 = vcvt.s32.f32 %v133
      %v150 = vcvt.s32.f32 %v134
      %v151 = vcvt.s32.f32 %v135
      %v152 = vadd.f32 %v136, 0.5
      %v153 = vadd.f32 %v137, 0.5
      %v154 = vadd.f32 %v138, 0.5
      %v155 = vadd.f32 %v139, 0.5
      %v156 = vadd.f32 %v140, 0.5
      %v157 = vadd.f32 %v141, 0.5
      %v158 = vadd.f32 %v142, 0.5
      %v159 = vadd.f32 %v143, 0.5
      %v160 = vadd.f32 %v144, 0.5
      %v161 = vadd.f32 %v145, 0.5
      %v162 = vadd.f32 %v146, 0.5
      %v163 = vadd.f32 %v147, 0.5
      %v164 = vadd.f32 %v148, 0.5
      %v165 = vadd.f32 %v149, 0.5
      %v166 = vadd.f32 %v150, 0.5
      %v167 = vadd.f32 %v151, 0.5
      %v168 = vmul.f32 %v152, 0.2
      %v169 = vmul.f32 %v153, 0.2
      %v170 = vmul.f32 %v154, 0.2
      %v171 = vmul.f32 %v155, 0.2
      %v172 = vmul.f32 %v156, 0.2
      %v173 = vmul.f32 %v157, 0.2
      %v174 = vmul.f32 %v158, 0.2
      %v175 = vmul.f32 %v159, 0.2
      %v176 = vmul.f32 %v160, 0.2
      %v177 = vmul.f32 %v161, 0.2
      %v178 = vmul.f32 %v162, 0.2
      %v179 = vmul.f32 %v163, 0.2
      %v180 = vmul.f32 %v164, 0.2
      %v181 = vmul.f32 %v165, 0.2
      %v182 = vmul.f32 %v166, 0.2
      %v183 = vmul.f32 %v167, 0.2
      %v184 = vadd.f32 %v168, 0.0
      %v185 = vadd.f32 %v169, 0.0
      %v186 = vadd.f32 %v170, 0.0
      %v187 = vadd.f32 %v171, 0.0
      %v188 = vadd.f32 %v172, 0.0
      %v189 = vadd.f32 %v173, 0.0
      %v190 = vadd.f32 %v174, 0.0
      %v191 = vadd.f32 %v175, 0.0
      %v192 = vadd.f32 %v176, 0.0
      %v193 = vadd.f32 %v177, 0.0
      %v194 = vadd.f32 %v178, 0.0
      %v195 = vadd.f32 %v179, 0.0
      %v196 = vadd.f32 %v180, 0.0
      %v197 = vadd.f32 %v181, 0.0
      %v198 = vadd.f32 %v182, 0.0
      %v199 = vadd.f32 %v183, 0.0
      %v200 = vmul.f32 %v136, 0.5
      %v201 = vmul.f32 %v137, 0.5
      %v202 = vmul.f32 %v138, 0.5
      %v203 = vmul.f32 %v139, 0.5
      %v204 = vmul.f32 %v140, 0.5
      %v205 = vmul.f32 %v141, 0.5
      %v206 = vmul.f32 %v142, 0.5
      %v207 = vmul.f32 %v143, 0.5
      %v208 = vmul.f32 %v144, 0.5
      %v209 = vmul.f32 %v145, 0.5
      %v210 = vmul.f32 %v146, 0.5
      %v211 = vmul.f32 %v147, 0.5
      %v212 = vmul.f32 %v148, 0.5
      %v213 = vmul.f32 %v149, 0.5
      %v214 = vmul.f32 %v150, 0.5
      %v215 = vmul.f32 %v151, 0.5
      %v216 = vfloor.f32 %v200
      %v217 = vfloor.f32 %v201
      %v218 = vfloor.f32 %v202
      %v219 = vfloor.f32 %v203
      %v220 = vfloor.f32 %v204
      %v221 = vfloor.f32 %v205
      %v222 = vfloor.f32 %v206
      %v223 = vfloor.f32 %v207
      %v224 = vfloor.f32 %v208
      %v225 = vfloor.f32 %v209
      %v226 = vfloor.f32 %v210
      %v227 = vfloor.f32 %v211
      %v228 = vfloor.f32 %v212
      %v229 = vfloor.f32 %v213
      %v230 = vfloor.f32 %v214
      %v231 = vfloor.f32 %v215
      %v232 = vmul.f32 %v216, 2.0
      %v233 = vmul.f32 %v217, 2.0
      %v234 = vmul.f32 %v218, 2.0
      %v235 = vmul.f32 %v219, 2.0
      %v236 = vmul.f32 %v220, 2.0
      %v237 = vmul.f32 %v221, 2.0
      %v238 = vmul.f32 %v222, 2.0
      %v239 = vmul.f32 %v223, 2.0
      %v240 = vmul.f32 %v224, 2.0
      %v241 = vmul.f32 %v225, 2.0
      %v242 = vmul.f32 %v226, 2.0
      %v243 = vmul.f32 %v227, 2.0
      %v244 = vmul.f32 %v228, 2.0
      %v245 = vmul.f32 %v229, 2.0
      %v246 = vmul.f32 %v230, 2.0
      %v247 = vmul.f32 %v231, 2.0
      %v248 = vsub.f32 %v136, %v232
      %v249 = vsub.f32 %v137, %v233
      %v250 = vsub.f32 %v138, %v234
      %v251 = vsub.f32 %v139, %v235
      %v252 = vsub.f32 %v140, %v236
      %v253 = vsub.f32 %v141, %v237
      %v254 = vsub.f32 %v142, %v238
      %v255 = vsub.f32 %v143, %v239
      %v256 = vsub.f32 %v144, %v240
      %v257 = vsub.f32 %v145, %v241
      %v258 = vsub.f32 %v146, %v242
      %v259 = vsub.f32 %v147, %v243
      %v260 = vsub.f32 %v148, %v244
      %v261 = vsub.f32 %v149, %v245
      %v262 = vsub.f32 %v150, %v246
      %v263 = vsub.f32 %v151, %v247
      %vm264 = vcmp.eq.f32.partialorder %v248, 1.0
      %vm265 = vcmp.eq.f32.partialorder %v249, 1.0
      %vm266 = vcmp.eq.f32.partialorder %v250, 1.0
      %vm267 = vcmp.eq.f32.partialorder %v251, 1.0
      %vm268 = vcmp.eq.f32.partialorder %v252, 1.0
      %vm269 = vcmp.eq.f32.partialorder %v253, 1.0
      %vm270 = vcmp.eq.f32.partialorder %v254, 1.0
      %vm271 = vcmp.eq.f32.partialorder %v255, 1.0
      %vm272 = vcmp.eq.f32.partialorder %v256, 1.0
      %vm273 = vcmp.eq.f32.partialorder %v257, 1.0
      %vm274 = vcmp.eq.f32.partialorder %v258, 1.0
      %vm275 = vcmp.eq.f32.partialorder %v259, 1.0
      %vm276 = vcmp.eq.f32.partialorder %v260, 1.0
      %vm277 = vcmp.eq.f32.partialorder %v261, 1.0
      %vm278 = vcmp.eq.f32.partialorder %v262, 1.0
      %vm279 = vcmp.eq.f32.partialorder %v263, 1.0
      %vm280 = vcmp.eq.f32.partialorder %v248, 0.0
      %vm281 = vcmp.eq.f32.partialorder %v249, 0.0
      %vm282 = vcmp.eq.f32.partialorder %v250, 0.0
      %vm283 = vcmp.eq.f32.partialorder %v251, 0.0
      %vm284 = vcmp.eq.f32.partialorder %v252, 0.0
      %vm285 = vcmp.eq.f32.partialorder %v253, 0.0
      %vm286 = vcmp.eq.f32.partialorder %v254, 0.0
      %vm287 = vcmp.eq.f32.partialorder %v255, 0.0
      %vm288 = vcmp.eq.f32.partialorder %v256, 0.0
      %vm289 = vcmp.eq.f32.partialorder %v257, 0.0
      %vm290 = vcmp.eq.f32.partialorder %v258, 0.0
      %vm291 = vcmp.eq.f32.partialorder %v259, 0.0
      %vm292 = vcmp.eq.f32.partialorder %v260, 0.0
      %vm293 = vcmp.eq.f32.partialorder %v261, 0.0
      %vm294 = vcmp.eq.f32.partialorder %v262, 0.0
      %vm295 = vcmp.eq.f32.partialorder %v263, 0.0
      %v296 = vsel %vm280, 1, 0
      %v297 = vsel %vm281, 1, 0
      %v298 = vsel %vm282, 1, 0
      %v299 = vsel %vm283, 1, 0
      %v300 = vsel %vm284, 1, 0
      %v301 = vsel %vm285, 1, 0
      %v302 = vsel %vm286, 1, 0
      %v303 = vsel %vm287, 1, 0
      %v304 = vsel %vm288, 1, 0
      %v305 = vsel %vm289, 1, 0
      %v306 = vsel %vm290, 1, 0
      %v307 = vsel %vm291, 1, 0
      %v308 = vsel %vm292, 1, 0
      %v309 = vsel %vm293, 1, 0
      %v310 = vsel %vm294, 1, 0
      %v311 = vsel %vm295, 1, 0
      %v312 = vrot.slane %v296, 6
      %v313 = vrot.slane %v297, 6
      %v314 = vrot.slane %v298, 6
      %v315 = vrot.slane %v299, 6
      %v316 = vrot.slane %v300, 6
      %v317 = vrot.slane %v301, 6
      %v318 = vrot.slane %v302, 6
      %v319 = vrot.slane %v303, 6
      %v320 = vrot.slane %v304, 6
      %v321 = vrot.slane %v305, 6
      %v322 = vrot.slane %v306, 6
      %v323 = vrot.slane %v307, 6
      %v324 = vrot.slane %v308, 6
      %v325 = vrot.slane %v309, 6
      %v326 = vrot.slane %v310, 6
      %v327 = vrot.slane %v311, 6
      %vm328 = vcmp.ne.s32.totalorder %v312, 0
      %vm329 = vcmp.ne.s32.totalorder %v313, 0
      %vm330 = vcmp.ne.s32.totalorder %v314, 0
      %vm331 = vcmp.ne.s32.totalorder %v315, 0
      %vm332 = vcmp.ne.s32.totalorder %v316, 0
      %vm333 = vcmp.ne.s32.totalorder %v317, 0
      %vm334 = vcmp.ne.s32.totalorder %v318, 0
      %vm335 = vcmp.ne.s32.totalorder %v319, 0
      %vm336 = vcmp.ne.s32.totalorder %v320, 0
      %vm337 = vcmp.ne.s32.totalorder %v321, 0
      %vm338 = vcmp.ne.s32.totalorder %v322, 0
      %vm339 = vcmp.ne.s32.totalorder %v323, 0
      %vm340 = vcmp.ne.s32.totalorder %v324, 0
      %vm341 = vcmp.ne.s32.totalorder %v325, 0
      %vm342 = vcmp.ne.s32.totalorder %v326, 0
      %vm343 = vcmp.ne.s32.totalorder %v327, 0
      %vm344 = vmand %vm264, %vm328
      %vm345 = vmand %vm265, %vm329
      %vm346 = vmand %vm266, %vm330
      %vm347 = vmand %vm267, %vm331
      %vm348 = vmand %vm268, %vm332
      %vm349 = vmand %vm269, %vm333
      %vm350 = vmand %vm270, %vm334
      %vm351 = vmand %vm271, %vm335
      %vm352 = vmand %vm272, %vm336
      %vm353 = vmand %vm273, %vm337
      %vm354 = vmand %vm274, %vm338
      %vm355 = vmand %vm275, %vm339
      %vm356 = vmand %vm276, %vm340
      %vm357 = vmand %vm277, %vm341
      %vm358 = vmand %vm278, %vm342
      %vm359 = vmand %vm279, %vm343
      %v360 = vrot.slane %v296, 7
      %v361 = vrot.slane %v297, 7
      %v362 = vrot.slane %v298, 7
      %v363 = vrot.slane %v299, 7
      %v364 = vrot.slane %v300, 7
      %v365 = vrot.slane %v301, 7
      %v366 = vrot.slane %v302, 7
      %v367 = vrot.slane %v303, 7
      %v368 = vrot.slane %v304, 7
      %v369 = vrot.slane %v305, 7
      %v370 = vrot.slane %v306, 7
      %v371 = vrot.slane %v307, 7
      %v372 = vrot.slane %v308, 7
      %v373 = vrot.slane %v309, 7
      %v374 = vrot.slane %v310, 7
      %v375 = vrot.slane %v311, 7
      %vm376 = vcmp.ne.s32.totalorder %v360, 0
      %vm377 = vcmp.ne.s32.totalorder %v361, 0
      %vm378 = vcmp.ne.s32.totalorder %v362, 0
      %vm379 = vcmp.ne.s32.totalorder %v363, 0
      %vm380 = vcmp.ne.s32.totalorder %v364, 0
      %vm381 = vcmp.ne.s32.totalorder %v365, 0
      %vm382 = vcmp.ne.s32.totalorder %v366, 0
      %vm383 = vcmp.ne.s32.totalorder %v367, 0
      %vm384 = vcmp.ne.s32.totalorder %v368, 0
      %vm385 = vcmp.ne.s32.totalorder %v369, 0
      %vm386 = vcmp.ne.s32.totalorder %v370, 0
      %vm387 = vcmp.ne.s32.totalorder %v371, 0
      %vm388 = vcmp.ne.s32.totalorder %v372, 0
      %vm389 = vcmp.ne.s32.totalorder %v373, 0
      %vm390 = vcmp.ne.s32.totalorder %v374, 0
      %vm391 = vcmp.ne.s32.totalorder %v375, 0
      %vm392 = vmand %vm344, %vm376
      %vm393 = vmand %vm345, %vm377
      %vm394 = vmand %vm346, %vm378
      %vm395 = vmand %vm347, %vm379
      %vm396 = vmand %vm348, %vm380
      %vm397 = vmand %vm349, %vm381
      %vm398 = vmand %vm350, %vm382
      %vm399 = vmand %vm351, %vm383
      %vm400 = vmand %vm352, %vm384
      %vm401 = vmand %vm353, %vm385
      %vm402 = vmand %vm354, %vm386
      %vm403 = vmand %vm355, %vm387
      %vm404 = vmand %vm356, %vm388
      %vm405 = vmand %vm357, %vm389
      %vm406 = vmand %vm358, %vm390
      %vm407 = vmand %vm359, %vm391
      %v408 = vsel %vm392, 1, 0
      %v409 = vsel %vm393, 1, 0
      %v410 = vsel %vm394, 1, 0
      %v411 = vsel %vm395, 1, 0
      %v412 = vsel %vm396, 1, 0
      %v413 = vsel %vm397, 1, 0
      %v414 = vsel %vm398, 1, 0
      %v415 = vsel %vm399, 1, 0
      %v416 = vsel %vm400, 1, 0
      %v417 = vsel %vm401, 1, 0
      %v418 = vsel %vm402, 1, 0
      %v419 = vsel %vm403, 1, 0
      %v420 = vsel %vm404, 1, 0
      %v421 = vsel %vm405, 1, 0
      %v422 = vsel %vm406, 1, 0
      %v423 = vsel %vm407, 1, 0
      %v424 = vcvt.s32.f32 %v408
      %v425 = vcvt.s32.f32 %v409
      %v426 = vcvt.s32.f32 %v410
      %v427 = vcvt.s32.f32 %v411
      %v428 = vcvt.s32.f32 %v412
      %v429 = vcvt.s32.f32 %v413
      %v430 = vcvt.s32.f32 %v414
      %v431 = vcvt.s32.f32 %v415
      %v432 = vcvt.s32.f32 %v416
      %v433 = vcvt.s32.f32 %v417
      %v434 = vcvt.s32.f32 %v418
      %v435 = vcvt.s32.f32 %v419
      %v436 = vcvt.s32.f32 %v420
      %v437 = vcvt.s32.f32 %v421
      %v438 = vcvt.s32.f32 %v422
      %v439 = vcvt.s32.f32 %v423
      %v456 = vlaneseq
      %v457 = vshrl.u32 %v456, 7
      %v458 = vsub.s32 0, %v457
      %v459 = vrot.slane %v136, %v458
      %v460 = vlaneseq
      %v461 = vshrl.u32 %v460, 7
      %v462 = vsub.s32 4, %v461
      %v463 = vrot.slane %v136, %v462
      %v464 = vlaneseq
      %v465 = vshrl.u32 %v464, 7
      %v466 = vsub.s32 0, %v465
      %v467 = vrot.slane %v137, %v466
      %v468 = vlaneseq
      %v469 = vshrl.u32 %v468, 7
      %v470 = vsub.s32 4, %v469
      %v471 = vrot.slane %v137, %v470
      %v472 = vlaneseq
      %v473 = vshrl.u32 %v472, 7
      %v474 = vsub.s32 0, %v473
      %v475 = vrot.slane %v138, %v474
      %v476 = vlaneseq
      %v477 = vshrl.u32 %v476, 7
      %v478 = vsub.s32 4, %v477
      %v479 = vrot.slane %v138, %v478
      %v480 = vlaneseq
      %v481 = vshrl.u32 %v480, 7
      %v482 = vsub.s32 0, %v481
      %v483 = vrot.slane %v139, %v482
      %v484 = vlaneseq
      %v485 = vshrl.u32 %v484, 7
      %v486 = vsub.s32 4, %v485
      %v487 = vrot.slane %v139, %v486
      %v488 = vlaneseq
      %v489 = vshrl.u32 %v488, 7
      %v490 = vsub.s32 0, %v489
      %v491 = vrot.slane %v140, %v490
      %v492 = vlaneseq
      %v493 = vshrl.u32 %v492, 7
      %v494 = vsub.s32 4, %v493
      %v495 = vrot.slane %v140, %v494
      %v496 = vlaneseq
      %v497 = vshrl.u32 %v496, 7
      %v498 = vsub.s32 0, %v497
      %v499 = vrot.slane %v141, %v498
      %v500 = vlaneseq
      %v501 = vshrl.u32 %v500, 7
      %v502 = vsub.s32 4, %v501
      %v503 = vrot.slane %v141, %v502
      %v504 = vlaneseq
      %v505 = vshrl.u32 %v504, 7
      %v506 = vsub.s32 0, %v505
      %v507 = vrot.slane %v142, %v506
      %v508 = vlaneseq
      %v509 = vshrl.u32 %v508, 7
      %v510 = vsub.s32 4, %v509
      %v511 = vrot.slane %v142, %v510
      %v512 = vlaneseq
      %v513 = vshrl.u32 %v512, 7
      %v514 = vsub.s32 0, %v513
      %v515 = vrot.slane %v143, %v514
      %v516 = vlaneseq
      %v517 = vshrl.u32 %v516, 7
      %v518 = vsub.s32 4, %v517
      %v519 = vrot.slane %v143, %v518
      %v520 = vlaneseq
      %v521 = vshrl.u32 %v520, 7
      %v522 = vsub.s32 0, %v521
      %v523 = vrot.slane %v144, %v522
      %v524 = vlaneseq
      %v525 = vshrl.u32 %v524, 7
      %v526 = vsub.s32 4, %v525
      %v527 = vrot.slane %v144, %v526
      %v528 = vlaneseq
      %v529 = vshrl.u32 %v528, 7
      %v530 = vsub.s32 0, %v529
      %v531 = vrot.slane %v145, %v530
      %v532 = vlaneseq
      %v533 = vshrl.u32 %v532, 7
      %v534 = vsub.s32 4, %v533
      %v535 = vrot.slane %v145, %v534
      %v536 = vlaneseq
      %v537 = vshrl.u32 %v536, 7
      %v538 = vsub.s32 0, %v537
      %v539 = vrot.slane %v146, %v538
      %v540 = vlaneseq
      %v541 = vshrl.u32 %v540, 7
      %v542 = vsub.s32 4, %v541
      %v543 = vrot.slane %v146, %v542
      %v544 = vlaneseq
      %v545 = vshrl.u32 %v544, 7
      %v546 = vsub.s32 0, %v545
      %v547 = vrot.slane %v147, %v546
      %v548 = vlaneseq
      %v549 = vshrl.u32 %v548, 7
      %v550 = vsub.s32 4, %v549
      %v551 = vrot.slane %v147, %v550
      %v552 = vlaneseq
      %v553 = vshrl.u32 %v552, 7
      %v554 = vsub.s32 0, %v553
      %v555 = vrot.slane %v148, %v554
      %v556 = vlaneseq
      %v557 = vshrl.u32 %v556, 7
      %v558 = vsub.s32 4, %v557
      %v559 = vrot.slane %v148, %v558
      %v560 = vlaneseq
      %v561 = vshrl.u32 %v560, 7
      %v562 = vsub.s32 0, %v561
      %v563 = vrot.slane %v149, %v562
      %v564 = vlaneseq
      %v565 = vshrl.u32 %v564, 7
      %v566 = vsub.s32 4, %v565
      %v567 = vrot.slane %v149, %v566
      %v568 = vlaneseq
      %v569 = vshrl.u32 %v568, 7
      %v570 = vsub.s32 0, %v569
      %v571 = vrot.slane %v150, %v570
      %v572 = vlaneseq
      %v573 = vshrl.u32 %v572, 7
      %v574 = vsub.s32 4, %v573
      %v575 = vrot.slane %v150, %v574
      %v576 = vlaneseq
      %v577 = vshrl.u32 %v576, 7
      %v578 = vsub.s32 0, %v577
      %v579 = vrot.slane %v151, %v578
      %v580 = vlaneseq
      %v581 = vshrl.u32 %v580, 7
      %v582 = vsub.s32 4, %v581
      %v583 = vrot.slane %v151, %v582
      %v632 = vlaneseq
      %v633 = vshrl.u32 %v632, 7
      %v634 = vsub.s32 1, %v633
      %v635 = vrot.slane %v184, %v634
      %v636 = vlaneseq
      %v637 = vshrl.u32 %v636, 7
      %v638 = vsub.s32 5, %v637
      %v639 = vrot.slane %v184, %v638
      %v640 = vlaneseq
      %v641 = vshrl.u32 %v640, 7
      %v642 = vsub.s32 1, %v641
      %v643 = vrot.slane %v185, %v642
      %v644 = vlaneseq
      %v645 = vshrl.u32 %v644, 7
      %v646 = vsub.s32 5, %v645
      %v647 = vrot.slane %v185, %v646
      %v648 = vlaneseq
      %v649 = vshrl.u32 %v648, 7
      %v650 = vsub.s32 1, %v649
      %v651 = vrot.slane %v186, %v650
      %v652 = vlaneseq
      %v653 = vshrl.u32 %v652, 7
      %v654 = vsub.s32 5, %v653
      %v655 = vrot.slane %v186, %v654
      %v656 = vlaneseq
      %v657 = vshrl.u32 %v656, 7
      %v658 = vsub.s32 1, %v657
      %v659 = vrot.slane %v187, %v658
      %v660 = vlaneseq
      %v661 = vshrl.u32 %v660, 7
      %v662 = vsub.s32 5, %v661
      %v663 = vrot.slane %v187, %v662
      %v664 = vlaneseq
      %v665 = vshrl.u32 %v664, 7
      %v666 = vsub.s32 1, %v665
      %v667 = vrot.slane %v188, %v666
      %v668 = vlaneseq
      %v669 = vshrl.u32 %v668, 7
      %v670 = vsub.s32 5, %v669
      %v671 = vrot.slane %v188, %v670
      %v672 = vlaneseq
      %v673 = vshrl.u32 %v672, 7
      %v674 = vsub.s32 1, %v673
      %v675 = vrot.slane %v189, %v674
      %v676 = vlaneseq
      %v677 = vshrl.u32 %v676, 7
      %v678 = vsub.s32 5, %v677
      %v679 = vrot.slane %v189, %v678
      %v680 = vlaneseq
      %v681 = vshrl.u32 %v680, 7
      %v682 = vsub.s32 1, %v681
      %v683 = vrot.slane %v190, %v682
      %v684 = vlaneseq
      %v685 = vshrl.u32 %v684, 7
      %v686 = vsub.s32 5, %v685
      %v687 = vrot.slane %v190, %v686
      %v688 = vlaneseq
      %v689 = vshrl.u32 %v688, 7
      %v690 = vsub.s32 1, %v689
      %v691 = vrot.slane %v191, %v690
      %v692 = vlaneseq
      %v693 = vshrl.u32 %v692, 7
      %v694 = vsub.s32 5, %v693
      %v695 = vrot.slane %v191, %v694
      %v696 = vlaneseq
      %v697 = vshrl.u32 %v696, 7
      %v698 = vsub.s32 1, %v697
      %v699 = vrot.slane %v192, %v698
      %v700 = vlaneseq
      %v701 = vshrl.u32 %v700, 7
      %v702 = vsub.s32 5, %v701
      %v703 = vrot.slane %v192, %v702
      %v704 = vlaneseq
      %v705 = vshrl.u32 %v704, 7
      %v706 = vsub.s32 1, %v705
      %v707 = vrot.slane %v193, %v706
      %v708 = vlaneseq
      %v709 = vshrl.u32 %v708, 7
      %v710 = vsub.s32 5, %v709
      %v711 = vrot.slane %v193, %v710
      %v712 = vlaneseq
      %v713 = vshrl.u32 %v712, 7
      %v714 = vsub.s32 1, %v713
      %v715 = vrot.slane %v194, %v714
      %v716 = vlaneseq
      %v717 = vshrl.u32 %v716, 7
      %v718 = vsub.s32 5, %v717
      %v719 = vrot.slane %v194, %v718
      %v720 = vlaneseq
      %v721 = vshrl.u32 %v720, 7
      %v722 = vsub.s32 1, %v721
      %v723 = vrot.slane %v195, %v722
      %v724 = vlaneseq
      %v725 = vshrl.u32 %v724, 7
      %v726 = vsub.s32 5, %v725
      %v727 = vrot.slane %v195, %v726
      %v728 = vlaneseq
      %v729 = vshrl.u32 %v728, 7
      %v730 = vsub.s32 1, %v729
      %v731 = vrot.slane %v196, %v730
      %v732 = vlaneseq
      %v733 = vshrl.u32 %v732, 7
      %v734 = vsub.s32 5, %v733
      %v735 = vrot.slane %v196, %v734
      %v736 = vlaneseq
      %v737 = vshrl.u32 %v736, 7
      %v738 = vsub.s32 1, %v737
      %v739 = vrot.slane %v197, %v738
      %v740 = vlaneseq
      %v741 = vshrl.u32 %v740, 7
      %v742 = vsub.s32 5, %v741
      %v743 = vrot.slane %v197, %v742
      %v744 = vlaneseq
      %v745 = vshrl.u32 %v744, 7
      %v746 = vsub.s32 1, %v745
      %v747 = vrot.slane %v198, %v746
      %v748 = vlaneseq
      %v749 = vshrl.u32 %v748, 7
      %v750 = vsub.s32 5, %v749
      %v751 = vrot.slane %v198, %v750
      %v752 = vlaneseq
      %v753 = vshrl.u32 %v752, 7
      %v754 = vsub.s32 1, %v753
      %v755 = vrot.slane %v199, %v754
      %v756 = vlaneseq
      %v757 = vshrl.u32 %v756, 7
      %v758 = vsub.s32 5, %v757
      %v759 = vrot.slane %v199, %v758
      %v792 = vlaneseq
      %v793 = vshrl.u32 %v792, 7
      %v794 = vsub.s32 2, %v793
      %v795 = vrot.slane %v184, %v794
      %v796 = vlaneseq
      %v797 = vshrl.u32 %v796, 7
      %v798 = vsub.s32 6, %v797
      %v799 = vrot.slane %v184, %v798
      %v800 = vlaneseq
      %v801 = vshrl.u32 %v800, 7
      %v802 = vsub.s32 2, %v801
      %v803 = vrot.slane %v185, %v802
      %v804 = vlaneseq
      %v805 = vshrl.u32 %v804, 7
      %v806 = vsub.s32 6, %v805
      %v807 = vrot.slane %v185, %v806
      %v808 = vlaneseq
      %v809 = vshrl.u32 %v808, 7
      %v810 = vsub.s32 2, %v809
      %v811 = vrot.slane %v186, %v810
      %v812 = vlaneseq
      %v813 = vshrl.u32 %v812, 7
      %v814 = vsub.s32 6, %v813
      %v815 = vrot.slane %v186, %v814
      %v816 = vlaneseq
      %v817 = vshrl.u32 %v816, 7
      %v818 = vsub.s32 2, %v817
      %v819 = vrot.slane %v187, %v818
      %v820 = vlaneseq
      %v821 = vshrl.u32 %v820, 7
      %v822 = vsub.s32 6, %v821
      %v823 = vrot.slane %v187, %v822
      %v824 = vlaneseq
      %v825 = vshrl.u32 %v824, 7
      %v826 = vsub.s32 2, %v825
      %v827 = vrot.slane %v188, %v826
      %v828 = vlaneseq
      %v829 = vshrl.u32 %v828, 7
      %v830 = vsub.s32 6, %v829
      %v831 = vrot.slane %v188, %v830
      %v832 = vlaneseq
      %v833 = vshrl.u32 %v832, 7
      %v834 = vsub.s32 2, %v833
      %v835 = vrot.slane %v189, %v834
      %v836 = vlaneseq
      %v837 = vshrl.u32 %v836, 7
      %v838 = vsub.s32 6, %v837
      %v839 = vrot.slane %v189, %v838
      %v840 = vlaneseq
      %v841 = vshrl.u32 %v840, 7
      %v842 = vsub.s32 2, %v841
      %v843 = vrot.slane %v190, %v842
      %v844 = vlaneseq
      %v845 = vshrl.u32 %v844, 7
      %v846 = vsub.s32 6, %v845
      %v847 = vrot.slane %v190, %v846
      %v848 = vlaneseq
      %v849 = vshrl.u32 %v848, 7
      %v850 = vsub.s32 2, %v849
      %v851 = vrot.slane %v191, %v850
      %v852 = vlaneseq
      %v853 = vshrl.u32 %v852, 7
      %v854 = vsub.s32 6, %v853
      %v855 = vrot.slane %v191, %v854
      %v856 = vlaneseq
      %v857 = vshrl.u32 %v856, 7
      %v858 = vsub.s32 2, %v857
      %v859 = vrot.slane %v192, %v858
      %v860 = vlaneseq
      %v861 = vshrl.u32 %v860, 7
      %v862 = vsub.s32 6, %v861
      %v863 = vrot.slane %v192, %v862
      %v864 = vlaneseq
      %v865 = vshrl.u32 %v864, 7
      %v866 = vsub.s32 2, %v865
      %v867 = vrot.slane %v193, %v866
      %v868 = vlaneseq
      %v869 = vshrl.u32 %v868, 7
      %v870 = vsub.s32 6, %v869
      %v871 = vrot.slane %v193, %v870
      %v872 = vlaneseq
      %v873 = vshrl.u32 %v872, 7
      %v874 = vsub.s32 2, %v873
      %v875 = vrot.slane %v194, %v874
      %v876 = vlaneseq
      %v877 = vshrl.u32 %v876, 7
      %v878 = vsub.s32 6, %v877
      %v879 = vrot.slane %v194, %v878
      %v880 = vlaneseq
      %v881 = vshrl.u32 %v880, 7
      %v882 = vsub.s32 2, %v881
      %v883 = vrot.slane %v195, %v882
      %v884 = vlaneseq
      %v885 = vshrl.u32 %v884, 7
      %v886 = vsub.s32 6, %v885
      %v887 = vrot.slane %v195, %v886
      %v888 = vlaneseq
      %v889 = vshrl.u32 %v888, 7
      %v890 = vsub.s32 2, %v889
      %v891 = vrot.slane %v196, %v890
      %v892 = vlaneseq
      %v893 = vshrl.u32 %v892, 7
      %v894 = vsub.s32 6, %v893
      %v895 = vrot.slane %v196, %v894
      %v896 = vlaneseq
      %v897 = vshrl.u32 %v896, 7
      %v898 = vsub.s32 2, %v897
      %v899 = vrot.slane %v197, %v898
      %v900 = vlaneseq
      %v901 = vshrl.u32 %v900, 7
      %v902 = vsub.s32 6, %v901
      %v903 = vrot.slane %v197, %v902
      %v904 = vlaneseq
      %v905 = vshrl.u32 %v904, 7
      %v906 = vsub.s32 2, %v905
      %v907 = vrot.slane %v198, %v906
      %v908 = vlaneseq
      %v909 = vshrl.u32 %v908, 7
      %v910 = vsub.s32 6, %v909
      %v911 = vrot.slane %v198, %v910
      %v912 = vlaneseq
      %v913 = vshrl.u32 %v912, 7
      %v914 = vsub.s32 2, %v913
      %v915 = vrot.slane %v199, %v914
      %v916 = vlaneseq
      %v917 = vshrl.u32 %v916, 7
      %v918 = vsub.s32 6, %v917
      %v919 = vrot.slane %v199, %v918
      %v952 = vlaneseq
      %v953 = vshrl.u32 %v952, 7
      %v954 = vsub.s32 3, %v953
      %v955 = vrot.slane %v184, %v954
      %v956 = vlaneseq
      %v957 = vshrl.u32 %v956, 7
      %v958 = vsub.s32 7, %v957
      %v959 = vrot.slane %v184, %v958
      %v960 = vlaneseq
      %v961 = vshrl.u32 %v960, 7
      %v962 = vsub.s32 3, %v961
      %v963 = vrot.slane %v185, %v962
      %v964 = vlaneseq
      %v965 = vshrl.u32 %v964, 7
      %v966 = vsub.s32 7, %v965
      %v967 = vrot.slane %v185, %v966
      %v968 = vlaneseq
      %v969 = vshrl.u32 %v968, 7
      %v970 = vsub.s32 3, %v969
      %v971 = vrot.slane %v186, %v970
      %v972 = vlaneseq
      %v973 = vshrl.u32 %v972, 7
      %v974 = vsub.s32 7, %v973
      %v975 = vrot.slane %v186, %v974
      %v976 = vlaneseq
      %v977 = vshrl.u32 %v976, 7
      %v978 = vsub.s32 3, %v977
      %v979 = vrot.slane %v187, %v978
      %v980 = vlaneseq
      %v981 = vshrl.u32 %v980, 7
      %v982 = vsub.s32 7, %v981
      %v983 = vrot.slane %v187, %v982
      %v984 = vlaneseq
      %v985 = vshrl.u32 %v984, 7
      %v986 = vsub.s32 3, %v985
      %v987 = vrot.slane %v188, %v986
      %v988 = vlaneseq
      %v989 = vshrl.u32 %v988, 7
      %v990 = vsub.s32 7, %v989
      %v991 = vrot.slane %v188, %v990
      %v992 = vlaneseq
      %v993 = vshrl.u32 %v992, 7
      %v994 = vsub.s32 3, %v993
      %v995 = vrot.slane %v189, %v994
      %v996 = vlaneseq
      %v997 = vshrl.u32 %v996, 7
      %v998 = vsub.s32 7, %v997
      %v999 = vrot.slane %v189, %v998
      %v1000 = vlaneseq
      %v1001 = vshrl.u32 %v1000, 7
      %v1002 = vsub.s32 3, %v1001
      %v1003 = vrot.slane %v190, %v1002
      %v1004 = vlaneseq
      %v1005 = vshrl.u32 %v1004, 7
      %v1006 = vsub.s32 7, %v1005
      %v1007 = vrot.slane %v190, %v1006
      %v1008 = vlaneseq
      %v1009 = vshrl.u32 %v1008, 7
      %v1010 = vsub.s32 3, %v1009
      %v1011 = vrot.slane %v191, %v1010
      %v1012 = vlaneseq
      %v1013 = vshrl.u32 %v1012, 7
      %v1014 = vsub.s32 7, %v1013
      %v1015 = vrot.slane %v191, %v1014
      %v1016 = vlaneseq
      %v1017 = vshrl.u32 %v1016, 7
      %v1018 = vsub.s32 3, %v1017
      %v1019 = vrot.slane %v192, %v1018
      %v1020 = vlaneseq
      %v1021 = vshrl.u32 %v1020, 7
      %v1022 = vsub.s32 7, %v1021
      %v1023 = vrot.slane %v192, %v1022
      %v1024 = vlaneseq
      %v1025 = vshrl.u32 %v1024, 7
      %v1026 = vsub.s32 3, %v1025
      %v1027 = vrot.slane %v193, %v1026
      %v1028 = vlaneseq
      %v1029 = vshrl.u32 %v1028, 7
      %v1030 = vsub.s32 7, %v1029
      %v1031 = vrot.slane %v193, %v1030
      %v1032 = vlaneseq
      %v1033 = vshrl.u32 %v1032, 7
      %v1034 = vsub.s32 3, %v1033
      %v1035 = vrot.slane %v194, %v1034
      %v1036 = vlaneseq
      %v1037 = vshrl.u32 %v1036, 7
      %v1038 = vsub.s32 7, %v1037
      %v1039 = vrot.slane %v194, %v1038
      %v1040 = vlaneseq
      %v1041 = vshrl.u32 %v1040, 7
      %v1042 = vsub.s32 3, %v1041
      %v1043 = vrot.slane %v195, %v1042
      %v1044 = vlaneseq
      %v1045 = vshrl.u32 %v1044, 7
      %v1046 = vsub.s32 7, %v1045
      %v1047 = vrot.slane %v195, %v1046
      %v1048 = vlaneseq
      %v1049 = vshrl.u32 %v1048, 7
      %v1050 = vsub.s32 3, %v1049
      %v1051 = vrot.slane %v196, %v1050
      %v1052 = vlaneseq
      %v1053 = vshrl.u32 %v1052, 7
      %v1054 = vsub.s32 7, %v1053
      %v1055 = vrot.slane %v196, %v1054
      %v1056 = vlaneseq
      %v1057 = vshrl.u32 %v1056, 7
      %v1058 = vsub.s32 3, %v1057
      %v1059 = vrot.slane %v197, %v1058
      %v1060 = vlaneseq
      %v1061 = vshrl.u32 %v1060, 7
      %v1062 = vsub.s32 7, %v1061
      %v1063 = vrot.slane %v197, %v1062
      %v1064 = vlaneseq
      %v1065 = vshrl.u32 %v1064, 7
      %v1066 = vsub.s32 3, %v1065
      %v1067 = vrot.slane %v198, %v1066
      %v1068 = vlaneseq
      %v1069 = vshrl.u32 %v1068, 7
      %v1070 = vsub.s32 7, %v1069
      %v1071 = vrot.slane %v198, %v1070
      %v1072 = vlaneseq
      %v1073 = vshrl.u32 %v1072, 7
      %v1074 = vsub.s32 3, %v1073
      %v1075 = vrot.slane %v199, %v1074
      %v1076 = vlaneseq
      %v1077 = vshrl.u32 %v1076, 7
      %v1078 = vsub.s32 7, %v1077
      %v1079 = vrot.slane %v199, %v1078
      %v1128 = vlaneseq
      %v1129 = vshrl.u32 %v1128, 7
      %v1130 = vsub.s32 3, %v1129
      %v1131 = vrot.slane %v424, %v1130
      %v1132 = vlaneseq
      %v1133 = vshrl.u32 %v1132, 7
      %v1134 = vsub.s32 7, %v1133
      %v1135 = vrot.slane %v424, %v1134
      %v1136 = vlaneseq
      %v1137 = vshrl.u32 %v1136, 7
      %v1138 = vsub.s32 3, %v1137
      %v1139 = vrot.slane %v425, %v1138
      %v1140 = vlaneseq
      %v1141 = vshrl.u32 %v1140, 7
      %v1142 = vsub.s32 7, %v1141
      %v1143 = vrot.slane %v425, %v1142
      %v1144 = vlaneseq
      %v1145 = vshrl.u32 %v1144, 7
      %v1146 = vsub.s32 3, %v1145
      %v1147 = vrot.slane %v426, %v1146
      %v1148 = vlaneseq
      %v1149 = vshrl.u32 %v1148, 7
      %v1150 = vsub.s32 7, %v1149
      %v1151 = vrot.slane %v426, %v1150
      %v1152 = vlaneseq
      %v1153 = vshrl.u32 %v1152, 7
      %v1154 = vsub.s32 3, %v1153
      %v1155 = vrot.slane %v427, %v1154
      %v1156 = vlaneseq
      %v1157 = vshrl.u32 %v1156, 7
      %v1158 = vsub.s32 7, %v1157
      %v1159 = vrot.slane %v427, %v1158
      %v1160 = vlaneseq
      %v1161 = vshrl.u32 %v1160, 7
      %v1162 = vsub.s32 3, %v1161
      %v1163 = vrot.slane %v428, %v1162
      %v1164 = vlaneseq
      %v1165 = vshrl.u32 %v1164, 7
      %v1166 = vsub.s32 7, %v1165
      %v1167 = vrot.slane %v428, %v1166
      %v1168 = vlaneseq
      %v1169 = vshrl.u32 %v1168, 7
      %v1170 = vsub.s32 3, %v1169
      %v1171 = vrot.slane %v429, %v1170
      %v1172 = vlaneseq
      %v1173 = vshrl.u32 %v1172, 7
      %v1174 = vsub.s32 7, %v1173
      %v1175 = vrot.slane %v429, %v1174
      %v1176 = vlaneseq
      %v1177 = vshrl.u32 %v1176, 7
      %v1178 = vsub.s32 3, %v1177
      %v1179 = vrot.slane %v430, %v1178
      %v1180 = vlaneseq
      %v1181 = vshrl.u32 %v1180, 7
      %v1182 = vsub.s32 7, %v1181
      %v1183 = vrot.slane %v430, %v1182
      %v1184 = vlaneseq
      %v1185 = vshrl.u32 %v1184, 7
      %v1186 = vsub.s32 3, %v1185
      %v1187 = vrot.slane %v431, %v1186
      %v1188 = vlaneseq
      %v1189 = vshrl.u32 %v1188, 7
      %v1190 = vsub.s32 7, %v1189
      %v1191 = vrot.slane %v431, %v1190
      %v1192 = vlaneseq
      %v1193 = vshrl.u32 %v1192, 7
      %v1194 = vsub.s32 3, %v1193
      %v1195 = vrot.slane %v432, %v1194
      %v1196 = vlaneseq
      %v1197 = vshrl.u32 %v1196, 7
      %v1198 = vsub.s32 7, %v1197
      %v1199 = vrot.slane %v432, %v1198
      %v1200 = vlaneseq
      %v1201 = vshrl.u32 %v1200, 7
      %v1202 = vsub.s32 3, %v1201
      %v1203 = vrot.slane %v433, %v1202
      %v1204 = vlaneseq
      %v1205 = vshrl.u32 %v1204, 7
      %v1206 = vsub.s32 7, %v1205
      %v1207 = vrot.slane %v433, %v1206
      %v1208 = vlaneseq
      %v1209 = vshrl.u32 %v1208, 7
      %v1210 = vsub.s32 3, %v1209
      %v1211 = vrot.slane %v434, %v1210
      %v1212 = vlaneseq
      %v1213 = vshrl.u32 %v1212, 7
      %v1214 = vsub.s32 7, %v1213
      %v1215 = vrot.slane %v434, %v1214
      %v1216 = vlaneseq
      %v1217 = vshrl.u32 %v1216, 7
      %v1218 = vsub.s32 3, %v1217
      %v1219 = vrot.slane %v435, %v1218
      %v1220 = vlaneseq
      %v1221 = vshrl.u32 %v1220, 7
      %v1222 = vsub.s32 7, %v1221
      %v1223 = vrot.slane %v435, %v1222
      %v1224 = vlaneseq
      %v1225 = vshrl.u32 %v1224, 7
      %v1226 = vsub.s32 3, %v1225
      %v1227 = vrot.slane %v436, %v1226
      %v1228 = vlaneseq
      %v1229 = vshrl.u32 %v1228, 7
      %v1230 = vsub.s32 7, %v1229
      %v1231 = vrot.slane %v436, %v1230
      %v1232 = vlaneseq
      %v1233 = vshrl.u32 %v1232, 7
      %v1234 = vsub.s32 3, %v1233
      %v1235 = vrot.slane %v437, %v1234
      %v1236 = vlaneseq
      %v1237 = vshrl.u32 %v1236, 7
      %v1238 = vsub.s32 7, %v1237
      %v1239 = vrot.slane %v437, %v1238
      %v1240 = vlaneseq
      %v1241 = vshrl.u32 %v1240, 7
      %v1242 = vsub.s32 3, %v1241
      %v1243 = vrot.slane %v438, %v1242
      %v1244 = vlaneseq
      %v1245 = vshrl.u32 %v1244, 7
      %v1246 = vsub.s32 7, %v1245
      %v1247 = vrot.slane %v438, %v1246
      %v1248 = vlaneseq
      %v1249 = vshrl.u32 %v1248, 7
      %v1250 = vsub.s32 3, %v1249
      %v1251 = vrot.slane %v439, %v1250
      %v1252 = vlaneseq
      %v1253 = vshrl.u32 %v1252, 7
      %v1254 = vsub.s32 7, %v1253
      %v1255 = vrot.slane %v439, %v1254
      %vm1288 = vcmask 1040384
      %v1289 = vsel %vm1288, %v459, %v635
      %v1290 = vsel %vm1288, %v463, %v639
      %v1291 = vsel %vm1288, %v467, %v643
      %v1292 = vsel %vm1288, %v471, %v647
      %v1293 = vsel %vm1288, %v475, %v651
      %v1294 = vsel %vm1288, %v479, %v655
      %v1295 = vsel %vm1288, %v483, %v659
      %v1296 = vsel %vm1288, %v487, %v663
      %v1297 = vsel %vm1288, %v491, %v667
      %v1298 = vsel %vm1288, %v495, %v671
      %v1299 = vsel %vm1288, %v499, %v675
      %v1300 = vsel %vm1288, %v503, %v679
      %v1301 = vsel %vm1288, %v507, %v683
      %v1302 = vsel %vm1288, %v511, %v687
      %v1303 = vsel %vm1288, %v515, %v691
      %v1304 = vsel %vm1288, %v519, %v695
      %v1305 = vsel %vm1288, %v523, %v699
      %v1306 = vsel %vm1288, %v527, %v703
      %v1307 = vsel %vm1288, %v531, %v707
      %v1308 = vsel %vm1288, %v535, %v711
      %v1309 = vsel %vm1288, %v539, %v715
      %v1310 = vsel %vm1288, %v543, %v719
      %v1311 = vsel %vm1288, %v547, %v723
      %v1312 = vsel %vm1288, %v551, %v727
      %v1313 = vsel %vm1288, %v555, %v731
      %v1314 = vsel %vm1288, %v559, %v735
      %v1315 = vsel %vm1288, %v563, %v739
      %v1316 = vsel %vm1288, %v567, %v743
      %v1317 = vsel %vm1288, %v571, %v747
      %v1318 = vsel %vm1288, %v575, %v751
      %v1319 = vsel %vm1288, %v579, %v755
      %v1320 = vsel %vm1288, %v583, %v759
      %vm1321 = vcmask 1041408
      %v1322 = vsel %vm1321, %v1289, %v795
      %v1323 = vsel %vm1321, %v1290, %v799
      %v1324 = vsel %vm1321, %v1291, %v803
      %v1325 = vsel %vm1321, %v1292, %v807
      %v1326 = vsel %vm1321, %v1293, %v811
      %v1327 = vsel %vm1321, %v1294, %v815
      %v1328 = vsel %vm1321, %v1295, %v819
      %v1329 = vsel %vm1321, %v1296, %v823
      %v1330 = vsel %vm1321, %v1297, %v827
      %v1331 = vsel %vm1321, %v1298, %v831
      %v1332 = vsel %vm1321, %v1299, %v835
      %v1333 = vsel %vm1321, %v1300, %v839
      %v1334 = vsel %vm1321, %v1301, %v843
      %v1335 = vsel %vm1321, %v1302, %v847
      %v1336 = vsel %vm1321, %v1303, %v851
      %v1337 = vsel %vm1321, %v1304, %v855
      %v1338 = vsel %vm1321, %v1305, %v859
      %v1339 = vsel %vm1321, %v1306, %v863
      %v1340 = vsel %vm1321, %v1307, %v867
      %v1341 = vsel %vm1321, %v1308, %v871
      %v1342 = vsel %vm1321, %v1309, %v875
      %v1343 = vsel %vm1321, %v1310, %v879
      %v1344 = vsel %vm1321, %v1311, %v883
      %v1345 = vsel %vm1321, %v1312, %v887
      %v1346 = vsel %vm1321, %v1313, %v891
      %v1347 = vsel %vm1321, %v1314, %v895
      %v1348 = vsel %vm1321, %v1315, %v899
      %v1349 = vsel %vm1321, %v1316, %v903
      %v1350 = vsel %vm1321, %v1317, %v907
      %v1351 = vsel %vm1321, %v1318, %v911
      %v1352 = vsel %vm1321, %v1319, %v915
      %v1353 = vsel %vm1321, %v1320, %v919
      %vm1354 = vcmask 1042432
      %v1355 = vsel %vm1354, %v1322, %v955
      %v1356 = vsel %vm1354, %v1323, %v959
      %v1357 = vsel %vm1354, %v1324, %v963
      %v1358 = vsel %vm1354, %v1325, %v967
      %v1359 = vsel %vm1354, %v1326, %v971
      %v1360 = vsel %vm1354, %v1327, %v975
      %v1361 = vsel %vm1354, %v1328, %v979
      %v1362 = vsel %vm1354, %v1329, %v983
      %v1363 = vsel %vm1354, %v1330, %v987
      %v1364 = vsel %vm1354, %v1331, %v991
      %v1365 = vsel %vm1354, %v1332, %v995
      %v1366 = vsel %vm1354, %v1333, %v999
      %v1367 = vsel %vm1354, %v1334, %v1003
      %v1368 = vsel %vm1354, %v1335, %v1007
      %v1369 = vsel %vm1354, %v1336, %v1011
      %v1370 = vsel %vm1354, %v1337, %v1015
      %v1371 = vsel %vm1354, %v1338, %v1019
      %v1372 = vsel %vm1354, %v1339, %v1023
      %v1373 = vsel %vm1354, %v1340, %v1027
      %v1374 = vsel %vm1354, %v1341, %v1031
      %v1375 = vsel %vm1354, %v1342, %v1035
      %v1376 = vsel %vm1354, %v1343, %v1039
      %v1377 = vsel %vm1354, %v1344, %v1043
      %v1378 = vsel %vm1354, %v1345, %v1047
      %v1379 = vsel %vm1354, %v1346, %v1051
      %v1380 = vsel %vm1354, %v1347, %v1055
      %v1381 = vsel %vm1354, %v1348, %v1059
      %v1382 = vsel %vm1354, %v1349, %v1063
      %v1383 = vsel %vm1354, %v1350, %v1067
      %v1384 = vsel %vm1354, %v1351, %v1071
      %v1385 = vsel %vm1354, %v1352, %v1075
      %v1386 = vsel %vm1354, %v1353, %v1079
      %vm1387 = vcmask 1043456
      %v1388 = vsel %vm1387, %v1355, %v1131
      %v1389 = vsel %vm1387, %v1356, %v1135
      %v1390 = vsel %vm1387, %v1357, %v1139
      %v1391 = vsel %vm1387, %v1358, %v1143
      %v1392 = vsel %vm1387, %v1359, %v1147
      %v1393 = vsel %vm1387, %v1360, %v1151
      %v1394 = vsel %vm1387, %v1361, %v1155
      %v1395 = vsel %vm1387, %v1362, %v1159
      %v1396 = vsel %vm1387, %v1363, %v1163
      %v1397 = vsel %vm1387, %v1364, %v1167
      %v1398 = vsel %vm1387, %v1365, %v1171
      %v1399 = vsel %vm1387, %v1366, %v1175
      %v1400 = vsel %vm1387, %v1367, %v1179
      %v1401 = vsel %vm1387, %v1368, %v1183
      %v1402 = vsel %vm1387, %v1369, %v1187
      %v1403 = vsel %vm1387, %v1370, %v1191
      %v1404 = vsel %vm1387, %v1371, %v1195
      %v1405 = vsel %vm1387, %v1372, %v1199
      %v1406 = vsel %vm1387, %v1373, %v1203
      %v1407 = vsel %vm1387, %v1374, %v1207
      %v1408 = vsel %vm1387, %v1375, %v1211
      %v1409 = vsel %vm1387, %v1376, %v1215
      %v1410 = vsel %vm1387, %v1377, %v1219
      %v1411 = vsel %vm1387, %v1378, %v1223
      %v1412 = vsel %vm1387, %v1379, %v1227
      %v1413 = vsel %vm1387, %v1380, %v1231
      %v1414 = vsel %vm1387, %v1381, %v1235
      %v1415 = vsel %vm1387, %v1382, %v1239
      %v1416 = vsel %vm1387, %v1383, %v1243
      %v1417 = vsel %vm1387, %v1384, %v1247
      %v1418 = vsel %vm1387, %v1385, %v1251
      %v1419 = vsel %vm1387, %v1386, %v1255
      %1420 = vst [vmem:[%s118] sm:$0x1f] %v1388
      %1421 = vst [vmem:[%s118 + $0x8] sm:$0x1f] %v1389
      %1422 = vst [vmem:[%s118 + $0x10] sm:$0x1f] %v1390
      %1423 = vst [vmem:[%s118 + $0x18] sm:$0x1f] %v1391
      %1424 = vst [vmem:[%s118 + $0x20] sm:$0x1f] %v1392
      %1425 = vst [vmem:[%s118 + $0x28] sm:$0x1f] %v1393
      %1426 = vst [vmem:[%s118 + $0x30] sm:$0x1f] %v1394
      %1427 = vst [vmem:[%s118 + $0x38] sm:$0x1f] %v1395
      %1428 = vst [vmem:[%s118 + $0x40] sm:$0x1f] %v1396
      %1429 = vst [vmem:[%s118 + $0x48] sm:$0x1f] %v1397
      %1430 = vst [vmem:[%s118 + $0x50] sm:$0x1f] %v1398
      %1431 = vst [vmem:[%s118 + $0x58] sm:$0x1f] %v1399
      %1432 = vst [vmem:[%s118 + $0x60] sm:$0x1f] %v1400
      %1433 = vst [vmem:[%s118 + $0x68] sm:$0x1f] %v1401
      %1434 = vst [vmem:[%s118 + $0x70] sm:$0x1f] %v1402
      %1435 = vst [vmem:[%s118 + $0x78] sm:$0x1f] %v1403
      %1436 = vst [vmem:[%s118 + $0x80] sm:$0x1f] %v1404
      %1437 = vst [vmem:[%s118 + $0x88] sm:$0x1f] %v1405
      %1438 = vst [vmem:[%s118 + $0x90] sm:$0x1f] %v1406
      %1439 = vst [vmem:[%s118 + $0x98] sm:$0x1f] %v1407
      %1440 = vst [vmem:[%s118 + $0xa0] sm:$0x1f] %v1408
      %1441 = vst [vmem:[%s118 + $0xa8] sm:$0x1f] %v1409
      %1442 = vst [vmem:[%s118 + $0xb0] sm:$0x1f] %v1410
      %1443 = vst [vmem:[%s118 + $0xb8] sm:$0x1f] %v1411
      %1444 = vst [vmem:[%s118 + $0xc0] sm:$0x1f] %v1412
      %1445 = vst [vmem:[%s118 + $0xc8] sm:$0x1f] %v1413
      %1446 = vst [vmem:[%s118 + $0xd0] sm:$0x1f] %v1414
      %1447 = vst [vmem:[%s118 + $0xd8] sm:$0x1f] %v1415
      %1448 = vst [vmem:[%s118 + $0xe0] sm:$0x1f] %v1416
      %1449 = vst [vmem:[%s118 + $0xe8] sm:$0x1f] %v1417
      %1450 = vst [vmem:[%s118 + $0xf0] sm:$0x1f] %v1418
      %1451 = vst [vmem:[%s118 + $0xf8] sm:$0x1f] %v1419
      %s1452 = smul.u32 32, %s12
      %p1453 = scmp.lt.s32.totalorder %s1452, 63
      %s1454 = scalar_select %p1453, %s1452, 63
      %s1455 = smul.addr %s1454, 8
      %s1456 = scalar_lea.vmem %s1, %s1455
      // Predicated region
      $region25: #{voxel_center_sampler.3} parent=23 // pred_check
        %p1457 = pneg %p56
      $region26: #{voxel_center_sampler.3} parent=23 // pred_check_branch
        %1459 = sbr.rel (%p1457) target = $region28
      $region27: #{voxel_center_sampler.3} parent=23 // pred_region
        %s1460 = smul.u32 32, %s12
      $region28: #{voxel_center_sampler.3} parent=23 // pred_fallthru
        _
    $region24: #{voxel_center_sampler.3} parent=5 // pred_fallthru
      _
    %p1461 = scmp.le.s32.totalorder 2, %s7
    // Predicated region
    $region29: #{voxel_center_sampler.3} parent=5 // pred_check
      %p1462 = pneg %p1461
    $region30: #{voxel_center_sampler.3} parent=5 // pred_check_branch
      %1464 = sbr.rel (%p1462) target = $region32
    $region31: #{voxel_center_sampler.3} parent=5 // pred_region
      %s1465 = ssub.s32 %s7, 2
      // Predicated region
      $region33: #{voxel_center_sampler.3} parent=31 // pred_check
        %p1466 = pneg %p62
      $region34: #{voxel_center_sampler.3} parent=31 // pred_check_branch
        %1468 = sbr.rel (%p1466) target = $region36
      $region35: #{voxel_center_sampler.3} parent=31 // pred_region
        %s1469 = smul.u32 32, %s13
        %p1470 = scmp.lt.s32.totalorder %s1469, 63
        %s1471 = scalar_select %p1470, %s1469, 63
        %s1472 = smul.addr %s1471, 8
        %s1473 = scalar_lea.vmem %s1, %s1472
      $region36: #{voxel_center_sampler.3} parent=31 // pred_fallthru
        _
    $region32: #{voxel_center_sampler.3} parent=5 // pred_fallthru
      _
  $region6: #{voxel_center_sampler.3} parent=0 // loop_footer
    %s11 = sadd.s32 1, %s7
  $region7: #{voxel_center_sampler.3} parent=0 // loop_footer_branch
    %6 = sbr.rel target = $region3
  $region8: #{voxel_center_sampler.3} parent=0 // loop_exit
    _

</llo_original>
